<compile_context>
chip_gen: v6e
topology: v6e:2x2x1
jax: 0.10.0
libtpu: 0.0.40
codegen_flags: <defaults>
</compile_context>

<pallas_src>
import functools
from typing import NamedTuple

import jax
import jax.numpy as jnp
from jax.experimental import pallas as pl
from jax.experimental.pallas import tpu as pltpu


# ---------------------------------------------------------------------------
# In-kernel exact GELU (erf formulation, like torch F.gelu default).
# ---------------------------------------------------------------------------
_ERF_P = 0.3275911
_ERF_A = (0.254829592, -0.284496736, 1.421413741, -1.453152027, 1.061405429)


def _erf_approx(x):
    # Abramowitz & Stegun 7.1.26 rational approximation, |error| < 1.5e-7 in f32.
    a1, a2, a3, a4, a5 = _ERF_A
    ax = jnp.abs(x)
    t = 1.0 / (1.0 + _ERF_P * ax)
    poly = ((((a5 * t + a4) * t + a3) * t + a2) * t + a1) * t
    y = 1.0 - poly * jnp.exp(-ax * ax)
    return jnp.where(x >= 0.0, y, -y)


def _gelu_exact(x):
    # gelu(x) = 0.5 * x * (1 + erf(x / sqrt(2)))
    return 0.5 * x * (1.0 + _erf_approx(x * 0.7071067811865476))


# ---------------------------------------------------------------------------
# Kernels.  One grid step = (row-tile i [parallel], inner-tile k [arbitrary]).
# ---------------------------------------------------------------------------
def _ffn_geglu_kernel(x_ref, w1_ref, b1_ref, w2_ref, b2_ref, o_ref, acc_ref, *,
                      act_dtype):
    k = pl.program_id(1)

    @pl.when(k == 0)
    def _init():
        # b2 folded into the accumulator init (saves a finalize add/broadcast).
        acc_ref[...] = jnp.broadcast_to(b2_ref[...], acc_ref.shape)

    x = x_ref[...].astype(w1_ref.dtype)                 # in-kernel f32 -> bf16 cast
    # Fused first projection against the interleaved [W1_h_k | W1_g_k] block.
    p = jnp.dot(x, w1_ref[...], preferred_element_type=jnp.float32) + b1_ref[...]
    tn = p.shape[-1] // 2
    h = p[:, :tn].astype(act_dtype)                     # lane-tile-aligned slices
    g = p[:, tn:].astype(act_dtype)
    y = (h * _gelu_exact(g)).astype(w2_ref.dtype)       # bf16 act math on v6e/v7x

    # Second projection: accumulate the k-th inner slice on the MXU.
    acc_ref[...] += jnp.dot(y, w2_ref[...], preferred_element_type=jnp.float32)

    @pl.when(k == pl.num_programs(1) - 1)
    def _finalize():
        o_ref[...] = acc_ref[...].astype(o_ref.dtype)


def _ffn_gelu_kernel(x_ref, w1_ref, b1_ref, w2_ref, b2_ref, o_ref, acc_ref, *,
                     act_dtype):
    k = pl.program_id(1)

    @pl.when(k == 0)
    def _init():
        acc_ref[...] = jnp.broadcast_to(b2_ref[...], acc_ref.shape)

    x = x_ref[...].astype(w1_ref.dtype)
    g = jnp.dot(x, w1_ref[...], preferred_element_type=jnp.float32) + b1_ref[...]
    y = _gelu_exact(g.astype(act_dtype)).astype(w2_ref.dtype)
    acc_ref[...] += jnp.dot(y, w2_ref[...], preferred_element_type=jnp.float32)

    @pl.when(k == pl.num_programs(1) - 1)
    def _finalize():
        o_ref[...] = acc_ref[...].astype(o_ref.dtype)


# ---------------------------------------------------------------------------
# Helpers: padding, hardware config, tile sizing.
# ---------------------------------------------------------------------------
def _round_up(n, m):
    return ((n + m - 1) // m) * m


def _pad_axis(a, target, axis):
    pad = target - a.shape[axis]
    if pad == 0:
        return a
    widths = [(0, 0)] * a.ndim
    widths[axis] = (0, pad)
    return jnp.pad(a, widths)


def _tpu_generation():
    try:
        kind = jax.devices()[0].device_kind.lower()
    except Exception:
        return 0
    for g in (7, 6, 5, 4, 3, 2):
        if f"v{g}" in kind or f"tpu{g}" in kind:
            return g
    return 0


def _hw_config(gen):
    """(pallas VMEM budget bytes, row-tile cap, default inner tile) per chip gen."""
    if gen >= 7:
        return 48 << 20, 512, 256      # v7x: 64 MiB physical VMEM per TC
    if gen == 6:
        return 100 << 20, 1024, 512    # v6e: 128 MiB physical, default scoped 32 MiB
    if gen == 5:
        return 96 << 20, 256, 256      # v5e: MXU-bound already at TM=256
    return 32 << 20, 512, 256          # conservative default


def _pick_block_rows(M, dim, dim_out, tn, n_w1_cols, x_bytes, out_bytes,
                     vmem_budget, tm_cap):
    """Largest row tile whose (double-buffered) footprint fits the VMEM budget."""
    fixed = 2 * (dim * n_w1_cols * 2)        # w1 (bf16), double-buffered
    fixed += 2 * (n_w1_cols * 4)             # b1 (f32)
    fixed += 2 * (tn * dim_out * 2)          # w2 (bf16)
    fixed += 2 * (dim_out * 4)               # b2 (f32)
    per_row = 2 * dim * x_bytes + 2 * dim_out * out_bytes + dim_out * 4  # x, out, acc
    avail = vmem_budget - fixed - (4 << 20)  # headroom for compiler scratch
    tm_max = max(avail // per_row, 16) if avail > 0 else 16
    tm = 16
    for cand in (1024, 768, 512, 384, 256, 192, 128, 64, 32, 16):
        if cand <= min(tm_max, tm_cap):
            tm = cand
            break
    return min(tm, _round_up(max(M, 1), 16))


# ---------------------------------------------------------------------------
# One-time parameter preparation (hoisted out of the per-call path).
# ---------------------------------------------------------------------------
class FFNParams(NamedTuple):
    activation_fn: str
    dim: int
    inner: int
    dim_out: int
    tn: int
    n_pad: int
    w1: jax.Array   # (dim, 2*n_pad) interleaved bf16 for geglu; (dim, n_pad) for gelu
    b1: jax.Array   # (1, 2*n_pad) or (1, n_pad) f32
    w2: jax.Array   # (n_pad, dim_out) bf16
    b2: jax.Array   # (1, dim_out) f32


def prepare_feed_forward_params(w1, b1, w2, b2, *, activation_fn="geglu",
                                block_inner=None):
    """One-time weight prep: pad, bf16 cast, GEGLU per-k-tile weight interleave.

    w1 : (dim, 2*inner) for 'geglu', (dim, inner) for 'gelu'  (== torch proj.weight.T)
    b1 : (2*inner,) or (inner,)
    w2 : (inner, dim_out)                                     (== torch out.weight.T)
    b2 : (dim_out,)
    """
    assert activation_fn in ("geglu", "gelu")
    gen = _tpu_generation()
    if block_inner is None:
        block_inner = _hw_config(gen)[2]
    assert block_inner % 128 == 0

    dim = w1.shape[0]
    inner, dim_out = w2.shape
    tn = min(block_inner, _round_up(inner, 128))
    n_pad = _round_up(inner, tn)
    kt = n_pad // tn

    w2p = _pad_axis(jnp.asarray(w2), n_pad, 0).astype(jnp.bfloat16)
    b2p = jnp.asarray(b2).reshape(1, dim_out).astype(jnp.float32)

    if activation_fn == "geglu":
        assert w1.shape == (dim, 2 * inner) and b1.shape == (2 * inner,)
        w1h = _pad_axis(jnp.asarray(w1)[:, :inner], n_pad, 1)
        w1g = _pad_axis(jnp.asarray(w1)[:, inner:], n_pad, 1)
        # Interleave per k-tile so one (dim, 2*tn) block == [W1_h_k | W1_g_k].
        w1p = jnp.concatenate(
            [w1h.reshape(dim, kt, tn), w1g.reshape(dim, kt, tn)], axis=2
        ).reshape(dim, 2 * n_pad).astype(jnp.bfloat16)
        b1h = _pad_axis(jnp.asarray(b1)[:inner], n_pad, 0)
        b1g = _pad_axis(jnp.asarray(b1)[inner:], n_pad, 0)
        b1p = jnp.concatenate(
            [b1h.reshape(kt, tn), b1g.reshape(kt, tn)], axis=1
        ).reshape(1, 2 * n_pad).astype(jnp.float32)
    else:
        assert w1.shape == (dim, inner) and b1.shape == (inner,)
        w1p = _pad_axis(jnp.asarray(w1), n_pad, 1).astype(jnp.bfloat16)
        b1p = _pad_axis(jnp.asarray(b1), n_pad, 0).reshape(1, n_pad).astype(jnp.float32)

    w1p, b1p, w2p, b2p = jax.block_until_ready((w1p, b1p, w2p, b2p))
    return FFNParams(activation_fn, dim, inner, dim_out, tn, n_pad,
                     w1p, b1p, w2p, b2p)


# ---------------------------------------------------------------------------
# Forward pass.
# ---------------------------------------------------------------------------
def feed_forward(x, params: FFNParams, *, block_rows=None, act_dtype=None):
    """Pallas TPU implementation of FeedForward.forward.  x: (..., dim)."""
    gen = _tpu_generation()
    vmem_budget, tm_cap, _ = _hw_config(gen)
    if act_dtype is None:
        # bf16 VALU/EUP exists on v6e/v7x; keep f32 activation math on v5e & older.
        act_dtype = jnp.bfloat16 if gen >= 6 else jnp.float32

    *lead, dim = x.shape
    assert dim == params.dim
    dim_out, tn, n_pad = params.dim_out, params.tn, params.n_pad
    out_dtype = x.dtype

    M = 1
    for d in lead:
        M *= int(d)
    x2 = x.reshape(M, dim)

    x_bytes = jnp.dtype(x.dtype).itemsize
    out_bytes = jnp.dtype(out_dtype).itemsize
    n_w1_cols = 2 * tn if params.activation_fn == "geglu" else tn

    if block_rows is None:
        tm = _pick_block_rows(M, dim, dim_out, tn, n_w1_cols, x_bytes, out_bytes,
                              vmem_budget, tm_cap)
    else:
        assert block_rows % 16 == 0
        tm = min(block_rows, _round_up(max(M, 1), 16))
    m_pad = _round_up(M, tm)
    xp = _pad_axis(x2, m_pad, 0)        # original dtype; bf16 cast happens in-kernel

    grid = (m_pad // tm, n_pad // tn)

    x_spec = pl.BlockSpec((tm, dim), lambda i, k: (i, 0))
    w1_spec = pl.BlockSpec((dim, n_w1_cols), lambda i, k: (0, k))
    b1_spec = pl.BlockSpec((1, n_w1_cols), lambda i, k: (0, k))
    w2_spec = pl.BlockSpec((tn, dim_out), lambda i, k: (k, 0))
    b2_spec = pl.BlockSpec((1, dim_out), lambda i, k: (0, 0))
    out_spec = pl.BlockSpec((tm, dim_out), lambda i, k: (i, 0))

    kernel = _ffn_geglu_kernel if params.activation_fn == "geglu" else _ffn_gelu_kernel

    out_pad = pl.pallas_call(
        functools.partial(kernel, act_dtype=act_dtype),
        out_shape=jax.ShapeDtypeStruct((m_pad, dim_out), out_dtype),
        grid_spec=pltpu.PrefetchScalarGridSpec(
            num_scalar_prefetch=0,
            grid=grid,
            in_specs=[x_spec, w1_spec, b1_spec, w2_spec, b2_spec],
            out_specs=out_spec,
            scratch_shapes=[pltpu.VMEM((tm, dim_out), jnp.float32)],
        ),
        compiler_params=pltpu.CompilerParams(
            dimension_semantics=("parallel", "arbitrary"),
            vmem_limit_bytes=int(vmem_budget),
        ),
    )(xp, params.w1, params.b1, params.w2, params.b2)

    # TODO(synk): nn.Dropout(p) is the identity for p=0.0 (module default) and at
    # eval time; training-mode dropout with p>0 (RNG mask) is not implemented here.
    return out_pad[:M].reshape(*lead, dim_out)


# ---------------------------------------------------------------------------
# Pure-JAX reference mirroring the PyTorch forward exactly (f32, exact erf gelu).
# ---------------------------------------------------------------------------
def _reference(x, w1, b1, w2, b2, *, activation_fn="geglu"):
    proj = x @ w1 + b1
    if activation_fn == "geglu":
        h, g = jnp.split(proj, 2, axis=-1)
        y = h * jax.nn.gelu(g, approximate=False)
    else:
        y = jax.nn.gelu(proj, approximate=False)
    return y @ w2 + b2


if __name__ == "__main__":
    # FeedForward(dim=128, mult=4) on (B=2, S=256, 128): inner=512, dim_out=128.
    B, S, dim, mult = 2, 256, 128, 4
    inner = dim * mult
    dim_out = dim

    key = jax.random.PRNGKey(0)
    kx, k1, kb1, k2, kb2, k1g, kb1g = jax.random.split(key, 7)

    x = jax.random.normal(kx, (B, S, dim), dtype=jnp.float32)

    # GEGLU FeedForward parameters (already transposed: y = x @ W + b).
    w1 = 0.05 * jax.random.normal(k1, (dim, 2 * inner), dtype=jnp.float32)
    b1 = 0.05 * jax.random.normal(kb1, (2 * inner,), dtype=jnp.float32)
    w2 = 0.05 * jax.random.normal(k2, (inner, dim_out), dtype=jnp.float32)
    b2 = 0.05 * jax.random.normal(kb2, (dim_out,), dtype=jnp.float32)

    # One-time parameter prep (pad + bf16 cast + GEGLU interleave), then apply.
    geglu_params = prepare_feed_forward_params(w1, b1, w2, b2, activation_fn="geglu")
    out = feed_forward(x, geglu_params)
    out = jax.block_until_ready(out)
    ref = _reference(x, w1, b1, w2, b2, activation_fn="geglu")
    assert out.shape == (B, S, dim_out)
    # bf16 MXU operands (+ bf16 act math on v6e/v7x) -> loosened tolerance vs f32 ref.
    assert jnp.allclose(out, ref, atol=5e-2, rtol=5e-2), "geglu mismatch vs reference"

    # Also exercise the activation_fn='gelu' variant.
    w1s = 0.05 * jax.random.normal(k1g, (dim, inner), dtype=jnp.float32)
    b1s = 0.05 * jax.random.normal(kb1g, (inner,), dtype=jnp.float32)
    gelu_params = prepare_feed_forward_params(w1s, b1s, w2, b2, activation_fn="gelu")
    out_g = feed_forward(x, gelu_params)
    out_g = jax.block_until_ready(out_g)
    ref_g = _reference(x, w1s, b1s, w2, b2, activation_fn="gelu")
    assert jnp.allclose(out_g, ref_g, atol=5e-2, rtol=5e-2), "gelu mismatch vs reference"

    print("KERNEL_OK")
</pallas_src>

<mosaic_0001>
module attributes {stable_mosaic.version = 11 : i64} {
  func.func @_ffn_geglu_kernel(%arg0: i32, %arg1: i32, %arg2: memref<512x128xf32, #tpu.memory_space<vmem>>, %arg3: memref<128x512xbf16, #tpu.memory_space<vmem>>, %arg4: memref<1x512xf32, #tpu.memory_space<vmem>>, %arg5: memref<256x128xbf16, #tpu.memory_space<vmem>>, %arg6: memref<1x128xf32, #tpu.memory_space<vmem>>, %arg7: memref<512x128xf32, #tpu.memory_space<vmem>>, %arg8: memref<512x128xf32, #tpu.memory_space<vmem>>) attributes {dimension_semantics = [#tpu.dimension_semantics<parallel>, #tpu.dimension_semantics<arbitrary>], iteration_bounds = array<i64: 1, 2>, scalar_prefetch = 0 : i64, scratch_operands = 1 : i64, tpu.core_type = #tpu.core_type<tc>, window_params = [{transform_indices = @transform_0, window_bounds = array<i64: 512, 128>}, {transform_indices = @transform_1, window_bounds = array<i64: 128, 512>}, {transform_indices = @transform_2, window_bounds = array<i64: 1, 512>}, {transform_indices = @transform_3, window_bounds = array<i64: 256, 128>}, {pipeline_mode = #tpu.pipeline_mode<synchronous>, transform_indices = @transform_4, window_bounds = array<i64: 1, 128>}, {transform_indices = @transform_5, window_bounds = array<i64: 512, 128>}]} {
    %c0_i32 = arith.constant 0 : i32
    %0 = arith.cmpi eq, %arg1, %c0_i32 : i32
    %1 = arith.extui %0 : i1 to i32
    %c0_i32_0 = arith.constant 0 : i32
    %2 = arith.cmpi ne, %1, %c0_i32_0 : i32
    scf.if %2 {
      %c0_29 = arith.constant 0 : index
      %c0_30 = arith.constant 0 : index
      %62 = vector.load %arg6[%c0_29, %c0_30] : memref<1x128xf32, #tpu.memory_space<vmem>>, vector<1x128xf32>
      %63 = vector.shape_cast %62 : vector<1x128xf32> to vector<1x128xf32>
      %64 = vector.broadcast %63 : vector<1x128xf32> to vector<512x128xf32>
      %c0_31 = arith.constant 0 : index
      %c0_32 = arith.constant 0 : index
      %65 = vector.load %arg8[%c0_31, %c0_32] : memref<512x128xf32, #tpu.memory_space<vmem>>, vector<512x128xf32>
      tpu.vector_store %arg8[%c0_31, %c0_32], %64 {strides = array<i32>} : memref<512x128xf32, #tpu.memory_space<vmem>>, vector<512x128xf32>,
    } else {
    }
    %c0 = arith.constant 0 : index
    %c0_1 = arith.constant 0 : index
    %3 = vector.load %arg2[%c0, %c0_1] : memref<512x128xf32, #tpu.memory_space<vmem>>, vector<512x128xf32>
    %4 = arith.truncf %3 : vector<512x128xf32> to vector<512x128xbf16>
    %c0_2 = arith.constant 0 : index
    %c0_3 = arith.constant 0 : index
    %5 = vector.load %arg3[%c0_2, %c0_3] : memref<128x512xbf16, #tpu.memory_space<vmem>>, vector<128x512xbf16>
    %cst = arith.constant dense<0.000000e+00> : vector<512x512xf32>
    %6 = tpu.matmul %4, %5, %cst {dimension_numbers = #tpu.dot_dimension_numbers<[1], [0], [0], [1], [0, 0, 1, 1], [], []>} : vector<512x128xbf16>, vector<128x512xbf16>, vector<512x512xf32> -> vector<512x512xf32>
    %c0_4 = arith.constant 0 : index
    %c0_5 = arith.constant 0 : index
    %7 = vector.load %arg4[%c0_4, %c0_5] : memref<1x512xf32, #tpu.memory_space<vmem>>, vector<1x512xf32>
    %8 = vector.broadcast %7 : vector<1x512xf32> to vector<512x512xf32>
    %9 = arith.addf %6, %8 : vector<512x512xf32>
    %10 = vector.extract_strided_slice %9 {offsets = [0, 0], sizes = [512, 256], strides = [1, 1]} : vector<512x512xf32> to vector<512x256xf32>
    %11 = vector.extract_strided_slice %9 {offsets = [0, 256], sizes = [512, 256], strides = [1, 1]} : vector<512x512xf32> to vector<512x256xf32>
    %cst_6 = arith.constant 5.000000e-01 : f32
    %12 = vector.broadcast %cst_6 : f32 to vector<512x256xf32>
    %13 = arith.mulf %12, %11 : vector<512x256xf32>
    %cst_7 = arith.constant 0.707106769 : f32
    %14 = vector.broadcast %cst_7 : f32 to vector<512x256xf32>
    %15 = arith.mulf %11, %14 : vector<512x256xf32>
    %16 = math.absf %15 : vector<512x256xf32>
    %cst_8 = arith.constant 0.327591091 : f32
    %17 = vector.broadcast %cst_8 : f32 to vector<512x256xf32>
    %18 = arith.mulf %17, %16 : vector<512x256xf32>
    %cst_9 = arith.constant 1.000000e+00 : f32
    %19 = vector.broadcast %cst_9 : f32 to vector<512x256xf32>
    %20 = arith.addf %19, %18 : vector<512x256xf32>
    %cst_10 = arith.constant 1.000000e+00 : f32
    %21 = vector.broadcast %cst_10 : f32 to vector<512x256xf32>
    %22 = arith.divf %21, %20 : vector<512x256xf32>
    %cst_11 = arith.constant 1.06140542 : f32
    %23 = vector.broadcast %cst_11 : f32 to vector<512x256xf32>
    %24 = arith.mulf %23, %22 : vector<512x256xf32>
    %cst_12 = arith.constant -1.45315206 : f32
    %25 = vector.broadcast %cst_12 : f32 to vector<512x256xf32>
    %26 = arith.addf %24, %25 : vector<512x256xf32>
    %27 = arith.mulf %26, %22 : vector<512x256xf32>
    %cst_13 = arith.constant 1.42141378 : f32
    %28 = vector.broadcast %cst_13 : f32 to vector<512x256xf32>
    %29 = arith.addf %27, %28 : vector<512x256xf32>
    %30 = arith.mulf %29, %22 : vector<512x256xf32>
    %cst_14 = arith.constant -0.284496725 : f32
    %31 = vector.broadcast %cst_14 : f32 to vector<512x256xf32>
    %32 = arith.addf %30, %31 : vector<512x256xf32>
    %33 = arith.mulf %32, %22 : vector<512x256xf32>
    %cst_15 = arith.constant 0.254829586 : f32
    %34 = vector.broadcast %cst_15 : f32 to vector<512x256xf32>
    %35 = arith.addf %33, %34 : vector<512x256xf32>
    %36 = arith.mulf %35, %22 : vector<512x256xf32>
    %cst_16 = arith.constant 0.000000e+00 : f32
    %37 = vector.broadcast %cst_16 : f32 to vector<512x256xf32>
    %38 = arith.subf %37, %16 : vector<512x256xf32>
    %39 = arith.mulf %38, %16 : vector<512x256xf32>
    %40 = math.exp %39 : vector<512x256xf32>
    %41 = arith.mulf %36, %40 : vector<512x256xf32>
    %cst_17 = arith.constant 1.000000e+00 : f32
    %42 = vector.broadcast %cst_17 : f32 to vector<512x256xf32>
    %43 = arith.subf %42, %41 : vector<512x256xf32>
    %cst_18 = arith.constant 0.000000e+00 : f32
    %44 = vector.broadcast %cst_18 : f32 to vector<512x256xf32>
    %45 = arith.cmpf oge, %15, %44 : vector<512x256xf32>
    %cst_19 = arith.constant 0.000000e+00 : f32
    %46 = vector.broadcast %cst_19 : f32 to vector<512x256xf32>
    %47 = arith.subf %46, %43 : vector<512x256xf32>
    %48 = arith.select %45, %43, %47 : vector<512x256xi1>, vector<512x256xf32>
    %cst_20 = arith.constant 1.000000e+00 : f32
    %49 = vector.broadcast %cst_20 : f32 to vector<512x256xf32>
    %50 = arith.addf %49, %48 : vector<512x256xf32>
    %51 = arith.mulf %13, %50 : vector<512x256xf32>
    %52 = arith.mulf %10, %51 : vector<512x256xf32>
    %53 = arith.truncf %52 : vector<512x256xf32> to vector<512x256xbf16>
    %c0_21 = arith.constant 0 : index
    %c0_22 = arith.constant 0 : index
    %54 = vector.load %arg8[%c0_21, %c0_22] : memref<512x128xf32, #tpu.memory_space<vmem>>, vector<512x128xf32>
    %c0_23 = arith.constant 0 : index
    %c0_24 = arith.constant 0 : index
    %55 = vector.load %arg5[%c0_23, %c0_24] : memref<256x128xbf16, #tpu.memory_space<vmem>>, vector<256x128xbf16>
    %cst_25 = arith.constant dense<0.000000e+00> : vector<512x128xf32>
    %56 = tpu.matmul %53, %55, %cst_25 {dimension_numbers = #tpu.dot_dimension_numbers<[1], [0], [0], [1], [0, 0, 1, 1], [], []>} : vector<512x256xbf16>, vector<256x128xbf16>, vector<512x128xf32> -> vector<512x128xf32>
    %57 = arith.addf %54, %56 : vector<512x128xf32>
    %c0_26 = arith.constant 0 : index
    %c0_27 = arith.constant 0 : index
    %58 = vector.load %arg8[%c0_26, %c0_27] : memref<512x128xf32, #tpu.memory_space<vmem>>, vector<512x128xf32>
    tpu.vector_store %arg8[%c0_26, %c0_27], %57 {strides = array<i32>} : memref<512x128xf32, #tpu.memory_space<vmem>>, vector<512x128xf32>,
    %c1_i32 = arith.constant 1 : i32
    %59 = arith.cmpi eq, %arg1, %c1_i32 : i32
    %60 = arith.extui %59 : i1 to i32
    %c0_i32_28 = arith.constant 0 : i32
    %61 = arith.cmpi ne, %60, %c0_i32_28 : i32
    scf.if %61 {
      %c0_29 = arith.constant 0 : index
      %c0_30 = arith.constant 0 : index
      %62 = vector.load %arg8[%c0_29, %c0_30] : memref<512x128xf32, #tpu.memory_space<vmem>>, vector<512x128xf32>
      %c0_31 = arith.constant 0 : index
      %c0_32 = arith.constant 0 : index
      %63 = vector.load %arg7[%c0_31, %c0_32] : memref<512x128xf32, #tpu.memory_space<vmem>>, vector<512x128xf32>
      tpu.vector_store %arg7[%c0_31, %c0_32], %62 {strides = array<i32>} : memref<512x128xf32, #tpu.memory_space<vmem>>, vector<512x128xf32>,
    } else {
    }
    return
  }
  func.func @transform_0(%arg0: i32, %arg1: i32) -> (i32, i32) {
    %c0_i32 = arith.constant 0 : i32
    %c0_i32_0 = arith.constant 0 : i32
    return %arg0, %c0_i32 : i32, i32
  }
  func.func @transform_1(%arg0: i32, %arg1: i32) -> (i32, i32) {
    %c0_i32 = arith.constant 0 : i32
    %c0_i32_0 = arith.constant 0 : i32
    return %c0_i32, %arg1 : i32, i32
  }
  func.func @transform_2(%arg0: i32, %arg1: i32) -> (i32, i32) {
    %c0_i32 = arith.constant 0 : i32
    %c0_i32_0 = arith.constant 0 : i32
    return %c0_i32, %arg1 : i32, i32
  }
  func.func @transform_3(%arg0: i32, %arg1: i32) -> (i32, i32) {
    %c0_i32 = arith.constant 0 : i32
    %c0_i32_0 = arith.constant 0 : i32
    return %arg1, %c0_i32 : i32, i32
  }
  func.func @transform_4(%arg0: i32, %arg1: i32) -> (i32, i32) {
    %c0_i32 = arith.constant 0 : i32
    %c0_i32_0 = arith.constant 0 : i32
    %c0_i32_1 = arith.constant 0 : i32
    return %c0_i32, %c0_i32_0 : i32, i32
  }
  func.func @transform_5(%arg0: i32, %arg1: i32) -> (i32, i32) {
    %c0_i32 = arith.constant 0 : i32
    %c0_i32_0 = arith.constant 0 : i32
    return %arg0, %c0_i32 : i32, i32
  }
}

</mosaic_0001>

<llo_original>
// kernel: tpu_custom_call.1
$region0: #{tpu_custom_call.1}
  #allocation0 [shape = 'u32[]', space=smem, size = 0x4, offset = 0x4, fixed_abs, tag = 'smem constant byte address 0x4 - core index']
  #allocation1 [shape = 'u32[144,128]{1,0:T(1,128)}', space=vmem, size = 0x12000, scoped, tag = 'internal scratch']
  #allocation2 [shape = 'f32[512,128]{1,0:T(8,128)}', space=vmem, size = 0x40000, scoped, tag = 'scratch operand']
  %s0 = inlined_call_operand.hbm [shape: f32[512,128], index: 0, kind: input, shape index: {}]
  %s1 = inlined_call_operand.hbm [shape: bf16[128,1024], index: 1, kind: input, shape index: {}]
  %s2 = inlined_call_operand.hbm [shape: f32[1,1024], index: 2, kind: input, shape index: {}]
  %s3 = inlined_call_operand.hbm [shape: bf16[512,128], index: 3, kind: input, shape index: {}]
  %s4 = inlined_call_operand.vmem [shape: f32[1,128], index: 4, kind: input, shape index: {}]
  %s5 = inlined_call_operand.hbm [shape: f32[512,128], index: 5, kind: output, shape index: {}]
  %s6 = sld [smem:[#allocation0]]
  $region77: #{tpu_custom_call.1} parent=0
    _
  %s8 = ssub.s32 1, %s6
  %s9 = scalar_select 0, %s8, %s6
  $region1: #{tpu_custom_call.1} parent=0
    #allocation3 [shape = 'u8[262144]{0}', space=vmem, size = 0x40000, scoped, tag = 'input window, operand 0, single buffered']
    #allocation4 [shape = 's32[2]{0}', space=sflag, size = 0x8, scoped, tag = 'scoped memory for tpu_custom_call.1']
    #allocation5 [shape = 's32[2]{0}', space=sflag, size = 0x8, scoped, tag = 'scoped memory for tpu_custom_call.1']
    #allocation6 [shape = 'u8[262144]{0}', space=vmem, size = 0x40000, scoped, tag = 'input window, operand 1']
    #allocation7 [shape = 's32[2]{0}', space=sflag, size = 0x8, scoped, tag = 'scoped memory for tpu_custom_call.1']
    #allocation8 [shape = 'u8[4096]{0}', space=vmem, size = 0x1000, scoped, tag = 'input window, operand 2']
    #allocation9 [shape = 'u8[131072]{0}', space=vmem, size = 0x20000, scoped, tag = 'input window, operand 3']
    #allocation10 [shape = 's32[2]{0}', space=sflag, size = 0x8, scoped, tag = 'scoped memory for tpu_custom_call.1']
    #allocation11 [shape = 'u8[262144]{0}', space=vmem, size = 0x40000, scoped, tag = 'output window, operand 0, single buffered']
    %10 = vsyncpa [#allocation4], 0
    %11 = vsyncpa [#allocation7], 0
    %s12 = scalar_lea.sflag [#allocation7], 1
    %13 = vsyncpa %s12, 0
    %14 = vsyncpa [#allocation10], 0
    %s15 = scalar_lea.sflag [#allocation10], 1
    %16 = vsyncpa %s15, 0
    %17 = vsyncpa [#allocation5], 0
    loop: start=0, step=1, limit=4
    $region2: #{tpu_custom_call.1} parent=1 // loop_pre_header
      _
    $region3: #{tpu_custom_call.1} parent=1 // loop_header
      %s19 = sphi 0, %s23
      %p20 = scmp.ge.s32.totalorder %s19, 4
      %s26 = sphi 0, %s38
      %s27 = sphi 0, %s34
      %s28 = sphi 0, %s26
      %s29 = sphi 0, %s27
      %s30 = sphi 0, %s28
      %s31 = sphi 0, %s29
      %s41 = sphi 0, %s43
      %s44 = sphi 0, %s41
      %s45 = sphi 0, %s44
      %s61 = sphi 0, %s45
      %s67 = sphi 0, %s69
      %s70 = sphi 0, %s67
      %s71 = sphi 0, %s70
      %s87 = sphi 0, %s71
      %s93 = sphi 0, %s95
      %s96 = sphi 0, %s93
      %s97 = sphi 0, %s96
      %s113 = sphi 0, %s97
      %s119 = sphi 0, %s121
      %s122 = sphi 0, %s119
      %s123 = sphi 0, %s122
      %s139 = sphi 0, %s123
      %s143 = sphi 0, %s143
      %s145 = sphi 0, %s143
      %s146 = sphi 0, %s145
      %s160 = sphi 0, %s146
      %s166 = sphi 0, %s168
      %s169 = sphi 0, %s166
      %s170 = sphi 0, %s169
      %s186 = sphi 0, %s170
    $region4: #{tpu_custom_call.1} parent=1 // loop_header_branch
      %22 = sbr.rel (%p20) target = $region8
    $region5: #{tpu_custom_call.1} parent=1 // loop_body
      %s24 = ssub.s32 %s19, 1
      %s25 = ssub.s32 %s19, 2
      %s32 = sadd.s32 1, %s27
      %p33 = scmp.ge.s32.totalorder %s32, 2
      %s34 = scalar_select %p33, 0, %s32
      %s35 = sadd.s32 1, %s26
      %s36 = scalar_select %p33, %s35, %s26
      %p37 = scmp.ge.s32.totalorder %s36, 1
      %s38 = scalar_select %p37, 0, %s36
      %s39 = ssub.s32 %s26, %s38
      %p40 = scmp.eq.s32.totalorder %s39, 0
      %s42 = sadd.s32 %s41, 1
      %s43 = scalar_select %p40, %s41, %s42
      %p46 = pneg %p40
      %p47 = scmp.eq.s32.totalorder %s19, 1
      %p48 = por %p46, %p47
      %p49 = scmp.ne.s32.totalorder %s41, %s44
      %p50 = scmp.eq.s32.totalorder %s19, 0
      %p51 = por %p49, %p50
      %p52 = scmp.ne.s32.totalorder %s41, %s44
      %p53 = scmp.eq.s32.totalorder %s24, 1
      %p54 = por %p52, %p53
      %p55 = scmp.ne.s32.totalorder %s44, %s45
      %p56 = scmp.eq.s32.totalorder %s24, 0
      %p57 = por %p55, %p56
      %p58 = scmp.ne.s32.totalorder %s44, %s45
      %p59 = scmp.eq.s32.totalorder %s25, 1
      %p60 = por %p58, %p59
      %p62 = scmp.ne.s32.totalorder %s45, %s61
      %p63 = scmp.eq.s32.totalorder %s25, 0
      %p64 = por %p62, %p63
      %s65 = ssub.s32 %s27, %s34
      %p66 = scmp.eq.s32.totalorder %s65, 0
      %s68 = sadd.s32 %s67, 1
      %s69 = scalar_select %p66, %s67, %s68
      %p72 = pneg %p66
      %p73 = scmp.eq.s32.totalorder %s19, 1
      %p74 = por %p72, %p73
      %p75 = scmp.ne.s32.totalorder %s67, %s70
      %p76 = scmp.eq.s32.totalorder %s19, 0
      %p77 = por %p75, %p76
      %p78 = scmp.ne.s32.totalorder %s67, %s70
      %p79 = scmp.eq.s32.totalorder %s24, 1
      %p80 = por %p78, %p79
      %p81 = scmp.ne.s32.totalorder %s70, %s71
      %p82 = scmp.eq.s32.totalorder %s24, 0
      %p83 = por %p81, %p82
      %p84 = scmp.ne.s32.totalorder %s70, %s71
      %p85 = scmp.eq.s32.totalorder %s25, 1
      %p86 = por %p84, %p85
      %p88 = scmp.ne.s32.totalorder %s71, %s87
      %p89 = scmp.eq.s32.totalorder %s25, 0
      %p90 = por %p88, %p89
      %s91 = ssub.s32 %s27, %s34
      %p92 = scmp.eq.s32.totalorder %s91, 0
      %s94 = sadd.s32 %s93, 1
      %s95 = scalar_select %p92, %s93, %s94
      %p98 = pneg %p92
      %p99 = scmp.eq.s32.totalorder %s19, 1
      %p100 = por %p98, %p99
      %p101 = scmp.ne.s32.totalorder %s93, %s96
      %p102 = scmp.eq.s32.totalorder %s19, 0
      %p103 = por %p101, %p102
      %p104 = scmp.ne.s32.totalorder %s93, %s96
      %p105 = scmp.eq.s32.totalorder %s24, 1
      %p106 = por %p104, %p105
      %p107 = scmp.ne.s32.totalorder %s96, %s97
      %p108 = scmp.eq.s32.totalorder %s24, 0
      %p109 = por %p107, %p108
      %p110 = scmp.ne.s32.totalorder %s96, %s97
      %p111 = scmp.eq.s32.totalorder %s25, 1
      %p112 = por %p110, %p111
      %p114 = scmp.ne.s32.totalorder %s97, %s113
      %p115 = scmp.eq.s32.totalorder %s25, 0
      %p116 = por %p114, %p115
      %s117 = ssub.s32 %s27, %s34
      %p118 = scmp.eq.s32.totalorder %s117, 0
      %s120 = sadd.s32 %s119, 1
      %s121 = scalar_select %p118, %s119, %s120
      %p124 = pneg %p118
      %p125 = scmp.eq.s32.totalorder %s19, 1
      %p126 = por %p124, %p125
      %p127 = scmp.ne.s32.totalorder %s119, %s122
      %p128 = scmp.eq.s32.totalorder %s19, 0
      %p129 = por %p127, %p128
      %p130 = scmp.ne.s32.totalorder %s119, %s122
      %p131 = scmp.eq.s32.totalorder %s24, 1
      %p132 = por %p130, %p131
      %p133 = scmp.ne.s32.totalorder %s122, %s123
      %p134 = scmp.eq.s32.totalorder %s24, 0
      %p135 = por %p133, %p134
      %p136 = scmp.ne.s32.totalorder %s122, %s123
      %p137 = scmp.eq.s32.totalorder %s25, 1
      %p138 = por %p136, %p137
      %p140 = scmp.ne.s32.totalorder %s123, %s139
      %p141 = scmp.eq.s32.totalorder %s25, 0
      %p142 = por %p140, %p141
      %s144 = sadd.s32 %s143, 1
      %p147 = scmp.eq.s32.totalorder %s19, 1
      %p148 = scmp.ne.s32.totalorder %s143, %s145
      %p149 = scmp.eq.s32.totalorder %s19, 0
      %p150 = por %p148, %p149
      %p151 = scmp.ne.s32.totalorder %s143, %s145
      %p152 = scmp.eq.s32.totalorder %s24, 1
      %p153 = por %p151, %p152
      %p154 = scmp.ne.s32.totalorder %s145, %s146
      %p155 = scmp.eq.s32.totalorder %s24, 0
      %p156 = por %p154, %p155
      %p157 = scmp.ne.s32.totalorder %s145, %s146
      %p158 = scmp.eq.s32.totalorder %s25, 1
      %p159 = por %p157, %p158
      %p161 = scmp.ne.s32.totalorder %s146, %s160
      %p162 = scmp.eq.s32.totalorder %s25, 0
      %p163 = por %p161, %p162
      %s164 = ssub.s32 %s26, %s38
      %p165 = scmp.eq.s32.totalorder %s164, 0
      %s167 = sadd.s32 %s166, 1
      %s168 = scalar_select %p165, %s166, %s167
      %p171 = pneg %p165
      %p172 = scmp.eq.s32.totalorder %s19, 1
      %p173 = por %p171, %p172
      %p174 = scmp.ne.s32.totalorder %s166, %s169
      %p175 = scmp.eq.s32.totalorder %s19, 0
      %p176 = por %p174, %p175
      %p177 = scmp.ne.s32.totalorder %s166, %s169
      %p178 = scmp.eq.s32.totalorder %s24, 1
      %p179 = por %p177, %p178
      %p180 = scmp.ne.s32.totalorder %s169, %s170
      %p181 = scmp.eq.s32.totalorder %s24, 0
      %p182 = por %p180, %p181
      %p183 = scmp.ne.s32.totalorder %s169, %s170
      %p184 = scmp.eq.s32.totalorder %s25, 1
      %p185 = por %p183, %p184
      %p187 = scmp.ne.s32.totalorder %s170, %s186
      %p188 = scmp.eq.s32.totalorder %s25, 0
      %p189 = por %p187, %p188
      %p190 = scmp.le.s32.totalorder 1, %s19
      %p191 = scmp.lt.s32.totalorder %s19, 3
      %p192 = pnand %p190, %p191
      %p193 = pneg %p192
      // Predicated region
      $region9: #{tpu_custom_call.1} parent=5 // pred_check
        _
      $region10: #{tpu_custom_call.1} parent=5 // pred_check_branch
        %195 = sbr.rel (%p192) target = $region12
      $region11: #{tpu_custom_call.1} parent=5 // pred_region
        %s196 = ssub.s32 %s19, 1
        // Predicated region
        $region13: #{tpu_custom_call.1} parent=11 // pred_check
          %p197 = pneg %p57
        $region14: #{tpu_custom_call.1} parent=11 // pred_check_branch
          %199 = sbr.rel (%p197) target = $region16
        $region15: #{tpu_custom_call.1} parent=11 // pred_region
          %s200 = smul.u32 64, %s28
          %s202 = ssub.s32 8192, 8192
          %203 = vsyncadd [#allocation4], %s202
          %s204 = smul.addr %s200, 128
          %s205 = scalar_lea.hbm %s0, %s204
          %s206 = sshll.u32 [#allocation3], 4
          %s207 = int_to_ptr.vmem [resolvable:$true] %s206
          %212 = dma.hbm_to_vmem [thread:$0]  %s205, 8192, %s207, [#allocation4], 128, 128, 8
        $region16: #{tpu_custom_call.1} parent=11 // pred_fallthru
          _
        // Predicated region
        $region17: #{tpu_custom_call.1} parent=11 // pred_check
          %p213 = pneg %p156
        $region18: #{tpu_custom_call.1} parent=11 // pred_check_branch
          %215 = sbr.rel (%p213) target = $region20
        $region19: #{tpu_custom_call.1} parent=11 // pred_region
          _
        $region20: #{tpu_custom_call.1} parent=11 // pred_fallthru
          _
      $region12: #{tpu_custom_call.1} parent=5 // pred_fallthru
        _
      %p216 = scmp.lt.s32.totalorder %s19, 2
      // Predicated region
      $region21: #{tpu_custom_call.1} parent=5 // pred_check
        %p217 = pneg %p216
      $region22: #{tpu_custom_call.1} parent=5 // pred_check_branch
        %219 = sbr.rel (%p217) target = $region24
      $region23: #{tpu_custom_call.1} parent=5 // pred_region
        // Predicated region
        $region25: #{tpu_custom_call.1} parent=23 // pred_check
          %p220 = pneg %p77
        $region26: #{tpu_custom_call.1} parent=23 // pred_check_branch
          %222 = sbr.rel (%p220) target = $region28
        $region27: #{tpu_custom_call.1} parent=23 // pred_region
          %s223 = sand.u32 %s19, 1
          %s224 = scalar_lea.sflag [#allocation7], %s223
          %s225 = sand.u32 %s67, 1
          %s226 = smul.addr %s225, 256
          %s227 = scalar_lea.vmem [#allocation6], %s226
          %s228 = smul.u32 4, %s27
          %s230 = ssub.s32 4096, 4096
          %231 = vsyncadd %s224, %s230
          %s232 = smul.addr %s228, 64
          %s233 = scalar_lea.hbm %s1, %s232
          %s234 = sshll.u32 %s227, 4
          %s235 = int_to_ptr.vmem [resolvable:$true] %s234
          %240 = dma.hbm_to_vmem [thread:$0]  %s233, 4096, %s235, %s224, 512, 256, 16
        $region28: #{tpu_custom_call.1} parent=23 // pred_fallthru
          _
        // Predicated region
        $region29: #{tpu_custom_call.1} parent=23 // pred_check
          %p241 = pneg %p103
        $region30: #{tpu_custom_call.1} parent=23 // pred_check_branch
          %243 = sbr.rel (%p241) target = $region32
        $region31: #{tpu_custom_call.1} parent=23 // pred_region
          %s244 = sand.u32 %s19, 1
          %s245 = scalar_lea.sflag [#allocation7], %s244
          %s246 = sand.u32 %s93, 1
          %s247 = smul.addr %s246, 4
          %s248 = scalar_lea.vmem [#allocation8], %s247
          %s249 = smul.u32 4, %s27
          %s251 = ssub.s32 64, 64
          %252 = vsyncadd %s245, %s251
          %s253 = smul.addr %s249, 16
          %s254 = scalar_lea.hbm %s2, %s253
          %s256 = sshll.u32 %s248, 4
          %s257 = int_to_ptr.vmem [resolvable:$true] %s256
          %259 = dma.hbm_to_vmem [thread:$0]  %s254, 64, %s257, %s245
        $region32: #{tpu_custom_call.1} parent=23 // pred_fallthru
          _
        // Predicated region
        $region33: #{tpu_custom_call.1} parent=23 // pred_check
          %p260 = pneg %p129
        $region34: #{tpu_custom_call.1} parent=23 // pred_check_branch
          %262 = sbr.rel (%p260) target = $region36
        $region35: #{tpu_custom_call.1} parent=23 // pred_region
          %s263 = sand.u32 %s119, 1
          %s264 = scalar_lea.sflag [#allocation10], %s263
          %s265 = sand.u32 %s119, 1
          %s266 = smul.addr %s265, 128
          %s267 = scalar_lea.vmem [#allocation9], %s266
          %s268 = smul.u32 32, %s27
          %s270 = ssub.s32 2048, 2048
          %271 = vsyncadd %s264, %s270
          %s272 = smul.addr %s268, 64
          %s273 = scalar_lea.hbm %s3, %s272
          %s274 = sshll.u32 %s267, 4
          %s275 = int_to_ptr.vmem [resolvable:$true] %s274
          %280 = dma.hbm_to_vmem [thread:$0]  %s273, 2048, %s275, %s264, 64, 64, 4
        $region36: #{tpu_custom_call.1} parent=23 // pred_fallthru
          _
      $region24: #{tpu_custom_call.1} parent=5 // pred_fallthru
        _
      %p281 = scmp.le.s32.totalorder 1, %s19
      %p282 = scmp.lt.s32.totalorder %s19, 3
      %p283 = pnand %p281, %p282
      %p284 = pneg %p283
      // Predicated region
      $region37: #{tpu_custom_call.1} parent=5 // pred_check
        _
      $region38: #{tpu_custom_call.1} parent=5 // pred_check_branch
        %286 = sbr.rel (%p283) target = $region40
      $region39: #{tpu_custom_call.1} parent=5 // pred_region
        %s287 = ssub.s32 %s19, 1
        // Predicated region
        $region41: #{tpu_custom_call.1} parent=39 // pred_check
          %p288 = pneg %p57
        $region42: #{tpu_custom_call.1} parent=39 // pred_check_branch
          %290 = sbr.rel (%p288) target = $region44
        $region43: #{tpu_custom_call.1} parent=39 // pred_region
          %291 = dma.done [#allocation4], 8192
        $region44: #{tpu_custom_call.1} parent=39 // pred_fallthru
          _
        %s292 = sand.u32 %s24, 1
        %s293 = scalar_lea.sflag [#allocation7], %s292
        %s294 = sand.u32 %s70, 1
        %s295 = smul.addr %s294, 256
        %s296 = scalar_lea.vmem [#allocation6], %s295
        // Predicated region
        $region45: #{tpu_custom_call.1} parent=39 // pred_check
          %p297 = pneg %p83
        $region46: #{tpu_custom_call.1} parent=39 // pred_check_branch
          %299 = sbr.rel (%p297) target = $region48
        $region47: #{tpu_custom_call.1} parent=39 // pred_region
          %300 = dma.done %s293, 4096
        $region48: #{tpu_custom_call.1} parent=39 // pred_fallthru
          _
        %s301 = sand.u32 %s24, 1
        %s302 = scalar_lea.sflag [#allocation7], %s301
        %s303 = sand.u32 %s96, 1
        %s304 = smul.addr %s303, 4
        %s305 = scalar_lea.vmem [#allocation8], %s304
        // Predicated region
        $region49: #{tpu_custom_call.1} parent=39 // pred_check
          %p306 = pneg %p109
        $region50: #{tpu_custom_call.1} parent=39 // pred_check_branch
          %308 = sbr.rel (%p306) target = $region52
        $region51: #{tpu_custom_call.1} parent=39 // pred_region
          %309 = dma.done %s302, 64
        $region52: #{tpu_custom_call.1} parent=39 // pred_fallthru
          _
        %s310 = sand.u32 %s122, 1
        %s311 = scalar_lea.sflag [#allocation10], %s310
        %s312 = sand.u32 %s122, 1
        %s313 = smul.addr %s312, 128
        %s314 = scalar_lea.vmem [#allocation9], %s313
        // Predicated region
        $region53: #{tpu_custom_call.1} parent=39 // pred_check
          %p315 = pneg %p135
        $region54: #{tpu_custom_call.1} parent=39 // pred_check_branch
          %317 = sbr.rel (%p315) target = $region56
        $region55: #{tpu_custom_call.1} parent=39 // pred_region
          %318 = dma.done %s311, 2048
        $region56: #{tpu_custom_call.1} parent=39 // pred_fallthru
          _
        %p319 = pneg %p57
        %p320 = pneg %p54
        %s321 = sand.u32 %s24, 1
        %s322 = scalar_lea.sflag [#allocation7], %s321
        %s323 = sand.u32 %s70, 1
        %s324 = smul.addr %s323, 256
        %s325 = scalar_lea.vmem [#allocation6], %s324
        %p326 = pneg %p83
        %p327 = pneg %p80
        %s328 = sand.u32 %s24, 1
        %s329 = scalar_lea.sflag [#allocation7], %s328
        %s330 = sand.u32 %s96, 1
        %s331 = smul.addr %s330, 4
        %s332 = scalar_lea.vmem [#allocation8], %s331
        %p333 = pneg %p109
        %p334 = pneg %p106
        %s335 = sand.u32 %s122, 1
        %s336 = scalar_lea.sflag [#allocation10], %s335
        %s337 = sand.u32 %s122, 1
        %s338 = smul.addr %s337, 128
        %s339 = scalar_lea.vmem [#allocation9], %s338
        %p340 = pneg %p135
        %p341 = pneg %p132
        %p342 = pneg %p156
        %p343 = pneg %p153
        %p344 = pneg %p182
        %p345 = pneg %p179
        %s346 = smul.u32 64, %s28
        %s347 = smul.u32 4, %s29
        %s348 = smul.u32 4, %s29
        %s349 = smul.u32 32, %s29
        %s350 = smul.u32 64, %s28
        %p352 = scmp.eq.s32.totalorder %s29, 0
        // Predicated region
        $region57: #{tpu_custom_call.1} parent=39 // pred_check
          %p353 = pneg %p352
        $region58: #{tpu_custom_call.1} parent=39 // pred_check_branch
          %355 = sbr.rel (%p353) target = $region60
        $region59: #{tpu_custom_call.1} parent=39 // pred_region
          %v356 = vld [vmem:[%s4] sm:$0x1]
          %v358 = vlaneseq
          %v359 = vshrl.u32 %v358, 7
          %v360 = vsub.s32 0, %v359
          %v361 = vrot.slane %v356, %v360
          %363 = vst [vmem:[#allocation2] sm:$0xff] %v361
          %364 = vst [vmem:[#allocation2 + $0x8] sm:$0xff] %v361
          %365 = vst [vmem:[#allocation2 + $0x10] sm:$0xff] %v361
          %366 = vst [vmem:[#allocation2 + $0x18] sm:$0xff] %v361
          %367 = vst [vmem:[#allocation2 + $0x20] sm:$0xff] %v361
          %368 = vst [vmem:[#allocation2 + $0x28] sm:$0xff] %v361
          %369 = vst [vmem:[#allocation2 + $0x30] sm:$0xff] %v361
          %370 = vst [vmem:[#allocation2 + $0x38] sm:$0xff] %v361
          %371 = vst [vmem:[#allocation2 + $0x40] sm:$0xff] %v361
          %372 = vst [vmem:[#allocation2 + $0x48] sm:$0xff] %v361
          %373 = vst [vmem:[#allocation2 + $0x50] sm:$0xff] %v361
          %374 = vst [vmem:[#allocation2 + $0x58] sm:$0xff] %v361
          %375 = vst [vmem:[#allocation2 + $0x60] sm:$0xff] %v361
          %376 = vst [vmem:[#allocation2 + $0x68] sm:$0xff] %v361
          %377 = vst [vmem:[#allocation2 + $0x70] sm:$0xff] %v361
          %378 = vst [vmem:[#allocation2 + $0x78] sm:$0xff] %v361
          %379 = vst [vmem:[#allocation2 + $0x80] sm:$0xff] %v361
          %380 = vst [vmem:[#allocation2 + $0x88] sm:$0xff] %v361
          %381 = vst [vmem:[#allocation2 + $0x90] sm:$0xff] %v361
          %382 = vst [vmem:[#allocation2 + $0x98] sm:$0xff] %v361
          %383 = vst [vmem:[#allocation2 + $0xa0] sm:$0xff] %v361
          %384 = vst [vmem:[#allocation2 + $0xa8] sm:$0xff] %v361
          %385 = vst [vmem:[#allocation2 + $0xb0] sm:$0xff] %v361
          %386 = vst [vmem:[#allocation2 + $0xb8] sm:$0xff] %v361
          %387 = vst [vmem:[#allocation2 + $0xc0] sm:$0xff] %v361
          %388 = vst [vmem:[#allocation2 + $0xc8] sm:$0xff] %v361
          %389 = vst [vmem:[#allocation2 + $0xd0] sm:$0xff] %v361
          %390 = vst [vmem:[#allocation2 + $0xd8] sm:$0xff] %v361
          %391 = vst [vmem:[#allocation2 + $0xe0] sm:$0xff] %v361
          %392 = vst [vmem:[#allocation2 + $0xe8] sm:$0xff] %v361
          %393 = vst [vmem:[#allocation2 + $0xf0] sm:$0xff] %v361
          %394 = vst [vmem:[#allocation2 + $0xf8] sm:$0xff] %v361
          %395 = vst [vmem:[#allocation2 + $0x100] sm:$0xff] %v361
          %396 = vst [vmem:[#allocation2 + $0x108] sm:$0xff] %v361
          %397 = vst [vmem:[#allocation2 + $0x110] sm:$0xff] %v361
          %398 = vst [vmem:[#allocation2 + $0x118] sm:$0xff] %v361
          %399 = vst [vmem:[#allocation2 + $0x120] sm:$0xff] %v361
          %400 = vst [vmem:[#allocation2 + $0x128] sm:$0xff] %v361
          %401 = vst [vmem:[#allocation2 + $0x130] sm:$0xff] %v361
          %402 = vst [vmem:[#allocation2 + $0x138] sm:$0xff] %v361
          %403 = vst [vmem:[#allocation2 + $0x140] sm:$0xff] %v361
          %404 = vst [vmem:[#allocation2 + $0x148] sm:$0xff] %v361
          %405 = vst [vmem:[#allocation2 + $0x150] sm:$0xff] %v361
          %406 = vst [vmem:[#allocation2 + $0x158] sm:$0xff] %v361
          %407 = vst [vmem:[#allocation2 + $0x160] sm:$0xff] %v361
          %408 = vst [vmem:[#allocation2 + $0x168] sm:$0xff] %v361
          %409 = vst [vmem:[#allocation2 + $0x170] sm:$0xff] %v361
          %410 = vst [vmem:[#allocation2 + $0x178] sm:$0xff] %v361
          %411 = vst [vmem:[#allocation2 + $0x180] sm:$0xff] %v361
          %412 = vst [vmem:[#allocation2 + $0x188] sm:$0xff] %v361
          %413 = vst [vmem:[#allocation2 + $0x190] sm:$0xff] %v361
          %414 = vst [vmem:[#allocation2 + $0x198] sm:$0xff] %v361
          %415 = vst [vmem:[#allocation2 + $0x1a0] sm:$0xff] %v361
          %416 = vst [vmem:[#allocation2 + $0x1a8] sm:$0xff] %v361
          %417 = vst [vmem:[#allocation2 + $0x1b0] sm:$0xff] %v361
          %418 = vst [vmem:[#allocation2 + $0x1b8] sm:$0xff] %v361
          %419 = vst [vmem:[#allocation2 + $0x1c0] sm:$0xff] %v361
          %420 = vst [vmem:[#allocation2 + $0x1c8] sm:$0xff] %v361
          %421 = vst [vmem:[#allocation2 + $0x1d0] sm:$0xff] %v361
          %422 = vst [vmem:[#allocation2 + $0x1d8] sm:$0xff] %v361
          %423 = vst [vmem:[#allocation2 + $0x1e0] sm:$0xff] %v361
          %424 = vst [vmem:[#allocation2 + $0x1e8] sm:$0xff] %v361
          %425 = vst [vmem:[#allocation2 + $0x1f0] sm:$0xff] %v361
          %426 = vst [vmem:[#allocation2 + $0x1f8] sm:$0xff] %v361
        $region60: #{tpu_custom_call.1} parent=39 // pred_fallthru
          _
        %v427 = vld [vmem:[#allocation3] sm:$0xff]
        %v428 = vld [vmem:[#allocation3 + $0x8] sm:$0xff]
        %v429 = vld [vmem:[#allocation3 + $0x10] sm:$0xff]
        %v430 = vld [vmem:[#allocation3 + $0x18] sm:$0xff]
        %v431 = vld [vmem:[#allocation3 + $0x20] sm:$0xff]
        %v432 = vld [vmem:[#allocation3 + $0x28] sm:$0xff]
        %v433 = vld [vmem:[#allocation3 + $0x30] sm:$0xff]
        %v434 = vld [vmem:[#allocation3 + $0x38] sm:$0xff]
        %v435 = vld [vmem:[#allocation3 + $0x40] sm:$0xff]
        %v436 = vld [vmem:[#allocation3 + $0x48] sm:$0xff]
        %v437 = vld [vmem:[#allocation3 + $0x50] sm:$0xff]
        %v438 = vld [vmem:[#allocation3 + $0x58] sm:$0xff]
        %v439 = vld [vmem:[#allocation3 + $0x60] sm:$0xff]
        %v440 = vld [vmem:[#allocation3 + $0x68] sm:$0xff]
        %v441 = vld [vmem:[#allocation3 + $0x70] sm:$0xff]
        %v442 = vld [vmem:[#allocation3 + $0x78] sm:$0xff]
        %v443 = vld [vmem:[#allocation3 + $0x80] sm:$0xff]
        %v444 = vld [vmem:[#allocation3 + $0x88] sm:$0xff]
        %v445 = vld [vmem:[#allocation3 + $0x90] sm:$0xff]
        %v446 = vld [vmem:[#allocation3 + $0x98] sm:$0xff]
        %v447 = vld [vmem:[#allocation3 + $0xa0] sm:$0xff]
        %v448 = vld [vmem:[#allocation3 + $0xa8] sm:$0xff]
        %v449 = vld [vmem:[#allocation3 + $0xb0] sm:$0xff]
        %v450 = vld [vmem:[#allocation3 + $0xb8] sm:$0xff]
        %v451 = vld [vmem:[#allocation3 + $0xc0] sm:$0xff]
        %v452 = vld [vmem:[#allocation3 + $0xc8] sm:$0xff]
        %v453 = vld [vmem:[#allocation3 + $0xd0] sm:$0xff]
        %v454 = vld [vmem:[#allocation3 + $0xd8] sm:$0xff]
        %v455 = vld [vmem:[#allocation3 + $0xe0] sm:$0xff]
        %v456 = vld [vmem:[#allocation3 + $0xe8] sm:$0xff]
        %v457 = vld [vmem:[#allocation3 + $0xf0] sm:$0xff]
        %v458 = vld [vmem:[#allocation3 + $0xf8] sm:$0xff]
        %v459 = vld [vmem:[#allocation3 + $0x100] sm:$0xff]
        %v460 = vld [vmem:[#allocation3 + $0x108] sm:$0xff]
        %v461 = vld [vmem:[#allocation3 + $0x110] sm:$0xff]
        %v462 = vld [vmem:[#allocation3 + $0x118] sm:$0xff]
        %v463 = vld [vmem:[#allocation3 + $0x120] sm:$0xff]
        %v464 = vld [vmem:[#allocation3 + $0x128] sm:$0xff]
        %v465 = vld [vmem:[#allocation3 + $0x130] sm:$0xff]
        %v466 = vld [vmem:[#allocation3 + $0x138] sm:$0xff]
        %v467 = vld [vmem:[#allocation3 + $0x140] sm:$0xff]
        %v468 = vld [vmem:[#allocation3 + $0x148] sm:$0xff]
        %v469 = vld [vmem:[#allocation3 + $0x150] sm:$0xff]
        %v470 = vld [vmem:[#allocation3 + $0x158] sm:$0xff]
        %v471 = vld [vmem:[#allocation3 + $0x160] sm:$0xff]
        %v472 = vld [vmem:[#allocation3 + $0x168] sm:$0xff]
        %v473 = vld [vmem:[#allocation3 + $0x170] sm:$0xff]
        %v474 = vld [vmem:[#allocation3 + $0x178] sm:$0xff]
        %v475 = vld [vmem:[#allocation3 + $0x180] sm:$0xff]
        %v476 = vld [vmem:[#allocation3 + $0x188] sm:$0xff]
        %v477 = vld [vmem:[#allocation3 + $0x190] sm:$0xff]
        %v478 = vld [vmem:[#allocation3 + $0x198] sm:$0xff]
        %v479 = vld [vmem:[#allocation3 + $0x1a0] sm:$0xff]
        %v480 = vld [vmem:[#allocation3 + $0x1a8] sm:$0xff]
        %v481 = vld [vmem:[#allocation3 + $0x1b0] sm:$0xff]
        %v482 = vld [vmem:[#allocation3 + $0x1b8] sm:$0xff]
        %v483 = vld [vmem:[#allocation3 + $0x1c0] sm:$0xff]
        %v484 = vld [vmem:[#allocation3 + $0x1c8] sm:$0xff]
        %v485 = vld [vmem:[#allocation3 + $0x1d0] sm:$0xff]
        %v486 = vld [vmem:[#allocation3 + $0x1d8] sm:$0xff]
        %v487 = vld [vmem:[#allocation3 + $0x1e0] sm:$0xff]
        %v488 = vld [vmem:[#allocation3 + $0x1e8] sm:$0xff]
        %v489 = vld [vmem:[#allocation3 + $0x1f0] sm:$0xff]
        %v490 = vld [vmem:[#allocation3 + $0x1f8] sm:$0xff]
        %v491 = vpack.c.bf16 %v428, %v427
        %v492 = vpack.c.bf16 %v430, %v429
        %v493 = vpack.c.bf16 %v432, %v431
        %v494 = vpack.c.bf16 %v434, %v433
        %v495 = vpack.c.bf16 %v436, %v435
        %v496 = vpack.c.bf16 %v438, %v437
        %v497 = vpack.c.bf16 %v440, %v439
        %v498 = vpack.c.bf16 %v442, %v441
        %v499 = vpack.c.bf16 %v444, %v443
        %v500 = vpack.c.bf16 %v446, %v445
        %v501 = vpack.c.bf16 %v448, %v447
        %v502 = vpack.c.bf16 %v450, %v449
        %v503 = vpack.c.bf16 %v452, %v451
        %v504 = vpack.c.bf16 %v454, %v453
        %v505 = vpack.c.bf16 %v456, %v455
        %v506 = vpack.c.bf16 %v458, %v457
        %v507 = vpack.c.bf16 %v460, %v459
        %v508 = vpack.c.bf16 %v462, %v461
        %v509 = vpack.c.bf16 %v464, %v463
        %v510 = vpack.c.bf16 %v466, %v465
        %v511 = vpack.c.bf16 %v468, %v467
        %v512 = vpack.c.bf16 %v470, %v469
        %v513 = vpack.c.bf16 %v472, %v471
        %v514 = vpack.c.bf16 %v474, %v473
        %v515 = vpack.c.bf16 %v476, %v475
        %v516 = vpack.c.bf16 %v478, %v477
        %v517 = vpack.c.bf16 %v480, %v479
        %v518 = vpack.c.bf16 %v482, %v481
        %v519 = vpack.c.bf16 %v484, %v483
        %v520 = vpack.c.bf16 %v486, %v485
        %v521 = vpack.c.bf16 %v488, %v487
        %v522 = vpack.c.bf16 %v490, %v489
        %v523 = vld [vmem:[%s296] sm:$0xff]
        %v524 = vld [vmem:[%s296 + $0x8] sm:$0xff]
        %v525 = vld [vmem:[%s296 + $0x10] sm:$0xff]
        %v526 = vld [vmem:[%s296 + $0x18] sm:$0xff]
        %v527 = vld [vmem:[%s296 + $0x20] sm:$0xff]
        %v528 = vld [vmem:[%s296 + $0x28] sm:$0xff]
        %v529 = vld [vmem:[%s296 + $0x30] sm:$0xff]
        %v530 = vld [vmem:[%s296 + $0x38] sm:$0xff]
        %v531 = vld [vmem:[%s296 + $0x40] sm:$0xff]
        %v532 = vld [vmem:[%s296 + $0x48] sm:$0xff]
        %v533 = vld [vmem:[%s296 + $0x50] sm:$0xff]
        %v534 = vld [vmem:[%s296 + $0x58] sm:$0xff]
        %v535 = vld [vmem:[%s296 + $0x60] sm:$0xff]
        %v536 = vld [vmem:[%s296 + $0x68] sm:$0xff]
        %v537 = vld [vmem:[%s296 + $0x70] sm:$0xff]
        %v538 = vld [vmem:[%s296 + $0x78] sm:$0xff]
        %v539 = vld [vmem:[%s296 + $0x80] sm:$0xff]
        %v540 = vld [vmem:[%s296 + $0x88] sm:$0xff]
        %v541 = vld [vmem:[%s296 + $0x90] sm:$0xff]
        %v542 = vld [vmem:[%s296 + $0x98] sm:$0xff]
        %v543 = vld [vmem:[%s296 + $0xa0] sm:$0xff]
        %v544 = vld [vmem:[%s296 + $0xa8] sm:$0xff]
        %v545 = vld [vmem:[%s296 + $0xb0] sm:$0xff]
        %v546 = vld [vmem:[%s296 + $0xb8] sm:$0xff]
        %v547 = vld [vmem:[%s296 + $0xc0] sm:$0xff]
        %v548 = vld [vmem:[%s296 + $0xc8] sm:$0xff]
        %v549 = vld [vmem:[%s296 + $0xd0] sm:$0xff]
        %v550 = vld [vmem:[%s296 + $0xd8] sm:$0xff]
        %v551 = vld [vmem:[%s296 + $0xe0] sm:$0xff]
        %v552 = vld [vmem:[%s296 + $0xe8] sm:$0xff]
        %v553 = vld [vmem:[%s296 + $0xf0] sm:$0xff]
        %v554 = vld [vmem:[%s296 + $0xf8] sm:$0xff]
        %v555 = vld [vmem:[%s305] sm:$0xf]
        %v557 = vlaneseq
        %v558 = vshrl.u32 %v557, 7
        %v559 = vsub.s32 0, %v558
        %v560 = vrot.slane %v555, %v559
        %v561 = vlaneseq
        %v562 = vshrl.u32 %v561, 7
        %v563 = vsub.s32 1, %v562
        %v564 = vrot.slane %v555, %v563
        %v565 = vlaneseq
        %v566 = vshrl.u32 %v565, 7
        %v567 = vsub.s32 2, %v566
        %v568 = vrot.slane %v555, %v567
        %v569 = vlaneseq
        %v570 = vshrl.u32 %v569, 7
        %v571 = vsub.s32 3, %v570
        %v572 = vrot.slane %v555, %v571
        %v609 = vunpack.c.l.b16 %v523
        %v610 = vunpack.c.h.b16 %v523
        %v611 = vunpack.c.l.b16 %v524
        %v612 = vunpack.c.h.b16 %v524
        %v613 = vunpack.c.l.b16 %v525
        %v614 = vunpack.c.h.b16 %v525
        %v615 = vunpack.c.l.b16 %v526
        %v616 = vunpack.c.h.b16 %v526
        %v617 = vunpack.c.l.b16 %v527
        %v618 = vunpack.c.h.b16 %v527
        %v619 = vunpack.c.l.b16 %v528
        %v620 = vunpack.c.h.b16 %v528
        %v621 = vunpack.c.l.b16 %v529
        %v622 = vunpack.c.h.b16 %v529
        %v623 = vunpack.c.l.b16 %v530
        %v624 = vunpack.c.h.b16 %v530
        %v625 = vunpack.c.l.b16 %v531
        %v626 = vunpack.c.h.b16 %v531
        %v627 = vunpack.c.l.b16 %v532
        %v628 = vunpack.c.h.b16 %v532
        %v629 = vunpack.c.l.b16 %v533
        %v630 = vunpack.c.h.b16 %v533
        %v631 = vunpack.c.l.b16 %v534
        %v632 = vunpack.c.h.b16 %v534
        %v633 = vunpack.c.l.b16 %v535
        %v634 = vunpack.c.h.b16 %v535
        %v635 = vunpack.c.l.b16 %v536
        %v636 = vunpack.c.h.b16 %v536
        %v637 = vunpack.c.l.b16 %v537
        %v638 = vunpack.c.h.b16 %v537
        %v639 = vunpack.c.l.b16 %v538
        %v640 = vunpack.c.h.b16 %v538
        %v641 = vunpack.c.l.b16 %v539
        %v642 = vunpack.c.h.b16 %v539
        %v643 = vunpack.c.l.b16 %v540
        %v644 = vunpack.c.h.b16 %v540
        %v645 = vunpack.c.l.b16 %v541
        %v646 = vunpack.c.h.b16 %v541
        %v647 = vunpack.c.l.b16 %v542
        %v648 = vunpack.c.h.b16 %v542
        %v649 = vunpack.c.l.b16 %v543
        %v650 = vunpack.c.h.b16 %v543
        %v651 = vunpack.c.l.b16 %v544
        %v652 = vunpack.c.h.b16 %v544
        %v653 = vunpack.c.l.b16 %v545
        %v654 = vunpack.c.h.b16 %v545
        %v655 = vunpack.c.l.b16 %v546
        %v656 = vunpack.c.h.b16 %v546
        %v657 = vunpack.c.l.b16 %v547
        %v658 = vunpack.c.h.b16 %v547
        %v659 = vunpack.c.l.b16 %v548
        %v660 = vunpack.c.h.b16 %v548
        %v661 = vunpack.c.l.b16 %v549
        %v662 = vunpack.c.h.b16 %v549
        %v663 = vunpack.c.l.b16 %v550
        %v664 = vunpack.c.h.b16 %v550
        %v665 = vunpack.c.l.b16 %v551
        %v666 = vunpack.c.h.b16 %v551
        %v667 = vunpack.c.l.b16 %v552
        %v668 = vunpack.c.h.b16 %v552
        %v669 = vunpack.c.l.b16 %v553
        %v670 = vunpack.c.h.b16 %v553
        %v671 = vunpack.c.l.b16 %v554
        %v672 = vunpack.c.h.b16 %v554
        %v673 = vpack.c.b16 %v613, %v609
        %v674 = vpack.c.b16 %v614, %v610
        %v675 = vpack.c.b16 %v615, %v611
        %v676 = vpack.c.b16 %v616, %v612
        %v677 = vpack.c.b16 %v621, %v617
        %v678 = vpack.c.b16 %v622, %v618
        %v679 = vpack.c.b16 %v623, %v619
        %v680 = vpack.c.b16 %v624, %v620
        %v681 = vpack.c.b16 %v629, %v625
        %v682 = vpack.c.b16 %v630, %v626
        %v683 = vpack.c.b16 %v631, %v627
        %v684 = vpack.c.b16 %v632, %v628
        %v685 = vpack.c.b16 %v637, %v633
        %v686 = vpack.c.b16 %v638, %v634
        %v687 = vpack.c.b16 %v639, %v635
        %v688 = vpack.c.b16 %v640, %v636
        %v689 = vpack.c.b16 %v645, %v641
        %v690 = vpack.c.b16 %v646, %v642
        %v691 = vpack.c.b16 %v647, %v643
        %v692 = vpack.c.b16 %v648, %v644
        %v693 = vpack.c.b16 %v653, %v649
        %v694 = vpack.c.b16 %v654, %v650
        %v695 = vpack.c.b16 %v655, %v651
        %v696 = vpack.c.b16 %v656, %v652
        %v697 = vpack.c.b16 %v661, %v657
        %v698 = vpack.c.b16 %v662, %v658
        %v699 = vpack.c.b16 %v663, %v659
        %v700 = vpack.c.b16 %v664, %v660
        %v701 = vpack.c.b16 %v669, %v665
        %v702 = vpack.c.b16 %v670, %v666
        %v703 = vpack.c.b16 %v671, %v667
        %v704 = vpack.c.b16 %v672, %v668
        %737 = vmatprep.subr.bf16.mxu0 %v702
        %738 = vmatpush1.bf16.msra.mxu0 %v701
        %739 = vmatprep.subr.bf16.mxu0 %v698
        %740 = vmatpush1.bf16.msra.mxu0 %v697
        %741 = vmatprep.subr.bf16.mxu0 %v694
        %742 = vmatpush1.bf16.msra.mxu0 %v693
        %743 = vmatprep.subr.bf16.mxu0 %v690
        %744 = vmatpush1.bf16.msra.mxu0 %v689
        %745 = vmatprep.subr.bf16.mxu0 %v686
        %746 = vmatpush1.bf16.msra.mxu0 %v685
        %747 = vmatprep.subr.bf16.mxu0 %v682
        %748 = vmatpush1.bf16.msra.mxu0 %v681
        %749 = vmatprep.subr.bf16.mxu0 %v678
        %750 = vmatpush1.bf16.msra.mxu0 %v677
        %751 = vmatprep.subr.bf16.mxu0 %v674
        %752 = vmatpush1.bf16.msra.mxu0 %v673
        %753 = vmatprep.subr.bf16.mxu0 0
        %754 = vmatpush2.bf16.msra.mxu0 0
        %755 = vmatprep.subr.bf16.mxu0 0
        %756 = vmatpush2.bf16.msra.mxu0 0
        %757 = vmatprep.subr.bf16.mxu0 0
        %758 = vmatpush2.bf16.msra.mxu0 0
        %759 = vmatprep.subr.bf16.mxu0 0
        %760 = vmatpush2.bf16.msra.mxu0 0
        %761 = vmatprep.subr.bf16.mxu0 0
        %762 = vmatpush2.bf16.msra.mxu0 0
        %763 = vmatprep.subr.bf16.mxu0 0
        %764 = vmatpush2.bf16.msra.mxu0 0
        %765 = vmatprep.subr.bf16.mxu0 0
        %766 = vmatpush2.bf16.msra.mxu0 0
        %767 = vmatprep.subr.bf16.mxu0 0
        %768 = vmatpush2.bf16.msra.mxu0 0
        %769 = vmatprep.mubr.bf16.mxu0 0
        %770 = vmatmul.mubr.bf16.gmra.mxu0 %v491
        %v771 = vpop.f32.mrf.mxu0
        %v772 = vadd.f32 %v560, %v771
        %v773 = vpop.f32.mrf.mxu0
        %v774 = vadd.f32 %v564, %v773
        %v775 = vpop.f32.mrf.mxu0
        %v776 = vadd.f32 %v560, %v775
        %v777 = vpop.f32.mrf.mxu0
        %v778 = vadd.f32 %v564, %v777
        %779 = vmatprep.mubr.bf16.mxu0 0
        %780 = vmatmul.mubr.bf16.gmra.mxu0 %v492
        %v781 = vpop.f32.mrf.mxu0
        %v782 = vadd.f32 %v560, %v781
        %v783 = vpop.f32.mrf.mxu0
        %v784 = vadd.f32 %v564, %v783
        %v785 = vpop.f32.mrf.mxu0
        %v786 = vadd.f32 %v560, %v785
        %v787 = vpop.f32.mrf.mxu0
        %v788 = vadd.f32 %v564, %v787
        %789 = vmatprep.mubr.bf16.mxu0 0
        %790 = vmatmul.mubr.bf16.gmra.mxu0 %v493
        %v791 = vpop.f32.mrf.mxu0
        %v792 = vadd.f32 %v560, %v791
        %v793 = vpop.f32.mrf.mxu0
        %v794 = vadd.f32 %v564, %v793
        %v795 = vpop.f32.mrf.mxu0
        %v796 = vadd.f32 %v560, %v795
        %v797 = vpop.f32.mrf.mxu0
        %v798 = vadd.f32 %v564, %v797
        %799 = vmatprep.mubr.bf16.mxu0 0
        %800 = vmatmul.mubr.bf16.gmra.mxu0 %v494
        %v801 = vpop.f32.mrf.mxu0
        %v802 = vadd.f32 %v560, %v801
        %v803 = vpop.f32.mrf.mxu0
        %v804 = vadd.f32 %v564, %v803
        %v805 = vpop.f32.mrf.mxu0
        %v806 = vadd.f32 %v560, %v805
        %v807 = vpop.f32.mrf.mxu0
        %v808 = vadd.f32 %v564, %v807
        %809 = vmatprep.mubr.bf16.mxu0 0
        %810 = vmatmul.mubr.bf16.gmra.mxu0 %v495
        %v811 = vpop.f32.mrf.mxu0
        %v812 = vadd.f32 %v560, %v811
        %v813 = vpop.f32.mrf.mxu0
        %v814 = vadd.f32 %v564, %v813
        %v815 = vpop.f32.mrf.mxu0
        %v816 = vadd.f32 %v560, %v815
        %v817 = vpop.f32.mrf.mxu0
        %v818 = vadd.f32 %v564, %v817
        %819 = vmatprep.mubr.bf16.mxu0 0
        %820 = vmatmul.mubr.bf16.gmra.mxu0 %v496
        %v821 = vpop.f32.mrf.mxu0
        %v822 = vadd.f32 %v560, %v821
        %v823 = vpop.f32.mrf.mxu0
        %v824 = vadd.f32 %v564, %v823
        %v825 = vpop.f32.mrf.mxu0
        %v826 = vadd.f32 %v560, %v825
        %v827 = vpop.f32.mrf.mxu0
        %v828 = vadd.f32 %v564, %v827
        %829 = vmatprep.mubr.bf16.mxu0 0
        %830 = vmatmul.mubr.bf16.gmra.mxu0 %v497
        %v831 = vpop.f32.mrf.mxu0
        %v832 = vadd.f32 %v560, %v831
        %v833 = vpop.f32.mrf.mxu0
        %v834 = vadd.f32 %v564, %v833
        %v835 = vpop.f32.mrf.mxu0
        %v836 = vadd.f32 %v560, %v835
        %v837 = vpop.f32.mrf.mxu0
        %v838 = vadd.f32 %v564, %v837
        %839 = vmatprep.mubr.bf16.mxu0 0
        %840 = vmatmul.mubr.bf16.gmra.mxu0 %v498
        %v841 = vpop.f32.mrf.mxu0
        %v842 = vadd.f32 %v560, %v841
        %v843 = vpop.f32.mrf.mxu0
        %v844 = vadd.f32 %v564, %v843
        %v845 = vpop.f32.mrf.mxu0
        %v846 = vadd.f32 %v560, %v845
        %v847 = vpop.f32.mrf.mxu0
        %v848 = vadd.f32 %v564, %v847
        %849 = vmatprep.mubr.bf16.mxu0 0
        %850 = vmatmul.mubr.bf16.gmra.mxu0 %v499
        %v851 = vpop.f32.mrf.mxu0
        %v852 = vadd.f32 %v560, %v851
        %v853 = vpop.f32.mrf.mxu0
        %v854 = vadd.f32 %v564, %v853
        %v855 = vpop.f32.mrf.mxu0
        %v856 = vadd.f32 %v560, %v855
        %v857 = vpop.f32.mrf.mxu0
        %v858 = vadd.f32 %v564, %v857
        %859 = vmatprep.mubr.bf16.mxu0 0
        %860 = vmatmul.mubr.bf16.gmra.mxu0 %v500
        %v861 = vpop.f32.mrf.mxu0
        %v862 = vadd.f32 %v560, %v861
        %v863 = vpop.f32.mrf.mxu0
        %v864 = vadd.f32 %v564, %v863
        %v865 = vpop.f32.mrf.mxu0
        %v866 = vadd.f32 %v560, %v865
        %v867 = vpop.f32.mrf.mxu0
        %v868 = vadd.f32 %v564, %v867
        %869 = vmatprep.mubr.bf16.mxu0 0
        %870 = vmatmul.mubr.bf16.gmra.mxu0 %v501
        %v871 = vpop.f32.mrf.mxu0
        %v872 = vadd.f32 %v560, %v871
        %v873 = vpop.f32.mrf.mxu0
        %v874 = vadd.f32 %v564, %v873
        %v875 = vpop.f32.mrf.mxu0
        %v876 = vadd.f32 %v560, %v875
        %v877 = vpop.f32.mrf.mxu0
        %v878 = vadd.f32 %v564, %v877
        %879 = vmatprep.mubr.bf16.mxu0 0
        %880 = vmatmul.mubr.bf16.gmra.mxu0 %v502
        %v881 = vpop.f32.mrf.mxu0
        %v882 = vadd.f32 %v560, %v881
        %v883 = vpop.f32.mrf.mxu0
        %v884 = vadd.f32 %v564, %v883
        %v885 = vpop.f32.mrf.mxu0
        %v886 = vadd.f32 %v560, %v885
        %v887 = vpop.f32.mrf.mxu0
        %v888 = vadd.f32 %v564, %v887
        %889 = vmatprep.mubr.bf16.mxu0 0
        %890 = vmatmul.mubr.bf16.gmra.mxu0 %v503
        %v891 = vpop.f32.mrf.mxu0
        %v892 = vadd.f32 %v560, %v891
        %v893 = vpop.f32.mrf.mxu0
        %v894 = vadd.f32 %v564, %v893
        %v895 = vpop.f32.mrf.mxu0
        %v896 = vadd.f32 %v560, %v895
        %v897 = vpop.f32.mrf.mxu0
        %v898 = vadd.f32 %v564, %v897
        %899 = vmatprep.mubr.bf16.mxu0 0
        %900 = vmatmul.mubr.bf16.gmra.mxu0 %v504
        %v901 = vpop.f32.mrf.mxu0
        %v902 = vadd.f32 %v560, %v901
        %v903 = vpop.f32.mrf.mxu0
        %v904 = vadd.f32 %v564, %v903
        %v905 = vpop.f32.mrf.mxu0
        %v906 = vadd.f32 %v560, %v905
        %v907 = vpop.f32.mrf.mxu0
        %v908 = vadd.f32 %v564, %v907
        %909 = vmatprep.mubr.bf16.mxu0 0
        %910 = vmatmul.mubr.bf16.gmra.mxu0 %v505
        %v911 = vpop.f32.mrf.mxu0
        %v912 = vadd.f32 %v560, %v911
        %v913 = vpop.f32.mrf.mxu0
        %v914 = vadd.f32 %v564, %v913
        %v915 = vpop.f32.mrf.mxu0
        %v916 = vadd.f32 %v560, %v915
        %v917 = vpop.f32.mrf.mxu0
        %v918 = vadd.f32 %v564, %v917
        %919 = vmatprep.mubr.bf16.mxu0 0
        %920 = vmatmul.mubr.bf16.gmra.mxu0 %v506
        %v921 = vpop.f32.mrf.mxu0
        %v922 = vadd.f32 %v560, %v921
        %v923 = vpop.f32.mrf.mxu0
        %v924 = vadd.f32 %v564, %v923
        %v925 = vpop.f32.mrf.mxu0
        %v926 = vadd.f32 %v560, %v925
        %v927 = vpop.f32.mrf.mxu0
        %v928 = vadd.f32 %v564, %v927
        %929 = vmatprep.mubr.bf16.mxu0 0
        %930 = vmatmul.mubr.bf16.gmra.mxu0 %v507
        %v931 = vpop.f32.mrf.mxu0
        %v932 = vadd.f32 %v560, %v931
        %v933 = vpop.f32.mrf.mxu0
        %v934 = vadd.f32 %v564, %v933
        %v935 = vpop.f32.mrf.mxu0
        %v936 = vadd.f32 %v560, %v935
        %v937 = vpop.f32.mrf.mxu0
        %v938 = vadd.f32 %v564, %v937
        %939 = vmatprep.mubr.bf16.mxu0 0
        %940 = vmatmul.mubr.bf16.gmra.mxu0 %v508
        %v941 = vpop.f32.mrf.mxu0
        %v942 = vadd.f32 %v560, %v941
        %v943 = vpop.f32.mrf.mxu0
        %v944 = vadd.f32 %v564, %v943
        %v945 = vpop.f32.mrf.mxu0
        %v946 = vadd.f32 %v560, %v945
        %v947 = vpop.f32.mrf.mxu0
        %v948 = vadd.f32 %v564, %v947
        %949 = vmatprep.mubr.bf16.mxu0 0
        %950 = vmatmul.mubr.bf16.gmra.mxu0 %v509
        %v951 = vpop.f32.mrf.mxu0
        %v952 = vadd.f32 %v560, %v951
        %v953 = vpop.f32.mrf.mxu0
        %v954 = vadd.f32 %v564, %v953
        %v955 = vpop.f32.mrf.mxu0
        %v956 = vadd.f32 %v560, %v955
        %v957 = vpop.f32.mrf.mxu0
        %v958 = vadd.f32 %v564, %v957
        %959 = vmatprep.mubr.bf16.mxu0 0
        %960 = vmatmul.mubr.bf16.gmra.mxu0 %v510
        %v961 = vpop.f32.mrf.mxu0
        %v962 = vadd.f32 %v560, %v961
        %v963 = vpop.f32.mrf.mxu0
        %v964 = vadd.f32 %v564, %v963
        %v965 = vpop.f32.mrf.mxu0
        %v966 = vadd.f32 %v560, %v965
        %v967 = vpop.f32.mrf.mxu0
        %v968 = vadd.f32 %v564, %v967
        %969 = vmatprep.mubr.bf16.mxu0 0
        %970 = vmatmul.mubr.bf16.gmra.mxu0 %v511
        %v971 = vpop.f32.mrf.mxu0
        %v972 = vadd.f32 %v560, %v971
        %v973 = vpop.f32.mrf.mxu0
        %v974 = vadd.f32 %v564, %v973
        %v975 = vpop.f32.mrf.mxu0
        %v976 = vadd.f32 %v560, %v975
        %v977 = vpop.f32.mrf.mxu0
        %v978 = vadd.f32 %v564, %v977
        %979 = vmatprep.mubr.bf16.mxu0 0
        %980 = vmatmul.mubr.bf16.gmra.mxu0 %v512
        %v981 = vpop.f32.mrf.mxu0
        %v982 = vadd.f32 %v560, %v981
        %v983 = vpop.f32.mrf.mxu0
        %v984 = vadd.f32 %v564, %v983
        %v985 = vpop.f32.mrf.mxu0
        %v986 = vadd.f32 %v560, %v985
        %v987 = vpop.f32.mrf.mxu0
        %v988 = vadd.f32 %v564, %v987
        %989 = vmatprep.mubr.bf16.mxu0 0
        %990 = vmatmul.mubr.bf16.gmra.mxu0 %v513
        %v991 = vpop.f32.mrf.mxu0
        %v992 = vadd.f32 %v560, %v991
        %v993 = vpop.f32.mrf.mxu0
        %v994 = vadd.f32 %v564, %v993
        %v995 = vpop.f32.mrf.mxu0
        %v996 = vadd.f32 %v560, %v995
        %v997 = vpop.f32.mrf.mxu0
        %v998 = vadd.f32 %v564, %v997
        %999 = vmatprep.mubr.bf16.mxu0 0
        %1000 = vmatmul.mubr.bf16.gmra.mxu0 %v514
        %v1001 = vpop.f32.mrf.mxu0
        %v1002 = vadd.f32 %v560, %v1001
        %v1003 = vpop.f32.mrf.mxu0
        %v1004 = vadd.f32 %v564, %v1003
        %v1005 = vpop.f32.mrf.mxu0
        %v1006 = vadd.f32 %v560, %v1005
        %v1007 = vpop.f32.mrf.mxu0
        %v1008 = vadd.f32 %v564, %v1007
        %1009 = vmatprep.mubr.bf16.mxu0 0
        %1010 = vmatmul.mubr.bf16.gmra.mxu0 %v515
        %v1011 = vpop.f32.mrf.mxu0
        %v1012 = vadd.f32 %v560, %v1011
        %v1013 = vpop.f32.mrf.mxu0
        %v1014 = vadd.f32 %v564, %v1013
        %v1015 = vpop.f32.mrf.mxu0
        %v1016 = vadd.f32 %v560, %v1015
        %v1017 = vpop.f32.mrf.mxu0
        %v1018 = vadd.f32 %v564, %v1017
        %1019 = vmatprep.mubr.bf16.mxu0 0
        %1020 = vmatmul.mubr.bf16.gmra.mxu0 %v516
        %v1021 = vpop.f32.mrf.mxu0
        %v1022 = vadd.f32 %v560, %v1021
        %v1023 = vpop.f32.mrf.mxu0
        %v1024 = vadd.f32 %v564, %v1023
        %v1025 = vpop.f32.mrf.mxu0
        %v1026 = vadd.f32 %v560, %v1025
        %v1027 = vpop.f32.mrf.mxu0
        %v1028 = vadd.f32 %v564, %v1027
        %1029 = vmatprep.mubr.bf16.mxu0 0
        %1030 = vmatmul.mubr.bf16.gmra.mxu0 %v517
        %v1031 = vpop.f32.mrf.mxu0
        %v1032 = vadd.f32 %v560, %v1031
        %v1033 = vpop.f32.mrf.mxu0
        %v1034 = vadd.f32 %v564, %v1033
        %v1035 = vpop.f32.mrf.mxu0
        %v1036 = vadd.f32 %v560, %v1035
        %v1037 = vpop.f32.mrf.mxu0
        %v1038 = vadd.f32 %v564, %v1037
        %1039 = vmatprep.mubr.bf16.mxu0 0
        %1040 = vmatmul.mubr.bf16.gmra.mxu0 %v518
        %v1041 = vpop.f32.mrf.mxu0
        %v1042 = vadd.f32 %v560, %v1041
        %v1043 = vpop.f32.mrf.mxu0
        %v1044 = vadd.f32 %v564, %v1043
        %v1045 = vpop.f32.mrf.mxu0
        %v1046 = vadd.f32 %v560, %v1045
        %v1047 = vpop.f32.mrf.mxu0
        %v1048 = vadd.f32 %v564, %v1047
        %1049 = vmatprep.mubr.bf16.mxu0 0
        %1050 = vmatmul.mubr.bf16.gmra.mxu0 %v519
        %v1051 = vpop.f32.mrf.mxu0
        %v1052 = vadd.f32 %v560, %v1051
        %v1053 = vpop.f32.mrf.mxu0
        %v1054 = vadd.f32 %v564, %v1053
        %v1055 = vpop.f32.mrf.mxu0
        %v1056 = vadd.f32 %v560, %v1055
        %v1057 = vpop.f32.mrf.mxu0
        %v1058 = vadd.f32 %v564, %v1057
        %1059 = vmatprep.mubr.bf16.mxu0 0
        %1060 = vmatmul.mubr.bf16.gmra.mxu0 %v520
        %v1061 = vpop.f32.mrf.mxu0
        %v1062 = vadd.f32 %v560, %v1061
        %v1063 = vpop.f32.mrf.mxu0
        %v1064 = vadd.f32 %v564, %v1063
        %v1065 = vpop.f32.mrf.mxu0
        %v1066 = vadd.f32 %v560, %v1065
        %v1067 = vpop.f32.mrf.mxu0
        %v1068 = vadd.f32 %v564, %v1067
        %1069 = vmatprep.mubr.bf16.mxu0 0
        %1070 = vmatmul.mubr.bf16.gmra.mxu0 %v521
        %v1071 = vpop.f32.mrf.mxu0
        %v1072 = vadd.f32 %v560, %v1071
        %v1073 = vpop.f32.mrf.mxu0
        %v1074 = vadd.f32 %v564, %v1073
        %v1075 = vpop.f32.mrf.mxu0
        %v1076 = vadd.f32 %v560, %v1075
        %v1077 = vpop.f32.mrf.mxu0
        %v1078 = vadd.f32 %v564, %v1077
        %1079 = vmatprep.mubr.bf16.mxu0 0
        %1080 = vmatmul.mubr.bf16.gmra.mxu0 %v522
        %v1081 = vpop.f32.mrf.mxu0
        %v1082 = vadd.f32 %v560, %v1081
        %v1083 = vpop.f32.mrf.mxu0
        %v1084 = vadd.f32 %v564, %v1083
        %v1085 = vpop.f32.mrf.mxu0
        %v1086 = vadd.f32 %v560, %v1085
        %v1087 = vpop.f32.mrf.mxu0
        %v1088 = vadd.f32 %v564, %v1087
        %1089 = vdwg.mxu0
        %1090 = vmatprep.subr.bf16.mxu0 %v704
        %1091 = vmatpush1.bf16.msra.mxu0 %v703
        %1092 = vmatprep.subr.bf16.mxu0 %v700
        %1093 = vmatpush1.bf16.msra.mxu0 %v699
        %1094 = vmatprep.subr.bf16.mxu0 %v696
        %1095 = vmatpush1.bf16.msra.mxu0 %v695
        %1096 = vmatprep.subr.bf16.mxu0 %v692
        %1097 = vmatpush1.bf16.msra.mxu0 %v691
        %1098 = vmatprep.subr.bf16.mxu0 %v688
        %1099 = vmatpush1.bf16.msra.mxu0 %v687
        %1100 = vmatprep.subr.bf16.mxu0 %v684
        %1101 = vmatpush1.bf16.msra.mxu0 %v683
        %1102 = vmatprep.subr.bf16.mxu0 %v680
        %1103 = vmatpush1.bf16.msra.mxu0 %v679
        %1104 = vmatprep.subr.bf16.mxu0 %v676
        %1105 = vmatpush1.bf16.msra.mxu0 %v675
        %1106 = vmatprep.subr.bf16.mxu0 0
        %1107 = vmatpush2.bf16.msra.mxu0 0
        %1108 = vmatprep.subr.bf16.mxu0 0
        %1109 = vmatpush2.bf16.msra.mxu0 0
        %1110 = vmatprep.subr.bf16.mxu0 0
        %1111 = vmatpush2.bf16.msra.mxu0 0
        %1112 = vmatprep.subr.bf16.mxu0 0
        %1113 = vmatpush2.bf16.msra.mxu0 0
        %1114 = vmatprep.subr.bf16.mxu0 0
        %1115 = vmatpush2.bf16.msra.mxu0 0
        %1116 = vmatprep.subr.bf16.mxu0 0
        %1117 = vmatpush2.bf16.msra.mxu0 0
        %1118 = vmatprep.subr.bf16.mxu0 0
        %1119 = vmatpush2.bf16.msra.mxu0 0
        %1120 = vmatprep.subr.bf16.mxu0 0
        %1121 = vmatpush2.bf16.msra.mxu0 0
        %1122 = vmatprep.mubr.bf16.mxu0 0
        %1123 = vmatmul.mubr.bf16.gmra.mxu0 %v491
        %v1124 = vpop.f32.mrf.mxu0
        %v1125 = vadd.f32 %v568, %v1124
        %v1126 = vpop.f32.mrf.mxu0
        %v1127 = vadd.f32 %v572, %v1126
        %v1128 = vpop.f32.mrf.mxu0
        %v1129 = vadd.f32 %v568, %v1128
        %v1130 = vpop.f32.mrf.mxu0
        %v1131 = vadd.f32 %v572, %v1130
        %1132 = vmatprep.mubr.bf16.mxu0 0
        %1133 = vmatmul.mubr.bf16.gmra.mxu0 %v492
        %v1134 = vpop.f32.mrf.mxu0
        %v1135 = vadd.f32 %v568, %v1134
        %v1136 = vpop.f32.mrf.mxu0
        %v1137 = vadd.f32 %v572, %v1136
        %v1138 = vpop.f32.mrf.mxu0
        %v1139 = vadd.f32 %v568, %v1138
        %v1140 = vpop.f32.mrf.mxu0
        %v1141 = vadd.f32 %v572, %v1140
        %1142 = vmatprep.mubr.bf16.mxu0 0
        %1143 = vmatmul.mubr.bf16.gmra.mxu0 %v493
        %v1144 = vpop.f32.mrf.mxu0
        %v1145 = vadd.f32 %v568, %v1144
        %v1146 = vpop.f32.mrf.mxu0
        %v1147 = vadd.f32 %v572, %v1146
        %v1148 = vpop.f32.mrf.mxu0
        %v1149 = vadd.f32 %v568, %v1148
        %v1150 = vpop.f32.mrf.mxu0
        %v1151 = vadd.f32 %v572, %v1150
        %1152 = vmatprep.mubr.bf16.mxu0 0
        %1153 = vmatmul.mubr.bf16.gmra.mxu0 %v494
        %v1154 = vpop.f32.mrf.mxu0
        %v1155 = vadd.f32 %v568, %v1154
        %v1156 = vpop.f32.mrf.mxu0
        %v1157 = vadd.f32 %v572, %v1156
        %v1158 = vpop.f32.mrf.mxu0
        %v1159 = vadd.f32 %v568, %v1158
        %v1160 = vpop.f32.mrf.mxu0
        %v1161 = vadd.f32 %v572, %v1160
        %1162 = vmatprep.mubr.bf16.mxu0 0
        %1163 = vmatmul.mubr.bf16.gmra.mxu0 %v495
        %v1164 = vpop.f32.mrf.mxu0
        %v1165 = vadd.f32 %v568, %v1164
        %v1166 = vpop.f32.mrf.mxu0
        %v1167 = vadd.f32 %v572, %v1166
        %v1168 = vpop.f32.mrf.mxu0
        %v1169 = vadd.f32 %v568, %v1168
        %v1170 = vpop.f32.mrf.mxu0
        %v1171 = vadd.f32 %v572, %v1170
        %1172 = vmatprep.mubr.bf16.mxu0 0
        %1173 = vmatmul.mubr.bf16.gmra.mxu0 %v496
        %v1174 = vpop.f32.mrf.mxu0
        %v1175 = vadd.f32 %v568, %v1174
        %v1176 = vpop.f32.mrf.mxu0
        %v1177 = vadd.f32 %v572, %v1176
        %v1178 = vpop.f32.mrf.mxu0
        %v1179 = vadd.f32 %v568, %v1178
        %v1180 = vpop.f32.mrf.mxu0
        %v1181 = vadd.f32 %v572, %v1180
        %1182 = vmatprep.mubr.bf16.mxu0 0
        %1183 = vmatmul.mubr.bf16.gmra.mxu0 %v497
        %v1184 = vpop.f32.mrf.mxu0
        %v1185 = vadd.f32 %v568, %v1184
        %v1186 = vpop.f32.mrf.mxu0
        %v1187 = vadd.f32 %v572, %v1186
        %v1188 = vpop.f32.mrf.mxu0
        %v1189 = vadd.f32 %v568, %v1188
        %v1190 = vpop.f32.mrf.mxu0
        %v1191 = vadd.f32 %v572, %v1190
        %1192 = vmatprep.mubr.bf16.mxu0 0
        %1193 = vmatmul.mubr.bf16.gmra.mxu0 %v498
        %v1194 = vpop.f32.mrf.mxu0
        %v1195 = vadd.f32 %v568, %v1194
        %v1196 = vpop.f32.mrf.mxu0
        %v1197 = vadd.f32 %v572, %v1196
        %v1198 = vpop.f32.mrf.mxu0
        %v1199 = vadd.f32 %v568, %v1198
        %v1200 = vpop.f32.mrf.mxu0
        %v1201 = vadd.f32 %v572, %v1200
        %1202 = vmatprep.mubr.bf16.mxu0 0
        %1203 = vmatmul.mubr.bf16.gmra.mxu0 %v499
        %v1204 = vpop.f32.mrf.mxu0
        %v1205 = vadd.f32 %v568, %v1204
        %v1206 = vpop.f32.mrf.mxu0
        %v1207 = vadd.f32 %v572, %v1206
        %v1208 = vpop.f32.mrf.mxu0
        %v1209 = vadd.f32 %v568, %v1208
        %v1210 = vpop.f32.mrf.mxu0
        %v1211 = vadd.f32 %v572, %v1210
        %1212 = vmatprep.mubr.bf16.mxu0 0
        %1213 = vmatmul.mubr.bf16.gmra.mxu0 %v500
        %v1214 = vpop.f32.mrf.mxu0
        %v1215 = vadd.f32 %v568, %v1214
        %v1216 = vpop.f32.mrf.mxu0
        %v1217 = vadd.f32 %v572, %v1216
        %v1218 = vpop.f32.mrf.mxu0
        %v1219 = vadd.f32 %v568, %v1218
        %v1220 = vpop.f32.mrf.mxu0
        %v1221 = vadd.f32 %v572, %v1220
        %1222 = vmatprep.mubr.bf16.mxu0 0
        %1223 = vmatmul.mubr.bf16.gmra.mxu0 %v501
        %v1224 = vpop.f32.mrf.mxu0
        %v1225 = vadd.f32 %v568, %v1224
        %v1226 = vpop.f32.mrf.mxu0
        %v1227 = vadd.f32 %v572, %v1226
        %v1228 = vpop.f32.mrf.mxu0
        %v1229 = vadd.f32 %v568, %v1228
        %v1230 = vpop.f32.mrf.mxu0
        %v1231 = vadd.f32 %v572, %v1230
        %1232 = vmatprep.mubr.bf16.mxu0 0
        %1233 = vmatmul.mubr.bf16.gmra.mxu0 %v502
        %v1234 = vpop.f32.mrf.mxu0
        %v1235 = vadd.f32 %v568, %v1234
        %v1236 = vpop.f32.mrf.mxu0
        %v1237 = vadd.f32 %v572, %v1236
        %v1238 = vpop.f32.mrf.mxu0
        %v1239 = vadd.f32 %v568, %v1238
        %v1240 = vpop.f32.mrf.mxu0
        %v1241 = vadd.f32 %v572, %v1240
        %1242 = vmatprep.mubr.bf16.mxu0 0
        %1243 = vmatmul.mubr.bf16.gmra.mxu0 %v503
        %v1244 = vpop.f32.mrf.mxu0
        %v1245 = vadd.f32 %v568, %v1244
        %v1246 = vpop.f32.mrf.mxu0
        %v1247 = vadd.f32 %v572, %v1246
        %v1248 = vpop.f32.mrf.mxu0
        %v1249 = vadd.f32 %v568, %v1248
        %v1250 = vpop.f32.mrf.mxu0
        %v1251 = vadd.f32 %v572, %v1250
        %1252 = vmatprep.mubr.bf16.mxu0 0
        %1253 = vmatmul.mubr.bf16.gmra.mxu0 %v504
        %v1254 = vpop.f32.mrf.mxu0
        %v1255 = vadd.f32 %v568, %v1254
        %v1256 = vpop.f32.mrf.mxu0
        %v1257 = vadd.f32 %v572, %v1256
        %v1258 = vpop.f32.mrf.mxu0
        %v1259 = vadd.f32 %v568, %v1258
        %v1260 = vpop.f32.mrf.mxu0
        %v1261 = vadd.f32 %v572, %v1260
        %1262 = vmatprep.mubr.bf16.mxu0 0
        %1263 = vmatmul.mubr.bf16.gmra.mxu0 %v505
        %v1264 = vpop.f32.mrf.mxu0
        %v1265 = vadd.f32 %v568, %v1264
        %v1266 = vpop.f32.mrf.mxu0
        %v1267 = vadd.f32 %v572, %v1266
        %v1268 = vpop.f32.mrf.mxu0
        %v1269 = vadd.f32 %v568, %v1268
        %v1270 = vpop.f32.mrf.mxu0
        %v1271 = vadd.f32 %v572, %v1270
        %1272 = vmatprep.mubr.bf16.mxu0 0
        %1273 = vmatmul.mubr.bf16.gmra.mxu0 %v506
        %v1274 = vpop.f32.mrf.mxu0
        %v1275 = vadd.f32 %v568, %v1274
        %v1276 = vpop.f32.mrf.mxu0
        %v1277 = vadd.f32 %v572, %v1276
        %v1278 = vpop.f32.mrf.mxu0
        %v1279 = vadd.f32 %v568, %v1278
        %v1280 = vpop.f32.mrf.mxu0
        %v1281 = vadd.f32 %v572, %v1280
        %1282 = vmatprep.mubr.bf16.mxu0 0
        %1283 = vmatmul.mubr.bf16.gmra.mxu0 %v507
        %v1284 = vpop.f32.mrf.mxu0
        %v1285 = vadd.f32 %v568, %v1284
        %v1286 = vpop.f32.mrf.mxu0
        %v1287 = vadd.f32 %v572, %v1286
        %v1288 = vpop.f32.mrf.mxu0
        %v1289 = vadd.f32 %v568, %v1288
        %v1290 = vpop.f32.mrf.mxu0
        %v1291 = vadd.f32 %v572, %v1290
        %1292 = vmatprep.mubr.bf16.mxu0 0
        %1293 = vmatmul.mubr.bf16.gmra.mxu0 %v508
        %v1294 = vpop.f32.mrf.mxu0
        %v1295 = vadd.f32 %v568, %v1294
        %v1296 = vpop.f32.mrf.mxu0
        %v1297 = vadd.f32 %v572, %v1296
        %v1298 = vpop.f32.mrf.mxu0
        %v1299 = vadd.f32 %v568, %v1298
        %v1300 = vpop.f32.mrf.mxu0
        %v1301 = vadd.f32 %v572, %v1300
        %1302 = vmatprep.mubr.bf16.mxu0 0
        %1303 = vmatmul.mubr.bf16.gmra.mxu0 %v509
        %v1304 = vpop.f32.mrf.mxu0
        %v1305 = vadd.f32 %v568, %v1304
        %v1306 = vpop.f32.mrf.mxu0
        %v1307 = vadd.f32 %v572, %v1306
        %v1308 = vpop.f32.mrf.mxu0
        %v1309 = vadd.f32 %v568, %v1308
        %v1310 = vpop.f32.mrf.mxu0
        %v1311 = vadd.f32 %v572, %v1310
        %1312 = vmatprep.mubr.bf16.mxu0 0
        %1313 = vmatmul.mubr.bf16.gmra.mxu0 %v510
        %v1314 = vpop.f32.mrf.mxu0
        %v1315 = vadd.f32 %v568, %v1314
        %v1316 = vpop.f32.mrf.mxu0
        %v1317 = vadd.f32 %v572, %v1316
        %v1318 = vpop.f32.mrf.mxu0
        %v1319 = vadd.f32 %v568, %v1318
        %v1320 = vpop.f32.mrf.mxu0
        %v1321 = vadd.f32 %v572, %v1320
        %1322 = vmatprep.mubr.bf16.mxu0 0
        %1323 = vmatmul.mubr.bf16.gmra.mxu0 %v511
        %v1324 = vpop.f32.mrf.mxu0
        %v1325 = vadd.f32 %v568, %v1324
        %v1326 = vpop.f32.mrf.mxu0
        %v1327 = vadd.f32 %v572, %v1326
        %v1328 = vpop.f32.mrf.mxu0
        %v1329 = vadd.f32 %v568, %v1328
        %v1330 = vpop.f32.mrf.mxu0
        %v1331 = vadd.f32 %v572, %v1330
        %1332 = vmatprep.mubr.bf16.mxu0 0
        %1333 = vmatmul.mubr.bf16.gmra.mxu0 %v512
        %v1334 = vpop.f32.mrf.mxu0
        %v1335 = vadd.f32 %v568, %v1334
        %v1336 = vpop.f32.mrf.mxu0
        %v1337 = vadd.f32 %v572, %v1336
        %v1338 = vpop.f32.mrf.mxu0
        %v1339 = vadd.f32 %v568, %v1338
        %v1340 = vpop.f32.mrf.mxu0
        %v1341 = vadd.f32 %v572, %v1340
        %1342 = vmatprep.mubr.bf16.mxu0 0
        %1343 = vmatmul.mubr.bf16.gmra.mxu0 %v513
        %v1344 = vpop.f32.mrf.mxu0
        %v1345 = vadd.f32 %v568, %v1344
        %v1346 = vpop.f32.mrf.mxu0
        %v1347 = vadd.f32 %v572, %v1346
        %v1348 = vpop.f32.mrf.mxu0
        %v1349 = vadd.f32 %v568, %v1348
        %v1350 = vpop.f32.mrf.mxu0
        %v1351 = vadd.f32 %v572, %v1350
        %1352 = vmatprep.mubr.bf16.mxu0 0
        %1353 = vmatmul.mubr.bf16.gmra.mxu0 %v514
        %v1354 = vpop.f32.mrf.mxu0
        %v1355 = vadd.f32 %v568, %v1354
        %v1356 = vpop.f32.mrf.mxu0
        %v1357 = vadd.f32 %v572, %v1356
        %v1358 = vpop.f32.mrf.mxu0
        %v1359 = vadd.f32 %v568, %v1358
        %v1360 = vpop.f32.mrf.mxu0
        %v1361 = vadd.f32 %v572, %v1360
        %1362 = vmatprep.mubr.bf16.mxu0 0
        %1363 = vmatmul.mubr.bf16.gmra.mxu0 %v515
        %v1364 = vpop.f32.mrf.mxu0
        %v1365 = vadd.f32 %v568, %v1364
        %v1366 = vpop.f32.mrf.mxu0
        %v1367 = vadd.f32 %v572, %v1366
        %v1368 = vpop.f32.mrf.mxu0
        %v1369 = vadd.f32 %v568, %v1368
        %v1370 = vpop.f32.mrf.mxu0
        %v1371 = vadd.f32 %v572, %v1370
        %1372 = vmatprep.mubr.bf16.mxu0 0
        %1373 = vmatmul.mubr.bf16.gmra.mxu0 %v516
        %v1374 = vpop.f32.mrf.mxu0
        %v1375 = vadd.f32 %v568, %v1374
        %v1376 = vpop.f32.mrf.mxu0
        %v1377 = vadd.f32 %v572, %v1376
        %v1378 = vpop.f32.mrf.mxu0
        %v1379 = vadd.f32 %v568, %v1378
        %v1380 = vpop.f32.mrf.mxu0
        %v1381 = vadd.f32 %v572, %v1380
        %1382 = vmatprep.mubr.bf16.mxu0 0
        %1383 = vmatmul.mubr.bf16.gmra.mxu0 %v517
        %v1384 = vpop.f32.mrf.mxu0
        %v1385 = vadd.f32 %v568, %v1384
        %v1386 = vpop.f32.mrf.mxu0
        %v1387 = vadd.f32 %v572, %v1386
        %v1388 = vpop.f32.mrf.mxu0
        %v1389 = vadd.f32 %v568, %v1388
        %v1390 = vpop.f32.mrf.mxu0
        %v1391 = vadd.f32 %v572, %v1390
        %1392 = vmatprep.mubr.bf16.mxu0 0
        %1393 = vmatmul.mubr.bf16.gmra.mxu0 %v518
        %v1394 = vpop.f32.mrf.mxu0
        %v1395 = vadd.f32 %v568, %v1394
        %v1396 = vpop.f32.mrf.mxu0
        %v1397 = vadd.f32 %v572, %v1396
        %v1398 = vpop.f32.mrf.mxu0
        %v1399 = vadd.f32 %v568, %v1398
        %v1400 = vpop.f32.mrf.mxu0
        %v1401 = vadd.f32 %v572, %v1400
        %1402 = vmatprep.mubr.bf16.mxu0 0
        %1403 = vmatmul.mubr.bf16.gmra.mxu0 %v519
        %v1404 = vpop.f32.mrf.mxu0
        %v1405 = vadd.f32 %v568, %v1404
        %v1406 = vpop.f32.mrf.mxu0
        %v1407 = vadd.f32 %v572, %v1406
        %v1408 = vpop.f32.mrf.mxu0
        %v1409 = vadd.f32 %v568, %v1408
        %v1410 = vpop.f32.mrf.mxu0
        %v1411 = vadd.f32 %v572, %v1410
        %1412 = vmatprep.mubr.bf16.mxu0 0
        %1413 = vmatmul.mubr.bf16.gmra.mxu0 %v520
        %v1414 = vpop.f32.mrf.mxu0
        %v1415 = vadd.f32 %v568, %v1414
        %v1416 = vpop.f32.mrf.mxu0
        %v1417 = vadd.f32 %v572, %v1416
        %v1418 = vpop.f32.mrf.mxu0
        %v1419 = vadd.f32 %v568, %v1418
        %v1420 = vpop.f32.mrf.mxu0
        %v1421 = vadd.f32 %v572, %v1420
        %1422 = vmatprep.mubr.bf16.mxu0 0
        %1423 = vmatmul.mubr.bf16.gmra.mxu0 %v521
        %v1424 = vpop.f32.mrf.mxu0
        %v1425 = vadd.f32 %v568, %v1424
        %v1426 = vpop.f32.mrf.mxu0
        %v1427 = vadd.f32 %v572, %v1426
        %v1428 = vpop.f32.mrf.mxu0
        %v1429 = vadd.f32 %v568, %v1428
        %v1430 = vpop.f32.mrf.mxu0
        %v1431 = vadd.f32 %v572, %v1430
        %1432 = vmatprep.mubr.bf16.mxu0 0
        %1433 = vmatmul.mubr.bf16.gmra.mxu0 %v522
        %v1434 = vpop.f32.mrf.mxu0
        %v1435 = vadd.f32 %v568, %v1434
        %v1436 = vpop.f32.mrf.mxu0
        %v1437 = vadd.f32 %v572, %v1436
        %v1438 = vpop.f32.mrf.mxu0
        %v1439 = vadd.f32 %v568, %v1438
        %v1440 = vpop.f32.mrf.mxu0
        %v1441 = vadd.f32 %v572, %v1440
        %1442 = vdwg.mxu0
        %v1443 = vmul.f32 %v1125, 0.5
        %v1444 = vmul.f32 %v1127, 0.5
        %v1445 = vmul.f32 %v1129, 0.5
        %v1446 = vmul.f32 %v1131, 0.5
        %v1447 = vmul.f32 %v1135, 0.5
        %v1448 = vmul.f32 %v1137, 0.5
        %v1449 = vmul.f32 %v1139, 0.5
        %v1450 = vmul.f32 %v1141, 0.5
        %v1451 = vmul.f32 %v1145, 0.5
        %v1452 = vmul.f32 %v1147, 0.5
        %v1453 = vmul.f32 %v1149, 0.5
        %v1454 = vmul.f32 %v1151, 0.5
        %v1455 = vmul.f32 %v1155, 0.5
        %v1456 = vmul.f32 %v1157, 0.5
        %v1457 = vmul.f32 %v1159, 0.5
        %v1458 = vmul.f32 %v1161, 0.5
        %v1459 = vmul.f32 %v1165, 0.5
        %v1460 = vmul.f32 %v1167, 0.5
        %v1461 = vmul.f32 %v1169, 0.5
        %v1462 = vmul.f32 %v1171, 0.5
        %v1463 = vmul.f32 %v1175, 0.5
        %v1464 = vmul.f32 %v1177, 0.5
        %v1465 = vmul.f32 %v1179, 0.5
        %v1466 = vmul.f32 %v1181, 0.5
        %v1467 = vmul.f32 %v1185, 0.5
        %v1468 = vmul.f32 %v1187, 0.5
        %v1469 = vmul.f32 %v1189, 0.5
        %v1470 = vmul.f32 %v1191, 0.5
        %v1471 = vmul.f32 %v1195, 0.5
        %v1472 = vmul.f32 %v1197, 0.5
        %v1473 = vmul.f32 %v1199, 0.5
        %v1474 = vmul.f32 %v1201, 0.5
        %v1475 = vmul.f32 %v1205, 0.5
        %v1476 = vmul.f32 %v1207, 0.5
        %v1477 = vmul.f32 %v1209, 0.5
        %v1478 = vmul.f32 %v1211, 0.5
        %v1479 = vmul.f32 %v1215, 0.5
        %v1480 = vmul.f32 %v1217, 0.5
        %v1481 = vmul.f32 %v1219, 0.5
        %v1482 = vmul.f32 %v1221, 0.5
        %v1483 = vmul.f32 %v1225, 0.5
        %v1484 = vmul.f32 %v1227, 0.5
        %v1485 = vmul.f32 %v1229, 0.5
        %v1486 = vmul.f32 %v1231, 0.5
        %v1487 = vmul.f32 %v1235, 0.5
        %v1488 = vmul.f32 %v1237, 0.5
        %v1489 = vmul.f32 %v1239, 0.5
        %v1490 = vmul.f32 %v1241, 0.5
        %v1491 = vmul.f32 %v1245, 0.5
        %v1492 = vmul.f32 %v1247, 0.5
        %v1493 = vmul.f32 %v1249, 0.5
        %v1494 = vmul.f32 %v1251, 0.5
        %v1495 = vmul.f32 %v1255, 0.5
        %v1496 = vmul.f32 %v1257, 0.5
        %v1497 = vmul.f32 %v1259, 0.5
        %v1498 = vmul.f32 %v1261, 0.5
        %v1499 = vmul.f32 %v1265, 0.5
        %v1500 = vmul.f32 %v1267, 0.5
        %v1501 = vmul.f32 %v1269, 0.5
        %v1502 = vmul.f32 %v1271, 0.5
        %v1503 = vmul.f32 %v1275, 0.5
        %v1504 = vmul.f32 %v1277, 0.5
        %v1505 = vmul.f32 %v1279, 0.5
        %v1506 = vmul.f32 %v1281, 0.5
        %v1507 = vmul.f32 %v1285, 0.5
        %v1508 = vmul.f32 %v1287, 0.5
        %v1509 = vmul.f32 %v1289, 0.5
        %v1510 = vmul.f32 %v1291, 0.5
        %v1511 = vmul.f32 %v1295, 0.5
        %v1512 = vmul.f32 %v1297, 0.5
        %v1513 = vmul.f32 %v1299, 0.5
        %v1514 = vmul.f32 %v1301, 0.5
        %v1515 = vmul.f32 %v1305, 0.5
        %v1516 = vmul.f32 %v1307, 0.5
        %v1517 = vmul.f32 %v1309, 0.5
        %v1518 = vmul.f32 %v1311, 0.5
        %v1519 = vmul.f32 %v1315, 0.5
        %v1520 = vmul.f32 %v1317, 0.5
        %v1521 = vmul.f32 %v1319, 0.5
        %v1522 = vmul.f32 %v1321, 0.5
        %v1523 = vmul.f32 %v1325, 0.5
        %v1524 = vmul.f32 %v1327, 0.5
        %v1525 = vmul.f32 %v1329, 0.5
        %v1526 = vmul.f32 %v1331, 0.5
        %v1527 = vmul.f32 %v1335, 0.5
        %v1528 = vmul.f32 %v1337, 0.5
        %v1529 = vmul.f32 %v1339, 0.5
        %v1530 = vmul.f32 %v1341, 0.5
        %v1531 = vmul.f32 %v1345, 0.5
        %v1532 = vmul.f32 %v1347, 0.5
        %v1533 = vmul.f32 %v1349, 0.5
        %v1534 = vmul.f32 %v1351, 0.5
        %v1535 = vmul.f32 %v1355, 0.5
        %v1536 = vmul.f32 %v1357, 0.5
        %v1537 = vmul.f32 %v1359, 0.5
        %v1538 = vmul.f32 %v1361, 0.5
        %v1539 = vmul.f32 %v1365, 0.5
        %v1540 = vmul.f32 %v1367, 0.5
        %v1541 = vmul.f32 %v1369, 0.5
        %v1542 = vmul.f32 %v1371, 0.5
        %v1543 = vmul.f32 %v1375, 0.5
        %v1544 = vmul.f32 %v1377, 0.5
        %v1545 = vmul.f32 %v1379, 0.5
        %v1546 = vmul.f32 %v1381, 0.5
        %v1547 = vmul.f32 %v1385, 0.5
        %v1548 = vmul.f32 %v1387, 0.5
        %v1549 = vmul.f32 %v1389, 0.5
        %v1550 = vmul.f32 %v1391, 0.5
        %v1551 = vmul.f32 %v1395, 0.5
        %v1552 = vmul.f32 %v1397, 0.5
        %v1553 = vmul.f32 %v1399, 0.5
        %v1554 = vmul.f32 %v1401, 0.5
        %v1555 = vmul.f32 %v1405, 0.5
        %v1556 = vmul.f32 %v1407, 0.5
        %v1557 = vmul.f32 %v1409, 0.5
        %v1558 = vmul.f32 %v1411, 0.5
        %v1559 = vmul.f32 %v1415, 0.5
        %v1560 = vmul.f32 %v1417, 0.5
        %v1561 = vmul.f32 %v1419, 0.5
        %v1562 = vmul.f32 %v1421, 0.5
        %v1563 = vmul.f32 %v1425, 0.5
        %v1564 = vmul.f32 %v1427, 0.5
        %v1565 = vmul.f32 %v1429, 0.5
        %v1566 = vmul.f32 %v1431, 0.5
        %v1567 = vmul.f32 %v1435, 0.5
        %v1568 = vmul.f32 %v1437, 0.5
        %v1569 = vmul.f32 %v1439, 0.5
        %v1570 = vmul.f32 %v1441, 0.5
        %v1571 = vmul.f32 %v1125, 0.70710677
        %v1572 = vmul.f32 %v1127, 0.70710677
        %v1573 = vmul.f32 %v1129, 0.70710677
        %v1574 = vmul.f32 %v1131, 0.70710677
        %v1575 = vmul.f32 %v1135, 0.70710677
        %v1576 = vmul.f32 %v1137, 0.70710677
        %v1577 = vmul.f32 %v1139, 0.70710677
        %v1578 = vmul.f32 %v1141, 0.70710677
        %v1579 = vmul.f32 %v1145, 0.70710677
        %v1580 = vmul.f32 %v1147, 0.70710677
        %v1581 = vmul.f32 %v1149, 0.70710677
        %v1582 = vmul.f32 %v1151, 0.70710677
        %v1583 = vmul.f32 %v1155, 0.70710677
        %v1584 = vmul.f32 %v1157, 0.70710677
        %v1585 = vmul.f32 %v1159, 0.70710677
        %v1586 = vmul.f32 %v1161, 0.70710677
        %v1587 = vmul.f32 %v1165, 0.70710677
        %v1588 = vmul.f32 %v1167, 0.70710677
        %v1589 = vmul.f32 %v1169, 0.70710677
        %v1590 = vmul.f32 %v1171, 0.70710677
        %v1591 = vmul.f32 %v1175, 0.70710677
        %v1592 = vmul.f32 %v1177, 0.70710677
        %v1593 = vmul.f32 %v1179, 0.70710677
        %v1594 = vmul.f32 %v1181, 0.70710677
        %v1595 = vmul.f32 %v1185, 0.70710677
        %v1596 = vmul.f32 %v1187, 0.70710677
        %v1597 = vmul.f32 %v1189, 0.70710677
        %v1598 = vmul.f32 %v1191, 0.70710677
        %v1599 = vmul.f32 %v1195, 0.70710677
        %v1600 = vmul.f32 %v1197, 0.70710677
        %v1601 = vmul.f32 %v1199, 0.70710677
        %v1602 = vmul.f32 %v1201, 0.70710677
        %v1603 = vmul.f32 %v1205, 0.70710677
        %v1604 = vmul.f32 %v1207, 0.70710677
        %v1605 = vmul.f32 %v1209, 0.70710677
        %v1606 = vmul.f32 %v1211, 0.70710677
        %v1607 = vmul.f32 %v1215, 0.70710677
        %v1608 = vmul.f32 %v1217, 0.70710677
        %v1609 = vmul.f32 %v1219, 0.70710677
        %v1610 = vmul.f32 %v1221, 0.70710677
        %v1611 = vmul.f32 %v1225, 0.70710677
        %v1612 = vmul.f32 %v1227, 0.70710677
        %v1613 = vmul.f32 %v1229, 0.70710677
        %v1614 = vmul.f32 %v1231, 0.70710677
        %v1615 = vmul.f32 %v1235, 0.70710677
        %v1616 = vmul.f32 %v1237, 0.70710677
        %v1617 = vmul.f32 %v1239, 0.70710677
        %v1618 = vmul.f32 %v1241, 0.70710677
        %v1619 = vmul.f32 %v1245, 0.70710677
        %v1620 = vmul.f32 %v1247, 0.70710677
        %v1621 = vmul.f32 %v1249, 0.70710677
        %v1622 = vmul.f32 %v1251, 0.70710677
        %v1623 = vmul.f32 %v1255, 0.70710677
        %v1624 = vmul.f32 %v1257, 0.70710677
        %v1625 = vmul.f32 %v1259, 0.70710677
        %v1626 = vmul.f32 %v1261, 0.70710677
        %v1627 = vmul.f32 %v1265, 0.70710677
        %v1628 = vmul.f32 %v1267, 0.70710677
        %v1629 = vmul.f32 %v1269, 0.70710677
        %v1630 = vmul.f32 %v1271, 0.70710677
        %v1631 = vmul.f32 %v1275, 0.70710677
        %v1632 = vmul.f32 %v1277, 0.70710677
        %v1633 = vmul.f32 %v1279, 0.70710677
        %v1634 = vmul.f32 %v1281, 0.70710677
        %v1635 = vmul.f32 %v1285, 0.70710677
        %v1636 = vmul.f32 %v1287, 0.70710677
        %v1637 = vmul.f32 %v1289, 0.70710677
        %v1638 = vmul.f32 %v1291, 0.70710677
        %v1639 = vmul.f32 %v1295, 0.70710677
        %v1640 = vmul.f32 %v1297, 0.70710677
        %v1641 = vmul.f32 %v1299, 0.70710677
        %v1642 = vmul.f32 %v1301, 0.70710677
        %v1643 = vmul.f32 %v1305, 0.70710677
        %v1644 = vmul.f32 %v1307, 0.70710677
        %v1645 = vmul.f32 %v1309, 0.70710677
        %v1646 = vmul.f32 %v1311, 0.70710677
        %v1647 = vmul.f32 %v1315, 0.70710677
        %v1648 = vmul.f32 %v1317, 0.70710677
        %v1649 = vmul.f32 %v1319, 0.70710677
        %v1650 = vmul.f32 %v1321, 0.70710677
        %v1651 = vmul.f32 %v1325, 0.70710677
        %v1652 = vmul.f32 %v1327, 0.70710677
        %v1653 = vmul.f32 %v1329, 0.70710677
        %v1654 = vmul.f32 %v1331, 0.70710677
        %v1655 = vmul.f32 %v1335, 0.70710677
        %v1656 = vmul.f32 %v1337, 0.70710677
        %v1657 = vmul.f32 %v1339, 0.70710677
        %v1658 = vmul.f32 %v1341, 0.70710677
        %v1659 = vmul.f32 %v1345, 0.70710677
        %v1660 = vmul.f32 %v1347, 0.70710677
        %v1661 = vmul.f32 %v1349, 0.70710677
        %v1662 = vmul.f32 %v1351, 0.70710677
        %v1663 = vmul.f32 %v1355, 0.70710677
        %v1664 = vmul.f32 %v1357, 0.70710677
        %v1665 = vmul.f32 %v1359, 0.70710677
        %v1666 = vmul.f32 %v1361, 0.70710677
        %v1667 = vmul.f32 %v1365, 0.70710677
        %v1668 = vmul.f32 %v1367, 0.70710677
        %v1669 = vmul.f32 %v1369, 0.70710677
        %v1670 = vmul.f32 %v1371, 0.70710677
        %v1671 = vmul.f32 %v1375, 0.70710677
        %v1672 = vmul.f32 %v1377, 0.70710677
        %v1673 = vmul.f32 %v1379, 0.70710677
        %v1674 = vmul.f32 %v1381, 0.70710677
        %v1675 = vmul.f32 %v1385, 0.70710677
        %v1676 = vmul.f32 %v1387, 0.70710677
        %v1677 = vmul.f32 %v1389, 0.70710677
        %v1678 = vmul.f32 %v1391, 0.70710677
        %v1679 = vmul.f32 %v1395, 0.70710677
        %v1680 = vmul.f32 %v1397, 0.70710677
        %v1681 = vmul.f32 %v1399, 0.70710677
        %v1682 = vmul.f32 %v1401, 0.70710677
        %v1683 = vmul.f32 %v1405, 0.70710677
        %v1684 = vmul.f32 %v1407, 0.70710677
        %v1685 = vmul.f32 %v1409, 0.70710677
        %v1686 = vmul.f32 %v1411, 0.70710677
        %v1687 = vmul.f32 %v1415, 0.70710677
        %v1688 = vmul.f32 %v1417, 0.70710677
        %v1689 = vmul.f32 %v1419, 0.70710677
        %v1690 = vmul.f32 %v1421, 0.70710677
        %v1691 = vmul.f32 %v1425, 0.70710677
        %v1692 = vmul.f32 %v1427, 0.70710677
        %v1693 = vmul.f32 %v1429, 0.70710677
        %v1694 = vmul.f32 %v1431, 0.70710677
        %v1695 = vmul.f32 %v1435, 0.70710677
        %v1696 = vmul.f32 %v1437, 0.70710677
        %v1697 = vmul.f32 %v1439, 0.70710677
        %v1698 = vmul.f32 %v1441, 0.70710677
        %v1699 = vand.u32 2147483647, %v1571
        %v1700 = vand.u32 2147483647, %v1572
        %v1701 = vand.u32 2147483647, %v1573
        %v1702 = vand.u32 2147483647, %v1574
        %v1703 = vand.u32 2147483647, %v1575
        %v1704 = vand.u32 2147483647, %v1576
        %v1705 = vand.u32 2147483647, %v1577
        %v1706 = vand.u32 2147483647, %v1578
        %v1707 = vand.u32 2147483647, %v1579
        %v1708 = vand.u32 2147483647, %v1580
        %v1709 = vand.u32 2147483647, %v1581
        %v1710 = vand.u32 2147483647, %v1582
        %v1711 = vand.u32 2147483647, %v1583
        %v1712 = vand.u32 2147483647, %v1584
        %v1713 = vand.u32 2147483647, %v1585
        %v1714 = vand.u32 2147483647, %v1586
        %v1715 = vand.u32 2147483647, %v1587
        %v1716 = vand.u32 2147483647, %v1588
        %v1717 = vand.u32 2147483647, %v1589
        %v1718 = vand.u32 2147483647, %v1590
        %v1719 = vand.u32 2147483647, %v1591
        %v1720 = vand.u32 2147483647, %v1592
        %v1721 = vand.u32 2147483647, %v1593
        %v1722 = vand.u32 2147483647, %v1594
        %v1723 = vand.u32 2147483647, %v1595
        %v1724 = vand.u32 2147483647, %v1596
        %v1725 = vand.u32 2147483647, %v1597
        %v1726 = vand.u32 2147483647, %v1598
        %v1727 = vand.u32 2147483647, %v1599
        %v1728 = vand.u32 2147483647, %v1600
        %v1729 = vand.u32 2147483647, %v1601
        %v1730 = vand.u32 2147483647, %v1602
        %v1731 = vand.u32 2147483647, %v1603
        %v1732 = vand.u32 2147483647, %v1604
        %v1733 = vand.u32 2147483647, %v1605
        %v1734 = vand.u32 2147483647, %v1606
        %v1735 = vand.u32 2147483647, %v1607
        %v1736 = vand.u32 2147483647, %v1608
        %v1737 = vand.u32 2147483647, %v1609
        %v1738 = vand.u32 2147483647, %v1610
        %v1739 = vand.u32 2147483647, %v1611
        %v1740 = vand.u32 2147483647, %v1612
        %v1741 = vand.u32 2147483647, %v1613
        %v1742 = vand.u32 2147483647, %v1614
        %v1743 = vand.u32 2147483647, %v1615
        %v1744 = vand.u32 2147483647, %v1616
        %v1745 = vand.u32 2147483647, %v1617
        %v1746 = vand.u32 2147483647, %v1618
        %v1747 = vand.u32 2147483647, %v1619
        %v1748 = vand.u32 2147483647, %v1620
        %v1749 = vand.u32 2147483647, %v1621
        %v1750 = vand.u32 2147483647, %v1622
        %v1751 = vand.u32 2147483647, %v1623
        %v1752 = vand.u32 2147483647, %v1624
        %v1753 = vand.u32 2147483647, %v1625
        %v1754 = vand.u32 2147483647, %v1626
        %v1755 = vand.u32 2147483647, %v1627
        %v1756 = vand.u32 2147483647, %v1628
        %v1757 = vand.u32 2147483647, %v1629
        %v1758 = vand.u32 2147483647, %v1630
        %v1759 = vand.u32 2147483647, %v1631
        %v1760 = vand.u32 2147483647, %v1632
        %v1761 = vand.u32 2147483647, %v1633
        %v1762 = vand.u32 2147483647, %v1634
        %v1763 = vand.u32 2147483647, %v1635
        %v1764 = vand.u32 2147483647, %v1636
        %v1765 = vand.u32 2147483647, %v1637
        %v1766 = vand.u32 2147483647, %v1638
        %v1767 = vand.u32 2147483647, %v1639
        %v1768 = vand.u32 2147483647, %v1640
        %v1769 = vand.u32 2147483647, %v1641
        %v1770 = vand.u32 2147483647, %v1642
        %v1771 = vand.u32 2147483647, %v1643
        %v1772 = vand.u32 2147483647, %v1644
        %v1773 = vand.u32 2147483647, %v1645
        %v1774 = vand.u32 2147483647, %v1646
        %v1775 = vand.u32 2147483647, %v1647
        %v1776 = vand.u32 2147483647, %v1648
        %v1777 = vand.u32 2147483647, %v1649
        %v1778 = vand.u32 2147483647, %v1650
        %v1779 = vand.u32 2147483647, %v1651
        %v1780 = vand.u32 2147483647, %v1652
        %v1781 = vand.u32 2147483647, %v1653
        %v1782 = vand.u32 2147483647, %v1654
        %v1783 = vand.u32 2147483647, %v1655
        %v1784 = vand.u32 2147483647, %v1656
        %v1785 = vand.u32 2147483647, %v1657
        %v1786 = vand.u32 2147483647, %v1658
        %v1787 = vand.u32 2147483647, %v1659
        %v1788 = vand.u32 2147483647, %v1660
        %v1789 = vand.u32 2147483647, %v1661
        %v1790 = vand.u32 2147483647, %v1662
        %v1791 = vand.u32 2147483647, %v1663
        %v1792 = vand.u32 2147483647, %v1664
        %v1793 = vand.u32 2147483647, %v1665
        %v1794 = vand.u32 2147483647, %v1666
        %v1795 = vand.u32 2147483647, %v1667
        %v1796 = vand.u32 2147483647, %v1668
        %v1797 = vand.u32 2147483647, %v1669
        %v1798 = vand.u32 2147483647, %v1670
        %v1799 = vand.u32 2147483647, %v1671
        %v1800 = vand.u32 2147483647, %v1672
        %v1801 = vand.u32 2147483647, %v1673
        %v1802 = vand.u32 2147483647, %v1674
        %v1803 = vand.u32 2147483647, %v1675
        %v1804 = vand.u32 2147483647, %v1676
        %v1805 = vand.u32 2147483647, %v1677
        %v1806 = vand.u32 2147483647, %v1678
        %v1807 = vand.u32 2147483647, %v1679
        %v1808 = vand.u32 2147483647, %v1680
        %v1809 = vand.u32 2147483647, %v1681
        %v1810 = vand.u32 2147483647, %v1682
        %v1811 = vand.u32 2147483647, %v1683
        %v1812 = vand.u32 2147483647, %v1684
        %v1813 = vand.u32 2147483647, %v1685
        %v1814 = vand.u32 2147483647, %v1686
        %v1815 = vand.u32 2147483647, %v1687
        %v1816 = vand.u32 2147483647, %v1688
        %v1817 = vand.u32 2147483647, %v1689
        %v1818 = vand.u32 2147483647, %v1690
        %v1819 = vand.u32 2147483647, %v1691
        %v1820 = vand.u32 2147483647, %v1692
        %v1821 = vand.u32 2147483647, %v1693
        %v1822 = vand.u32 2147483647, %v1694
        %v1823 = vand.u32 2147483647, %v1695
        %v1824 = vand.u32 2147483647, %v1696
        %v1825 = vand.u32 2147483647, %v1697
        %v1826 = vand.u32 2147483647, %v1698
        %v1827 = vmul.f32 %v1699, 0.3275911
        %v1828 = vmul.f32 %v1700, 0.3275911
        %v1829 = vmul.f32 %v1701, 0.3275911
        %v1830 = vmul.f32 %v1702, 0.3275911
        %v1831 = vmul.f32 %v1703, 0.3275911
        %v1832 = vmul.f32 %v1704, 0.3275911
        %v1833 = vmul.f32 %v1705, 0.3275911
        %v1834 = vmul.f32 %v1706, 0.3275911
        %v1835 = vmul.f32 %v1707, 0.3275911
        %v1836 = vmul.f32 %v1708, 0.3275911
        %v1837 = vmul.f32 %v1709, 0.3275911
        %v1838 = vmul.f32 %v1710, 0.3275911
        %v1839 = vmul.f32 %v1711, 0.3275911
        %v1840 = vmul.f32 %v1712, 0.3275911
        %v1841 = vmul.f32 %v1713, 0.3275911
        %v1842 = vmul.f32 %v1714, 0.3275911
        %v1843 = vmul.f32 %v1715, 0.3275911
        %v1844 = vmul.f32 %v1716, 0.3275911
        %v1845 = vmul.f32 %v1717, 0.3275911
        %v1846 = vmul.f32 %v1718, 0.3275911
        %v1847 = vmul.f32 %v1719, 0.3275911
        %v1848 = vmul.f32 %v1720, 0.3275911
        %v1849 = vmul.f32 %v1721, 0.3275911
        %v1850 = vmul.f32 %v1722, 0.3275911
        %v1851 = vmul.f32 %v1723, 0.3275911
        %v1852 = vmul.f32 %v1724, 0.3275911
        %v1853 = vmul.f32 %v1725, 0.3275911
        %v1854 = vmul.f32 %v1726, 0.3275911
        %v1855 = vmul.f32 %v1727, 0.3275911
        %v1856 = vmul.f32 %v1728, 0.3275911
        %v1857 = vmul.f32 %v1729, 0.3275911
        %v1858 = vmul.f32 %v1730, 0.3275911
        %v1859 = vmul.f32 %v1731, 0.3275911
        %v1860 = vmul.f32 %v1732, 0.3275911
        %v1861 = vmul.f32 %v1733, 0.3275911
        %v1862 = vmul.f32 %v1734, 0.3275911
        %v1863 = vmul.f32 %v1735, 0.3275911
        %v1864 = vmul.f32 %v1736, 0.3275911
        %v1865 = vmul.f32 %v1737, 0.3275911
        %v1866 = vmul.f32 %v1738, 0.3275911
        %v1867 = vmul.f32 %v1739, 0.3275911
        %v1868 = vmul.f32 %v1740, 0.3275911
        %v1869 = vmul.f32 %v1741, 0.3275911
        %v1870 = vmul.f32 %v1742, 0.3275911
        %v1871 = vmul.f32 %v1743, 0.3275911
        %v1872 = vmul.f32 %v1744, 0.3275911
        %v1873 = vmul.f32 %v1745, 0.3275911
        %v1874 = vmul.f32 %v1746, 0.3275911
        %v1875 = vmul.f32 %v1747, 0.3275911
        %v1876 = vmul.f32 %v1748, 0.3275911
        %v1877 = vmul.f32 %v1749, 0.3275911
        %v1878 = vmul.f32 %v1750, 0.3275911
        %v1879 = vmul.f32 %v1751, 0.3275911
        %v1880 = vmul.f32 %v1752, 0.3275911
        %v1881 = vmul.f32 %v1753, 0.3275911
        %v1882 = vmul.f32 %v1754, 0.3275911
        %v1883 = vmul.f32 %v1755, 0.3275911
        %v1884 = vmul.f32 %v1756, 0.3275911
        %v1885 = vmul.f32 %v1757, 0.3275911
        %v1886 = vmul.f32 %v1758, 0.3275911
        %v1887 = vmul.f32 %v1759, 0.3275911
        %v1888 = vmul.f32 %v1760, 0.3275911
        %v1889 = vmul.f32 %v1761, 0.3275911
        %v1890 = vmul.f32 %v1762, 0.3275911
        %v1891 = vmul.f32 %v1763, 0.3275911
        %v1892 = vmul.f32 %v1764, 0.3275911
        %v1893 = vmul.f32 %v1765, 0.3275911
        %v1894 = vmul.f32 %v1766, 0.3275911
        %v1895 = vmul.f32 %v1767, 0.3275911
        %v1896 = vmul.f32 %v1768, 0.3275911
        %v1897 = vmul.f32 %v1769, 0.3275911
        %v1898 = vmul.f32 %v1770, 0.3275911
        %v1899 = vmul.f32 %v1771, 0.3275911
        %v1900 = vmul.f32 %v1772, 0.3275911
        %v1901 = vmul.f32 %v1773, 0.3275911
        %v1902 = vmul.f32 %v1774, 0.3275911
        %v1903 = vmul.f32 %v1775, 0.3275911
        %v1904 = vmul.f32 %v1776, 0.3275911
        %v1905 = vmul.f32 %v1777, 0.3275911
        %v1906 = vmul.f32 %v1778, 0.3275911
        %v1907 = vmul.f32 %v1779, 0.3275911
        %v1908 = vmul.f32 %v1780, 0.3275911
        %v1909 = vmul.f32 %v1781, 0.3275911
        %v1910 = vmul.f32 %v1782, 0.3275911
        %v1911 = vmul.f32 %v1783, 0.3275911
        %v1912 = vmul.f32 %v1784, 0.3275911
        %v1913 = vmul.f32 %v1785, 0.3275911
        %v1914 = vmul.f32 %v1786, 0.3275911
        %v1915 = vmul.f32 %v1787, 0.3275911
        %v1916 = vmul.f32 %v1788, 0.3275911
        %v1917 = vmul.f32 %v1789, 0.3275911
        %v1918 = vmul.f32 %v1790, 0.3275911
        %v1919 = vmul.f32 %v1791, 0.3275911
        %v1920 = vmul.f32 %v1792, 0.3275911
        %v1921 = vmul.f32 %v1793, 0.3275911
        %v1922 = vmul.f32 %v1794, 0.3275911
        %v1923 = vmul.f32 %v1795, 0.3275911
        %v1924 = vmul.f32 %v1796, 0.3275911
        %v1925 = vmul.f32 %v1797, 0.3275911
        %v1926 = vmul.f32 %v1798, 0.3275911
        %v1927 = vmul.f32 %v1799, 0.3275911
        %v1928 = vmul.f32 %v1800, 0.3275911
        %v1929 = vmul.f32 %v1801, 0.3275911
        %v1930 = vmul.f32 %v1802, 0.3275911
        %v1931 = vmul.f32 %v1803, 0.3275911
        %v1932 = vmul.f32 %v1804, 0.3275911
        %v1933 = vmul.f32 %v1805, 0.3275911
        %v1934 = vmul.f32 %v1806, 0.3275911
        %v1935 = vmul.f32 %v1807, 0.3275911
        %v1936 = vmul.f32 %v1808, 0.3275911
        %v1937 = vmul.f32 %v1809, 0.3275911
        %v1938 = vmul.f32 %v1810, 0.3275911
        %v1939 = vmul.f32 %v1811, 0.3275911
        %v1940 = vmul.f32 %v1812, 0.3275911
        %v1941 = vmul.f32 %v1813, 0.3275911
        %v1942 = vmul.f32 %v1814, 0.3275911
        %v1943 = vmul.f32 %v1815, 0.3275911
        %v1944 = vmul.f32 %v1816, 0.3275911
        %v1945 = vmul.f32 %v1817, 0.3275911
        %v1946 = vmul.f32 %v1818, 0.3275911
        %v1947 = vmul.f32 %v1819, 0.3275911
        %v1948 = vmul.f32 %v1820, 0.3275911
        %v1949 = vmul.f32 %v1821, 0.3275911
        %v1950 = vmul.f32 %v1822, 0.3275911
        %v1951 = vmul.f32 %v1823, 0.3275911
        %v1952 = vmul.f32 %v1824, 0.3275911
        %v1953 = vmul.f32 %v1825, 0.3275911
        %v1954 = vmul.f32 %v1826, 0.3275911
        %v1955 = vadd.f32 %v1827, 1.0
        %v1956 = vadd.f32 %v1828, 1.0
        %v1957 = vadd.f32 %v1829, 1.0
        %v1958 = vadd.f32 %v1830, 1.0
        %v1959 = vadd.f32 %v1831, 1.0
        %v1960 = vadd.f32 %v1832, 1.0
        %v1961 = vadd.f32 %v1833, 1.0
        %v1962 = vadd.f32 %v1834, 1.0
        %v1963 = vadd.f32 %v1835, 1.0
        %v1964 = vadd.f32 %v1836, 1.0
        %v1965 = vadd.f32 %v1837, 1.0
        %v1966 = vadd.f32 %v1838, 1.0
        %v1967 = vadd.f32 %v1839, 1.0
        %v1968 = vadd.f32 %v1840, 1.0
        %v1969 = vadd.f32 %v1841, 1.0
        %v1970 = vadd.f32 %v1842, 1.0
        %v1971 = vadd.f32 %v1843, 1.0
        %v1972 = vadd.f32 %v1844, 1.0
        %v1973 = vadd.f32 %v1845, 1.0
        %v1974 = vadd.f32 %v1846, 1.0
        %v1975 = vadd.f32 %v1847, 1.0
        %v1976 = vadd.f32 %v1848, 1.0
        %v1977 = vadd.f32 %v1849, 1.0
        %v1978 = vadd.f32 %v1850, 1.0
        %v1979 = vadd.f32 %v1851, 1.0
        %v1980 = vadd.f32 %v1852, 1.0
        %v1981 = vadd.f32 %v1853, 1.0
        %v1982 = vadd.f32 %v1854, 1.0
        %v1983 = vadd.f32 %v1855, 1.0
        %v1984 = vadd.f32 %v1856, 1.0
        %v1985 = vadd.f32 %v1857, 1.0
        %v1986 = vadd.f32 %v1858, 1.0
        %v1987 = vadd.f32 %v1859, 1.0
        %v1988 = vadd.f32 %v1860, 1.0
        %v1989 = vadd.f32 %v1861, 1.0
        %v1990 = vadd.f32 %v1862, 1.0
        %v1991 = vadd.f32 %v1863, 1.0
        %v1992 = vadd.f32 %v1864, 1.0
        %v1993 = vadd.f32 %v1865, 1.0
        %v1994 = vadd.f32 %v1866, 1.0
        %v1995 = vadd.f32 %v1867, 1.0
        %v1996 = vadd.f32 %v1868, 1.0
        %v1997 = vadd.f32 %v1869, 1.0
        %v1998 = vadd.f32 %v1870, 1.0
        %v1999 = vadd.f32 %v1871, 1.0
        %v2000 = vadd.f32 %v1872, 1.0
        %v2001 = vadd.f32 %v1873, 1.0
        %v2002 = vadd.f32 %v1874, 1.0
        %v2003 = vadd.f32 %v1875, 1.0
        %v2004 = vadd.f32 %v1876, 1.0
        %v2005 = vadd.f32 %v1877, 1.0
        %v2006 = vadd.f32 %v1878, 1.0
        %v2007 = vadd.f32 %v1879, 1.0
        %v2008 = vadd.f32 %v1880, 1.0
        %v2009 = vadd.f32 %v1881, 1.0
        %v2010 = vadd.f32 %v1882, 1.0
        %v2011 = vadd.f32 %v1883, 1.0
        %v2012 = vadd.f32 %v1884, 1.0
        %v2013 = vadd.f32 %v1885, 1.0
        %v2014 = vadd.f32 %v1886, 1.0
        %v2015 = vadd.f32 %v1887, 1.0
        %v2016 = vadd.f32 %v1888, 1.0
        %v2017 = vadd.f32 %v1889, 1.0
        %v2018 = vadd.f32 %v1890, 1.0
        %v2019 = vadd.f32 %v1891, 1.0
        %v2020 = vadd.f32 %v1892, 1.0
        %v2021 = vadd.f32 %v1893, 1.0
        %v2022 = vadd.f32 %v1894, 1.0
        %v2023 = vadd.f32 %v1895, 1.0
        %v2024 = vadd.f32 %v1896, 1.0
        %v2025 = vadd.f32 %v1897, 1.0
        %v2026 = vadd.f32 %v1898, 1.0
        %v2027 = vadd.f32 %v1899, 1.0
        %v2028 = vadd.f32 %v1900, 1.0
        %v2029 = vadd.f32 %v1901, 1.0
        %v2030 = vadd.f32 %v1902, 1.0
        %v2031 = vadd.f32 %v1903, 1.0
        %v2032 = vadd.f32 %v1904, 1.0
        %v2033 = vadd.f32 %v1905, 1.0
        %v2034 = vadd.f32 %v1906, 1.0
        %v2035 = vadd.f32 %v1907, 1.0
        %v2036 = vadd.f32 %v1908, 1.0
        %v2037 = vadd.f32 %v1909, 1.0
        %v2038 = vadd.f32 %v1910, 1.0
        %v2039 = vadd.f32 %v1911, 1.0
        %v2040 = vadd.f32 %v1912, 1.0
        %v2041 = vadd.f32 %v1913, 1.0
        %v2042 = vadd.f32 %v1914, 1.0
        %v2043 = vadd.f32 %v1915, 1.0
        %v2044 = vadd.f32 %v1916, 1.0
        %v2045 = vadd.f32 %v1917, 1.0
        %v2046 = vadd.f32 %v1918, 1.0
        %v2047 = vadd.f32 %v1919, 1.0
        %v2048 = vadd.f32 %v1920, 1.0
        %v2049 = vadd.f32 %v1921, 1.0
        %v2050 = vadd.f32 %v1922, 1.0
        %v2051 = vadd.f32 %v1923, 1.0
        %v2052 = vadd.f32 %v1924, 1.0
        %v2053 = vadd.f32 %v1925, 1.0
        %v2054 = vadd.f32 %v1926, 1.0
        %v2055 = vadd.f32 %v1927, 1.0
        %v2056 = vadd.f32 %v1928, 1.0
        %v2057 = vadd.f32 %v1929, 1.0
        %v2058 = vadd.f32 %v1930, 1.0
        %v2059 = vadd.f32 %v1931, 1.0
        %v2060 = vadd.f32 %v1932, 1.0
        %v2061 = vadd.f32 %v1933, 1.0
        %v2062 = vadd.f32 %v1934, 1.0
        %v2063 = vadd.f32 %v1935, 1.0
        %v2064 = vadd.f32 %v1936, 1.0
        %v2065 = vadd.f32 %v1937, 1.0
        %v2066 = vadd.f32 %v1938, 1.0
        %v2067 = vadd.f32 %v1939, 1.0
        %v2068 = vadd.f32 %v1940, 1.0
        %v2069 = vadd.f32 %v1941, 1.0
        %v2070 = vadd.f32 %v1942, 1.0
        %v2071 = vadd.f32 %v1943, 1.0
        %v2072 = vadd.f32 %v1944, 1.0
        %v2073 = vadd.f32 %v1945, 1.0
        %v2074 = vadd.f32 %v1946, 1.0
        %v2075 = vadd.f32 %v1947, 1.0
        %v2076 = vadd.f32 %v1948, 1.0
        %v2077 = vadd.f32 %v1949, 1.0
        %v2078 = vadd.f32 %v1950, 1.0
        %v2079 = vadd.f32 %v1951, 1.0
        %v2080 = vadd.f32 %v1952, 1.0
        %v2081 = vadd.f32 %v1953, 1.0
        %v2082 = vadd.f32 %v1954, 1.0
        %v2083 = vrcp.pop %v1955
        %v2084 = vmul.f32 1.0, %v2083
        %v2085 = vrcp.pop %v1956
        %v2086 = vmul.f32 1.0, %v2085
        %v2087 = vrcp.pop %v1957
        %v2088 = vmul.f32 1.0, %v2087
        %v2089 = vrcp.pop %v1958
        %v2090 = vmul.f32 1.0, %v2089
        %v2091 = vrcp.pop %v1959
        %v2092 = vmul.f32 1.0, %v2091
        %v2093 = vrcp.pop %v1960
        %v2094 = vmul.f32 1.0, %v2093
        %v2095 = vrcp.pop %v1961
        %v2096 = vmul.f32 1.0, %v2095
        %v2097 = vrcp.pop %v1962
        %v2098 = vmul.f32 1.0, %v2097
        %v2099 = vrcp.pop %v1963
        %v2100 = vmul.f32 1.0, %v2099
        %v2101 = vrcp.pop %v1964
        %v2102 = vmul.f32 1.0, %v2101
        %v2103 = vrcp.pop %v1965
        %v2104 = vmul.f32 1.0, %v2103
        %v2105 = vrcp.pop %v1966
        %v2106 = vmul.f32 1.0, %v2105
        %v2107 = vrcp.pop %v1967
        %v2108 = vmul.f32 1.0, %v2107
        %v2109 = vrcp.pop %v1968
        %v2110 = vmul.f32 1.0, %v2109
        %v2111 = vrcp.pop %v1969
        %v2112 = vmul.f32 1.0, %v2111
        %v2113 = vrcp.pop %v1970
        %v2114 = vmul.f32 1.0, %v2113
        %v2115 = vrcp.pop %v1971
        %v2116 = vmul.f32 1.0, %v2115
        %v2117 = vrcp.pop %v1972
        %v2118 = vmul.f32 1.0, %v2117
        %v2119 = vrcp.pop %v1973
        %v2120 = vmul.f32 1.0, %v2119
        %v2121 = vrcp.pop %v1974
        %v2122 = vmul.f32 1.0, %v2121
        %v2123 = vrcp.pop %v1975
        %v2124 = vmul.f32 1.0, %v2123
        %v2125 = vrcp.pop %v1976
        %v2126 = vmul.f32 1.0, %v2125
        %v2127 = vrcp.pop %v1977
        %v2128 = vmul.f32 1.0, %v2127
        %v2129 = vrcp.pop %v1978
        %v2130 = vmul.f32 1.0, %v2129
        %v2131 = vrcp.pop %v1979
        %v2132 = vmul.f32 1.0, %v2131
        %v2133 = vrcp.pop %v1980
        %v2134 = vmul.f32 1.0, %v2133
        %v2135 = vrcp.pop %v1981
        %v2136 = vmul.f32 1.0, %v2135
        %v2137 = vrcp.pop %v1982
        %v2138 = vmul.f32 1.0, %v2137
        %v2139 = vrcp.pop %v1983
        %v2140 = vmul.f32 1.0, %v2139
        %v2141 = vrcp.pop %v1984
        %v2142 = vmul.f32 1.0, %v2141
        %v2143 = vrcp.pop %v1985
        %v2144 = vmul.f32 1.0, %v2143
        %v2145 = vrcp.pop %v1986
        %v2146 = vmul.f32 1.0, %v2145
        %v2147 = vrcp.pop %v1987
        %v2148 = vmul.f32 1.0, %v2147
        %v2149 = vrcp.pop %v1988
        %v2150 = vmul.f32 1.0, %v2149
        %v2151 = vrcp.pop %v1989
        %v2152 = vmul.f32 1.0, %v2151
        %v2153 = vrcp.pop %v1990
        %v2154 = vmul.f32 1.0, %v2153
        %v2155 = vrcp.pop %v1991
        %v2156 = vmul.f32 1.0, %v2155
        %v2157 = vrcp.pop %v1992
        %v2158 = vmul.f32 1.0, %v2157
        %v2159 = vrcp.pop %v1993
        %v2160 = vmul.f32 1.0, %v2159
        %v2161 = vrcp.pop %v1994
        %v2162 = vmul.f32 1.0, %v2161
        %v2163 = vrcp.pop %v1995
        %v2164 = vmul.f32 1.0, %v2163
        %v2165 = vrcp.pop %v1996
        %v2166 = vmul.f32 1.0, %v2165
        %v2167 = vrcp.pop %v1997
        %v2168 = vmul.f32 1.0, %v2167
        %v2169 = vrcp.pop %v1998
        %v2170 = vmul.f32 1.0, %v2169
        %v2171 = vrcp.pop %v1999
        %v2172 = vmul.f32 1.0, %v2171
        %v2173 = vrcp.pop %v2000
        %v2174 = vmul.f32 1.0, %v2173
        %v2175 = vrcp.pop %v2001
        %v2176 = vmul.f32 1.0, %v2175
        %v2177 = vrcp.pop %v2002
        %v2178 = vmul.f32 1.0, %v2177
        %v2179 = vrcp.pop %v2003
        %v2180 = vmul.f32 1.0, %v2179
        %v2181 = vrcp.pop %v2004
        %v2182 = vmul.f32 1.0, %v2181
        %v2183 = vrcp.pop %v2005
        %v2184 = vmul.f32 1.0, %v2183
        %v2185 = vrcp.pop %v2006
        %v2186 = vmul.f32 1.0, %v2185
        %v2187 = vrcp.pop %v2007
        %v2188 = vmul.f32 1.0, %v2187
        %v2189 = vrcp.pop %v2008
        %v2190 = vmul.f32 1.0, %v2189
        %v2191 = vrcp.pop %v2009
        %v2192 = vmul.f32 1.0, %v2191
        %v2193 = vrcp.pop %v2010
        %v2194 = vmul.f32 1.0, %v2193
        %v2195 = vrcp.pop %v2011
        %v2196 = vmul.f32 1.0, %v2195
        %v2197 = vrcp.pop %v2012
        %v2198 = vmul.f32 1.0, %v2197
        %v2199 = vrcp.pop %v2013
        %v2200 = vmul.f32 1.0, %v2199
        %v2201 = vrcp.pop %v2014
        %v2202 = vmul.f32 1.0, %v2201
        %v2203 = vrcp.pop %v2015
        %v2204 = vmul.f32 1.0, %v2203
        %v2205 = vrcp.pop %v2016
        %v2206 = vmul.f32 1.0, %v2205
        %v2207 = vrcp.pop %v2017
        %v2208 = vmul.f32 1.0, %v2207
        %v2209 = vrcp.pop %v2018
        %v2210 = vmul.f32 1.0, %v2209
        %v2211 = vrcp.pop %v2019
        %v2212 = vmul.f32 1.0, %v2211
        %v2213 = vrcp.pop %v2020
        %v2214 = vmul.f32 1.0, %v2213
        %v2215 = vrcp.pop %v2021
        %v2216 = vmul.f32 1.0, %v2215
        %v2217 = vrcp.pop %v2022
        %v2218 = vmul.f32 1.0, %v2217
        %v2219 = vrcp.pop %v2023
        %v2220 = vmul.f32 1.0, %v2219
        %v2221 = vrcp.pop %v2024
        %v2222 = vmul.f32 1.0, %v2221
        %v2223 = vrcp.pop %v2025
        %v2224 = vmul.f32 1.0, %v2223
        %v2225 = vrcp.pop %v2026
        %v2226 = vmul.f32 1.0, %v2225
        %v2227 = vrcp.pop %v2027
        %v2228 = vmul.f32 1.0, %v2227
        %v2229 = vrcp.pop %v2028
        %v2230 = vmul.f32 1.0, %v2229
        %v2231 = vrcp.pop %v2029
        %v2232 = vmul.f32 1.0, %v2231
        %v2233 = vrcp.pop %v2030
        %v2234 = vmul.f32 1.0, %v2233
        %v2235 = vrcp.pop %v2031
        %v2236 = vmul.f32 1.0, %v2235
        %v2237 = vrcp.pop %v2032
        %v2238 = vmul.f32 1.0, %v2237
        %v2239 = vrcp.pop %v2033
        %v2240 = vmul.f32 1.0, %v2239
        %v2241 = vrcp.pop %v2034
        %v2242 = vmul.f32 1.0, %v2241
        %v2243 = vrcp.pop %v2035
        %v2244 = vmul.f32 1.0, %v2243
        %v2245 = vrcp.pop %v2036
        %v2246 = vmul.f32 1.0, %v2245
        %v2247 = vrcp.pop %v2037
        %v2248 = vmul.f32 1.0, %v2247
        %v2249 = vrcp.pop %v2038
        %v2250 = vmul.f32 1.0, %v2249
        %v2251 = vrcp.pop %v2039
        %v2252 = vmul.f32 1.0, %v2251
        %v2253 = vrcp.pop %v2040
        %v2254 = vmul.f32 1.0, %v2253
        %v2255 = vrcp.pop %v2041
        %v2256 = vmul.f32 1.0, %v2255
        %v2257 = vrcp.pop %v2042
        %v2258 = vmul.f32 1.0, %v2257
        %v2259 = vrcp.pop %v2043
        %v2260 = vmul.f32 1.0, %v2259
        %v2261 = vrcp.pop %v2044
        %v2262 = vmul.f32 1.0, %v2261
        %v2263 = vrcp.pop %v2045
        %v2264 = vmul.f32 1.0, %v2263
        %v2265 = vrcp.pop %v2046
        %v2266 = vmul.f32 1.0, %v2265
        %v2267 = vrcp.pop %v2047
        %v2268 = vmul.f32 1.0, %v2267
        %v2269 = vrcp.pop %v2048
        %v2270 = vmul.f32 1.0, %v2269
        %v2271 = vrcp.pop %v2049
        %v2272 = vmul.f32 1.0, %v2271
        %v2273 = vrcp.pop %v2050
        %v2274 = vmul.f32 1.0, %v2273
        %v2275 = vrcp.pop %v2051
        %v2276 = vmul.f32 1.0, %v2275
        %v2277 = vrcp.pop %v2052
        %v2278 = vmul.f32 1.0, %v2277
        %v2279 = vrcp.pop %v2053
        %v2280 = vmul.f32 1.0, %v2279
        %v2281 = vrcp.pop %v2054
        %v2282 = vmul.f32 1.0, %v2281
        %v2283 = vrcp.pop %v2055
        %v2284 = vmul.f32 1.0, %v2283
        %v2285 = vrcp.pop %v2056
        %v2286 = vmul.f32 1.0, %v2285
        %v2287 = vrcp.pop %v2057
        %v2288 = vmul.f32 1.0, %v2287
        %v2289 = vrcp.pop %v2058
        %v2290 = vmul.f32 1.0, %v2289
        %v2291 = vrcp.pop %v2059
        %v2292 = vmul.f32 1.0, %v2291
        %v2293 = vrcp.pop %v2060
        %v2294 = vmul.f32 1.0, %v2293
        %v2295 = vrcp.pop %v2061
        %v2296 = vmul.f32 1.0, %v2295
        %v2297 = vrcp.pop %v2062
        %v2298 = vmul.f32 1.0, %v2297
        %v2299 = vrcp.pop %v2063
        %v2300 = vmul.f32 1.0, %v2299
        %v2301 = vrcp.pop %v2064
        %v2302 = vmul.f32 1.0, %v2301
        %v2303 = vrcp.pop %v2065
        %v2304 = vmul.f32 1.0, %v2303
        %v2305 = vrcp.pop %v2066
        %v2306 = vmul.f32 1.0, %v2305
        %v2307 = vrcp.pop %v2067
        %v2308 = vmul.f32 1.0, %v2307
        %v2309 = vrcp.pop %v2068
        %v2310 = vmul.f32 1.0, %v2309
        %v2311 = vrcp.pop %v2069
        %v2312 = vmul.f32 1.0, %v2311
        %v2313 = vrcp.pop %v2070
        %v2314 = vmul.f32 1.0, %v2313
        %v2315 = vrcp.pop %v2071
        %v2316 = vmul.f32 1.0, %v2315
        %v2317 = vrcp.pop %v2072
        %v2318 = vmul.f32 1.0, %v2317
        %v2319 = vrcp.pop %v2073
        %v2320 = vmul.f32 1.0, %v2319
        %v2321 = vrcp.pop %v2074
        %v2322 = vmul.f32 1.0, %v2321
        %v2323 = vrcp.pop %v2075
        %v2324 = vmul.f32 1.0, %v2323
        %v2325 = vrcp.pop %v2076
        %v2326 = vmul.f32 1.0, %v2325
        %v2327 = vrcp.pop %v2077
        %v2328 = vmul.f32 1.0, %v2327
        %v2329 = vrcp.pop %v2078
        %v2330 = vmul.f32 1.0, %v2329
        %v2331 = vrcp.pop %v2079
        %v2332 = vmul.f32 1.0, %v2331
        %v2333 = vrcp.pop %v2080
        %v2334 = vmul.f32 1.0, %v2333
        %v2335 = vrcp.pop %v2081
        %v2336 = vmul.f32 1.0, %v2335
        %v2337 = vrcp.pop %v2082
        %v2338 = vmul.f32 1.0, %v2337
        %v2339 = vmul.f32 %v2084, 1.0614054
        %v2340 = vmul.f32 %v2086, 1.0614054
        %v2341 = vmul.f32 %v2088, 1.0614054
        %v2342 = vmul.f32 %v2090, 1.0614054
        %v2343 = vmul.f32 %v2092, 1.0614054
        %v2344 = vmul.f32 %v2094, 1.0614054
        %v2345 = vmul.f32 %v2096, 1.0614054
        %v2346 = vmul.f32 %v2098, 1.0614054
        %v2347 = vmul.f32 %v2100, 1.0614054
        %v2348 = vmul.f32 %v2102, 1.0614054
        %v2349 = vmul.f32 %v2104, 1.0614054
        %v2350 = vmul.f32 %v2106, 1.0614054
        %v2351 = vmul.f32 %v2108, 1.0614054
        %v2352 = vmul.f32 %v2110, 1.0614054
        %v2353 = vmul.f32 %v2112, 1.0614054
        %v2354 = vmul.f32 %v2114, 1.0614054
        %v2355 = vmul.f32 %v2116, 1.0614054
        %v2356 = vmul.f32 %v2118, 1.0614054
        %v2357 = vmul.f32 %v2120, 1.0614054
        %v2358 = vmul.f32 %v2122, 1.0614054
        %v2359 = vmul.f32 %v2124, 1.0614054
        %v2360 = vmul.f32 %v2126, 1.0614054
        %v2361 = vmul.f32 %v2128, 1.0614054
        %v2362 = vmul.f32 %v2130, 1.0614054
        %v2363 = vmul.f32 %v2132, 1.0614054
        %v2364 = vmul.f32 %v2134, 1.0614054
        %v2365 = vmul.f32 %v2136, 1.0614054
        %v2366 = vmul.f32 %v2138, 1.0614054
        %v2367 = vmul.f32 %v2140, 1.0614054
        %v2368 = vmul.f32 %v2142, 1.0614054
        %v2369 = vmul.f32 %v2144, 1.0614054
        %v2370 = vmul.f32 %v2146, 1.0614054
        %v2371 = vmul.f32 %v2148, 1.0614054
        %v2372 = vmul.f32 %v2150, 1.0614054
        %v2373 = vmul.f32 %v2152, 1.0614054
        %v2374 = vmul.f32 %v2154, 1.0614054
        %v2375 = vmul.f32 %v2156, 1.0614054
        %v2376 = vmul.f32 %v2158, 1.0614054
        %v2377 = vmul.f32 %v2160, 1.0614054
        %v2378 = vmul.f32 %v2162, 1.0614054
        %v2379 = vmul.f32 %v2164, 1.0614054
        %v2380 = vmul.f32 %v2166, 1.0614054
        %v2381 = vmul.f32 %v2168, 1.0614054
        %v2382 = vmul.f32 %v2170, 1.0614054
        %v2383 = vmul.f32 %v2172, 1.0614054
        %v2384 = vmul.f32 %v2174, 1.0614054
        %v2385 = vmul.f32 %v2176, 1.0614054
        %v2386 = vmul.f32 %v2178, 1.0614054
        %v2387 = vmul.f32 %v2180, 1.0614054
        %v2388 = vmul.f32 %v2182, 1.0614054
        %v2389 = vmul.f32 %v2184, 1.0614054
        %v2390 = vmul.f32 %v2186, 1.0614054
        %v2391 = vmul.f32 %v2188, 1.0614054
        %v2392 = vmul.f32 %v2190, 1.0614054
        %v2393 = vmul.f32 %v2192, 1.0614054
        %v2394 = vmul.f32 %v2194, 1.0614054
        %v2395 = vmul.f32 %v2196, 1.0614054
        %v2396 = vmul.f32 %v2198, 1.0614054
        %v2397 = vmul.f32 %v2200, 1.0614054
        %v2398 = vmul.f32 %v2202, 1.0614054
        %v2399 = vmul.f32 %v2204, 1.0614054
        %v2400 = vmul.f32 %v2206, 1.0614054
        %v2401 = vmul.f32 %v2208, 1.0614054
        %v2402 = vmul.f32 %v2210, 1.0614054
        %v2403 = vmul.f32 %v2212, 1.0614054
        %v2404 = vmul.f32 %v2214, 1.0614054
        %v2405 = vmul.f32 %v2216, 1.0614054
        %v2406 = vmul.f32 %v2218, 1.0614054
        %v2407 = vmul.f32 %v2220, 1.0614054
        %v2408 = vmul.f32 %v2222, 1.0614054
        %v2409 = vmul.f32 %v2224, 1.0614054
        %v2410 = vmul.f32 %v2226, 1.0614054
        %v2411 = vmul.f32 %v2228, 1.0614054
        %v2412 = vmul.f32 %v2230, 1.0614054
        %v2413 = vmul.f32 %v2232, 1.0614054
        %v2414 = vmul.f32 %v2234, 1.0614054
        %v2415 = vmul.f32 %v2236, 1.0614054
        %v2416 = vmul.f32 %v2238, 1.0614054
        %v2417 = vmul.f32 %v2240, 1.0614054
        %v2418 = vmul.f32 %v2242, 1.0614054
        %v2419 = vmul.f32 %v2244, 1.0614054
        %v2420 = vmul.f32 %v2246, 1.0614054
        %v2421 = vmul.f32 %v2248, 1.0614054
        %v2422 = vmul.f32 %v2250, 1.0614054
        %v2423 = vmul.f32 %v2252, 1.0614054
        %v2424 = vmul.f32 %v2254, 1.0614054
        %v2425 = vmul.f32 %v2256, 1.0614054
        %v2426 = vmul.f32 %v2258, 1.0614054
        %v2427 = vmul.f32 %v2260, 1.0614054
        %v2428 = vmul.f32 %v2262, 1.0614054
        %v2429 = vmul.f32 %v2264, 1.0614054
        %v2430 = vmul.f32 %v2266, 1.0614054
        %v2431 = vmul.f32 %v2268, 1.0614054
        %v2432 = vmul.f32 %v2270, 1.0614054
        %v2433 = vmul.f32 %v2272, 1.0614054
        %v2434 = vmul.f32 %v2274, 1.0614054
        %v2435 = vmul.f32 %v2276, 1.0614054
        %v2436 = vmul.f32 %v2278, 1.0614054
        %v2437 = vmul.f32 %v2280, 1.0614054
        %v2438 = vmul.f32 %v2282, 1.0614054
        %v2439 = vmul.f32 %v2284, 1.0614054
        %v2440 = vmul.f32 %v2286, 1.0614054
        %v2441 = vmul.f32 %v2288, 1.0614054
        %v2442 = vmul.f32 %v2290, 1.0614054
        %v2443 = vmul.f32 %v2292, 1.0614054
        %v2444 = vmul.f32 %v2294, 1.0614054
        %v2445 = vmul.f32 %v2296, 1.0614054
        %v2446 = vmul.f32 %v2298, 1.0614054
        %v2447 = vmul.f32 %v2300, 1.0614054
        %v2448 = vmul.f32 %v2302, 1.0614054
        %v2449 = vmul.f32 %v2304, 1.0614054
        %v2450 = vmul.f32 %v2306, 1.0614054
        %v2451 = vmul.f32 %v2308, 1.0614054
        %v2452 = vmul.f32 %v2310, 1.0614054
        %v2453 = vmul.f32 %v2312, 1.0614054
        %v2454 = vmul.f32 %v2314, 1.0614054
        %v2455 = vmul.f32 %v2316, 1.0614054
        %v2456 = vmul.f32 %v2318, 1.0614054
        %v2457 = vmul.f32 %v2320, 1.0614054
        %v2458 = vmul.f32 %v2322, 1.0614054
        %v2459 = vmul.f32 %v2324, 1.0614054
        %v2460 = vmul.f32 %v2326, 1.0614054
        %v2461 = vmul.f32 %v2328, 1.0614054
        %v2462 = vmul.f32 %v2330, 1.0614054
        %v2463 = vmul.f32 %v2332, 1.0614054
        %v2464 = vmul.f32 %v2334, 1.0614054
        %v2465 = vmul.f32 %v2336, 1.0614054
        %v2466 = vmul.f32 %v2338, 1.0614054
        %v2467 = vadd.f32 %v2339, -1.4531521
        %v2468 = vadd.f32 %v2340, -1.4531521
        %v2469 = vadd.f32 %v2341, -1.4531521
        %v2470 = vadd.f32 %v2342, -1.4531521
        %v2471 = vadd.f32 %v2343, -1.4531521
        %v2472 = vadd.f32 %v2344, -1.4531521
        %v2473 = vadd.f32 %v2345, -1.4531521
        %v2474 = vadd.f32 %v2346, -1.4531521
        %v2475 = vadd.f32 %v2347, -1.4531521
        %v2476 = vadd.f32 %v2348, -1.4531521
        %v2477 = vadd.f32 %v2349, -1.4531521
        %v2478 = vadd.f32 %v2350, -1.4531521
        %v2479 = vadd.f32 %v2351, -1.4531521
        %v2480 = vadd.f32 %v2352, -1.4531521
        %v2481 = vadd.f32 %v2353, -1.4531521
        %v2482 = vadd.f32 %v2354, -1.4531521
        %v2483 = vadd.f32 %v2355, -1.4531521
        %v2484 = vadd.f32 %v2356, -1.4531521
        %v2485 = vadd.f32 %v2357, -1.4531521
        %v2486 = vadd.f32 %v2358, -1.4531521
        %v2487 = vadd.f32 %v2359, -1.4531521
        %v2488 = vadd.f32 %v2360, -1.4531521
        %v2489 = vadd.f32 %v2361, -1.4531521
        %v2490 = vadd.f32 %v2362, -1.4531521
        %v2491 = vadd.f32 %v2363, -1.4531521
        %v2492 = vadd.f32 %v2364, -1.4531521
        %v2493 = vadd.f32 %v2365, -1.4531521
        %v2494 = vadd.f32 %v2366, -1.4531521
        %v2495 = vadd.f32 %v2367, -1.4531521
        %v2496 = vadd.f32 %v2368, -1.4531521
        %v2497 = vadd.f32 %v2369, -1.4531521
        %v2498 = vadd.f32 %v2370, -1.4531521
        %v2499 = vadd.f32 %v2371, -1.4531521
        %v2500 = vadd.f32 %v2372, -1.4531521
        %v2501 = vadd.f32 %v2373, -1.4531521
        %v2502 = vadd.f32 %v2374, -1.4531521
        %v2503 = vadd.f32 %v2375, -1.4531521
        %v2504 = vadd.f32 %v2376, -1.4531521
        %v2505 = vadd.f32 %v2377, -1.4531521
        %v2506 = vadd.f32 %v2378, -1.4531521
        %v2507 = vadd.f32 %v2379, -1.4531521
        %v2508 = vadd.f32 %v2380, -1.4531521
        %v2509 = vadd.f32 %v2381, -1.4531521
        %v2510 = vadd.f32 %v2382, -1.4531521
        %v2511 = vadd.f32 %v2383, -1.4531521
        %v2512 = vadd.f32 %v2384, -1.4531521
        %v2513 = vadd.f32 %v2385, -1.4531521
        %v2514 = vadd.f32 %v2386, -1.4531521
        %v2515 = vadd.f32 %v2387, -1.4531521
        %v2516 = vadd.f32 %v2388, -1.4531521
        %v2517 = vadd.f32 %v2389, -1.4531521
        %v2518 = vadd.f32 %v2390, -1.4531521
        %v2519 = vadd.f32 %v2391, -1.4531521
        %v2520 = vadd.f32 %v2392, -1.4531521
        %v2521 = vadd.f32 %v2393, -1.4531521
        %v2522 = vadd.f32 %v2394, -1.4531521
        %v2523 = vadd.f32 %v2395, -1.4531521
        %v2524 = vadd.f32 %v2396, -1.4531521
        %v2525 = vadd.f32 %v2397, -1.4531521
        %v2526 = vadd.f32 %v2398, -1.4531521
        %v2527 = vadd.f32 %v2399, -1.4531521
        %v2528 = vadd.f32 %v2400, -1.4531521
        %v2529 = vadd.f32 %v2401, -1.4531521
        %v2530 = vadd.f32 %v2402, -1.4531521
        %v2531 = vadd.f32 %v2403, -1.4531521
        %v2532 = vadd.f32 %v2404, -1.4531521
        %v2533 = vadd.f32 %v2405, -1.4531521
        %v2534 = vadd.f32 %v2406, -1.4531521
        %v2535 = vadd.f32 %v2407, -1.4531521
        %v2536 = vadd.f32 %v2408, -1.4531521
        %v2537 = vadd.f32 %v2409, -1.4531521
        %v2538 = vadd.f32 %v2410, -1.4531521
        %v2539 = vadd.f32 %v2411, -1.4531521
        %v2540 = vadd.f32 %v2412, -1.4531521
        %v2541 = vadd.f32 %v2413, -1.4531521
        %v2542 = vadd.f32 %v2414, -1.4531521
        %v2543 = vadd.f32 %v2415, -1.4531521
        %v2544 = vadd.f32 %v2416, -1.4531521
        %v2545 = vadd.f32 %v2417, -1.4531521
        %v2546 = vadd.f32 %v2418, -1.4531521
        %v2547 = vadd.f32 %v2419, -1.4531521
        %v2548 = vadd.f32 %v2420, -1.4531521
        %v2549 = vadd.f32 %v2421, -1.4531521
        %v2550 = vadd.f32 %v2422, -1.4531521
        %v2551 = vadd.f32 %v2423, -1.4531521
        %v2552 = vadd.f32 %v2424, -1.4531521
        %v2553 = vadd.f32 %v2425, -1.4531521
        %v2554 = vadd.f32 %v2426, -1.4531521
        %v2555 = vadd.f32 %v2427, -1.4531521
        %v2556 = vadd.f32 %v2428, -1.4531521
        %v2557 = vadd.f32 %v2429, -1.4531521
        %v2558 = vadd.f32 %v2430, -1.4531521
        %v2559 = vadd.f32 %v2431, -1.4531521
        %v2560 = vadd.f32 %v2432, -1.4531521
        %v2561 = vadd.f32 %v2433, -1.4531521
        %v2562 = vadd.f32 %v2434, -1.4531521
        %v2563 = vadd.f32 %v2435, -1.4531521
        %v2564 = vadd.f32 %v2436, -1.4531521
        %v2565 = vadd.f32 %v2437, -1.4531521
        %v2566 = vadd.f32 %v2438, -1.4531521
        %v2567 = vadd.f32 %v2439, -1.4531521
        %v2568 = vadd.f32 %v2440, -1.4531521
        %v2569 = vadd.f32 %v2441, -1.4531521
        %v2570 = vadd.f32 %v2442, -1.4531521
        %v2571 = vadd.f32 %v2443, -1.4531521
        %v2572 = vadd.f32 %v2444, -1.4531521
        %v2573 = vadd.f32 %v2445, -1.4531521
        %v2574 = vadd.f32 %v2446, -1.4531521
        %v2575 = vadd.f32 %v2447, -1.4531521
        %v2576 = vadd.f32 %v2448, -1.4531521
        %v2577 = vadd.f32 %v2449, -1.4531521
        %v2578 = vadd.f32 %v2450, -1.4531521
        %v2579 = vadd.f32 %v2451, -1.4531521
        %v2580 = vadd.f32 %v2452, -1.4531521
        %v2581 = vadd.f32 %v2453, -1.4531521
        %v2582 = vadd.f32 %v2454, -1.4531521
        %v2583 = vadd.f32 %v2455, -1.4531521
        %v2584 = vadd.f32 %v2456, -1.4531521
        %v2585 = vadd.f32 %v2457, -1.4531521
        %v2586 = vadd.f32 %v2458, -1.4531521
        %v2587 = vadd.f32 %v2459, -1.4531521
        %v2588 = vadd.f32 %v2460, -1.4531521
        %v2589 = vadd.f32 %v2461, -1.4531521
        %v2590 = vadd.f32 %v2462, -1.4531521
        %v2591 = vadd.f32 %v2463, -1.4531521
        %v2592 = vadd.f32 %v2464, -1.4531521
        %v2593 = vadd.f32 %v2465, -1.4531521
        %v2594 = vadd.f32 %v2466, -1.4531521
        %v2595 = vmul.f32 %v2467, %v2084
        %v2596 = vmul.f32 %v2468, %v2086
        %v2597 = vmul.f32 %v2469, %v2088
        %v2598 = vmul.f32 %v2470, %v2090
        %v2599 = vmul.f32 %v2471, %v2092
        %v2600 = vmul.f32 %v2472, %v2094
        %v2601 = vmul.f32 %v2473, %v2096
        %v2602 = vmul.f32 %v2474, %v2098
        %v2603 = vmul.f32 %v2475, %v2100
        %v2604 = vmul.f32 %v2476, %v2102
        %v2605 = vmul.f32 %v2477, %v2104
        %v2606 = vmul.f32 %v2478, %v2106
        %v2607 = vmul.f32 %v2479, %v2108
        %v2608 = vmul.f32 %v2480, %v2110
        %v2609 = vmul.f32 %v2481, %v2112
        %v2610 = vmul.f32 %v2482, %v2114
        %v2611 = vmul.f32 %v2483, %v2116
        %v2612 = vmul.f32 %v2484, %v2118
        %v2613 = vmul.f32 %v2485, %v2120
        %v2614 = vmul.f32 %v2486, %v2122
        %v2615 = vmul.f32 %v2487, %v2124
        %v2616 = vmul.f32 %v2488, %v2126
        %v2617 = vmul.f32 %v2489, %v2128
        %v2618 = vmul.f32 %v2490, %v2130
        %v2619 = vmul.f32 %v2491, %v2132
        %v2620 = vmul.f32 %v2492, %v2134
        %v2621 = vmul.f32 %v2493, %v2136
        %v2622 = vmul.f32 %v2494, %v2138
        %v2623 = vmul.f32 %v2495, %v2140
        %v2624 = vmul.f32 %v2496, %v2142
        %v2625 = vmul.f32 %v2497, %v2144
        %v2626 = vmul.f32 %v2498, %v2146
        %v2627 = vmul.f32 %v2499, %v2148
        %v2628 = vmul.f32 %v2500, %v2150
        %v2629 = vmul.f32 %v2501, %v2152
        %v2630 = vmul.f32 %v2502, %v2154
        %v2631 = vmul.f32 %v2503, %v2156
        %v2632 = vmul.f32 %v2504, %v2158
        %v2633 = vmul.f32 %v2505, %v2160
        %v2634 = vmul.f32 %v2506, %v2162
        %v2635 = vmul.f32 %v2507, %v2164
        %v2636 = vmul.f32 %v2508, %v2166
        %v2637 = vmul.f32 %v2509, %v2168
        %v2638 = vmul.f32 %v2510, %v2170
        %v2639 = vmul.f32 %v2511, %v2172
        %v2640 = vmul.f32 %v2512, %v2174
        %v2641 = vmul.f32 %v2513, %v2176
        %v2642 = vmul.f32 %v2514, %v2178
        %v2643 = vmul.f32 %v2515, %v2180
        %v2644 = vmul.f32 %v2516, %v2182
        %v2645 = vmul.f32 %v2517, %v2184
        %v2646 = vmul.f32 %v2518, %v2186
        %v2647 = vmul.f32 %v2519, %v2188
        %v2648 = vmul.f32 %v2520, %v2190
        %v2649 = vmul.f32 %v2521, %v2192
        %v2650 = vmul.f32 %v2522, %v2194
        %v2651 = vmul.f32 %v2523, %v2196
        %v2652 = vmul.f32 %v2524, %v2198
        %v2653 = vmul.f32 %v2525, %v2200
        %v2654 = vmul.f32 %v2526, %v2202
        %v2655 = vmul.f32 %v2527, %v2204
        %v2656 = vmul.f32 %v2528, %v2206
        %v2657 = vmul.f32 %v2529, %v2208
        %v2658 = vmul.f32 %v2530, %v2210
        %v2659 = vmul.f32 %v2531, %v2212
        %v2660 = vmul.f32 %v2532, %v2214
        %v2661 = vmul.f32 %v2533, %v2216
        %v2662 = vmul.f32 %v2534, %v2218
        %v2663 = vmul.f32 %v2535, %v2220
        %v2664 = vmul.f32 %v2536, %v2222
        %v2665 = vmul.f32 %v2537, %v2224
        %v2666 = vmul.f32 %v2538, %v2226
        %v2667 = vmul.f32 %v2539, %v2228
        %v2668 = vmul.f32 %v2540, %v2230
        %v2669 = vmul.f32 %v2541, %v2232
        %v2670 = vmul.f32 %v2542, %v2234
        %v2671 = vmul.f32 %v2543, %v2236
        %v2672 = vmul.f32 %v2544, %v2238
        %v2673 = vmul.f32 %v2545, %v2240
        %v2674 = vmul.f32 %v2546, %v2242
        %v2675 = vmul.f32 %v2547, %v2244
        %v2676 = vmul.f32 %v2548, %v2246
        %v2677 = vmul.f32 %v2549, %v2248
        %v2678 = vmul.f32 %v2550, %v2250
        %v2679 = vmul.f32 %v2551, %v2252
        %v2680 = vmul.f32 %v2552, %v2254
        %v2681 = vmul.f32 %v2553, %v2256
        %v2682 = vmul.f32 %v2554, %v2258
        %v2683 = vmul.f32 %v2555, %v2260
        %v2684 = vmul.f32 %v2556, %v2262
        %v2685 = vmul.f32 %v2557, %v2264
        %v2686 = vmul.f32 %v2558, %v2266
        %v2687 = vmul.f32 %v2559, %v2268
        %v2688 = vmul.f32 %v2560, %v2270
        %v2689 = vmul.f32 %v2561, %v2272
        %v2690 = vmul.f32 %v2562, %v2274
        %v2691 = vmul.f32 %v2563, %v2276
        %v2692 = vmul.f32 %v2564, %v2278
        %v2693 = vmul.f32 %v2565, %v2280
        %v2694 = vmul.f32 %v2566, %v2282
        %v2695 = vmul.f32 %v2567, %v2284
        %v2696 = vmul.f32 %v2568, %v2286
        %v2697 = vmul.f32 %v2569, %v2288
        %v2698 = vmul.f32 %v2570, %v2290
        %v2699 = vmul.f32 %v2571, %v2292
        %v2700 = vmul.f32 %v2572, %v2294
        %v2701 = vmul.f32 %v2573, %v2296
        %v2702 = vmul.f32 %v2574, %v2298
        %v2703 = vmul.f32 %v2575, %v2300
        %v2704 = vmul.f32 %v2576, %v2302
        %v2705 = vmul.f32 %v2577, %v2304
        %v2706 = vmul.f32 %v2578, %v2306
        %v2707 = vmul.f32 %v2579, %v2308
        %v2708 = vmul.f32 %v2580, %v2310
        %v2709 = vmul.f32 %v2581, %v2312
        %v2710 = vmul.f32 %v2582, %v2314
        %v2711 = vmul.f32 %v2583, %v2316
        %v2712 = vmul.f32 %v2584, %v2318
        %v2713 = vmul.f32 %v2585, %v2320
        %v2714 = vmul.f32 %v2586, %v2322
        %v2715 = vmul.f32 %v2587, %v2324
        %v2716 = vmul.f32 %v2588, %v2326
        %v2717 = vmul.f32 %v2589, %v2328
        %v2718 = vmul.f32 %v2590, %v2330
        %v2719 = vmul.f32 %v2591, %v2332
        %v2720 = vmul.f32 %v2592, %v2334
        %v2721 = vmul.f32 %v2593, %v2336
        %v2722 = vmul.f32 %v2594, %v2338
        %v2723 = vadd.f32 %v2595, 1.4214138
        %v2724 = vadd.f32 %v2596, 1.4214138
        %v2725 = vadd.f32 %v2597, 1.4214138
        %v2726 = vadd.f32 %v2598, 1.4214138
        %v2727 = vadd.f32 %v2599, 1.4214138
        %v2728 = vadd.f32 %v2600, 1.4214138
        %v2729 = vadd.f32 %v2601, 1.4214138
        %v2730 = vadd.f32 %v2602, 1.4214138
        %v2731 = vadd.f32 %v2603, 1.4214138
        %v2732 = vadd.f32 %v2604, 1.4214138
        %v2733 = vadd.f32 %v2605, 1.4214138
        %v2734 = vadd.f32 %v2606, 1.4214138
        %v2735 = vadd.f32 %v2607, 1.4214138
        %v2736 = vadd.f32 %v2608, 1.4214138
        %v2737 = vadd.f32 %v2609, 1.4214138
        %v2738 = vadd.f32 %v2610, 1.4214138
        %v2739 = vadd.f32 %v2611, 1.4214138
        %v2740 = vadd.f32 %v2612, 1.4214138
        %v2741 = vadd.f32 %v2613, 1.4214138
        %v2742 = vadd.f32 %v2614, 1.4214138
        %v2743 = vadd.f32 %v2615, 1.4214138
        %v2744 = vadd.f32 %v2616, 1.4214138
        %v2745 = vadd.f32 %v2617, 1.4214138
        %v2746 = vadd.f32 %v2618, 1.4214138
        %v2747 = vadd.f32 %v2619, 1.4214138
        %v2748 = vadd.f32 %v2620, 1.4214138
        %v2749 = vadd.f32 %v2621, 1.4214138
        %v2750 = vadd.f32 %v2622, 1.4214138
        %v2751 = vadd.f32 %v2623, 1.4214138
        %v2752 = vadd.f32 %v2624, 1.4214138
        %v2753 = vadd.f32 %v2625, 1.4214138
        %v2754 = vadd.f32 %v2626, 1.4214138
        %v2755 = vadd.f32 %v2627, 1.4214138
        %v2756 = vadd.f32 %v2628, 1.4214138
        %v2757 = vadd.f32 %v2629, 1.4214138
        %v2758 = vadd.f32 %v2630, 1.4214138
        %v2759 = vadd.f32 %v2631, 1.4214138
        %v2760 = vadd.f32 %v2632, 1.4214138
        %v2761 = vadd.f32 %v2633, 1.4214138
        %v2762 = vadd.f32 %v2634, 1.4214138
        %v2763 = vadd.f32 %v2635, 1.4214138
        %v2764 = vadd.f32 %v2636, 1.4214138
        %v2765 = vadd.f32 %v2637, 1.4214138
        %v2766 = vadd.f32 %v2638, 1.4214138
        %v2767 = vadd.f32 %v2639, 1.4214138
        %v2768 = vadd.f32 %v2640, 1.4214138
        %v2769 = vadd.f32 %v2641, 1.4214138
        %v2770 = vadd.f32 %v2642, 1.4214138
        %v2771 = vadd.f32 %v2643, 1.4214138
        %v2772 = vadd.f32 %v2644, 1.4214138
        %v2773 = vadd.f32 %v2645, 1.4214138
        %v2774 = vadd.f32 %v2646, 1.4214138
        %v2775 = vadd.f32 %v2647, 1.4214138
        %v2776 = vadd.f32 %v2648, 1.4214138
        %v2777 = vadd.f32 %v2649, 1.4214138
        %v2778 = vadd.f32 %v2650, 1.4214138
        %v2779 = vadd.f32 %v2651, 1.4214138
        %v2780 = vadd.f32 %v2652, 1.4214138
        %v2781 = vadd.f32 %v2653, 1.4214138
        %v2782 = vadd.f32 %v2654, 1.4214138
        %v2783 = vadd.f32 %v2655, 1.4214138
        %v2784 = vadd.f32 %v2656, 1.4214138
        %v2785 = vadd.f32 %v2657, 1.4214138
        %v2786 = vadd.f32 %v2658, 1.4214138
        %v2787 = vadd.f32 %v2659, 1.4214138
        %v2788 = vadd.f32 %v2660, 1.4214138
        %v2789 = vadd.f32 %v2661, 1.4214138
        %v2790 = vadd.f32 %v2662, 1.4214138
        %v2791 = vadd.f32 %v2663, 1.4214138
        %v2792 = vadd.f32 %v2664, 1.4214138
        %v2793 = vadd.f32 %v2665, 1.4214138
        %v2794 = vadd.f32 %v2666, 1.4214138
        %v2795 = vadd.f32 %v2667, 1.4214138
        %v2796 = vadd.f32 %v2668, 1.4214138
        %v2797 = vadd.f32 %v2669, 1.4214138
        %v2798 = vadd.f32 %v2670, 1.4214138
        %v2799 = vadd.f32 %v2671, 1.4214138
        %v2800 = vadd.f32 %v2672, 1.4214138
        %v2801 = vadd.f32 %v2673, 1.4214138
        %v2802 = vadd.f32 %v2674, 1.4214138
        %v2803 = vadd.f32 %v2675, 1.4214138
        %v2804 = vadd.f32 %v2676, 1.4214138
        %v2805 = vadd.f32 %v2677, 1.4214138
        %v2806 = vadd.f32 %v2678, 1.4214138
        %v2807 = vadd.f32 %v2679, 1.4214138
        %v2808 = vadd.f32 %v2680, 1.4214138
        %v2809 = vadd.f32 %v2681, 1.4214138
        %v2810 = vadd.f32 %v2682, 1.4214138
        %v2811 = vadd.f32 %v2683, 1.4214138
        %v2812 = vadd.f32 %v2684, 1.4214138
        %v2813 = vadd.f32 %v2685, 1.4214138
        %v2814 = vadd.f32 %v2686, 1.4214138
        %v2815 = vadd.f32 %v2687, 1.4214138
        %v2816 = vadd.f32 %v2688, 1.4214138
        %v2817 = vadd.f32 %v2689, 1.4214138
        %v2818 = vadd.f32 %v2690, 1.4214138
        %v2819 = vadd.f32 %v2691, 1.4214138
        %v2820 = vadd.f32 %v2692, 1.4214138
        %v2821 = vadd.f32 %v2693, 1.4214138
        %v2822 = vadd.f32 %v2694, 1.4214138
        %v2823 = vadd.f32 %v2695, 1.4214138
        %v2824 = vadd.f32 %v2696, 1.4214138
        %v2825 = vadd.f32 %v2697, 1.4214138
        %v2826 = vadd.f32 %v2698, 1.4214138
        %v2827 = vadd.f32 %v2699, 1.4214138
        %v2828 = vadd.f32 %v2700, 1.4214138
        %v2829 = vadd.f32 %v2701, 1.4214138
        %v2830 = vadd.f32 %v2702, 1.4214138
        %v2831 = vadd.f32 %v2703, 1.4214138
        %v2832 = vadd.f32 %v2704, 1.4214138
        %v2833 = vadd.f32 %v2705, 1.4214138
        %v2834 = vadd.f32 %v2706, 1.4214138
        %v2835 = vadd.f32 %v2707, 1.4214138
        %v2836 = vadd.f32 %v2708, 1.4214138
        %v2837 = vadd.f32 %v2709, 1.4214138
        %v2838 = vadd.f32 %v2710, 1.4214138
        %v2839 = vadd.f32 %v2711, 1.4214138
        %v2840 = vadd.f32 %v2712, 1.4214138
        %v2841 = vadd.f32 %v2713, 1.4214138
        %v2842 = vadd.f32 %v2714, 1.4214138
        %v2843 = vadd.f32 %v2715, 1.4214138
        %v2844 = vadd.f32 %v2716, 1.4214138
        %v2845 = vadd.f32 %v2717, 1.4214138
        %v2846 = vadd.f32 %v2718, 1.4214138
        %v2847 = vadd.f32 %v2719, 1.4214138
        %v2848 = vadd.f32 %v2720, 1.4214138
        %v2849 = vadd.f32 %v2721, 1.4214138
        %v2850 = vadd.f32 %v2722, 1.4214138
        %v2851 = vmul.f32 %v2723, %v2084
        %v2852 = vmul.f32 %v2724, %v2086
        %v2853 = vmul.f32 %v2725, %v2088
        %v2854 = vmul.f32 %v2726, %v2090
        %v2855 = vmul.f32 %v2727, %v2092
        %v2856 = vmul.f32 %v2728, %v2094
        %v2857 = vmul.f32 %v2729, %v2096
        %v2858 = vmul.f32 %v2730, %v2098
        %v2859 = vmul.f32 %v2731, %v2100
        %v2860 = vmul.f32 %v2732, %v2102
        %v2861 = vmul.f32 %v2733, %v2104
        %v2862 = vmul.f32 %v2734, %v2106
        %v2863 = vmul.f32 %v2735, %v2108
        %v2864 = vmul.f32 %v2736, %v2110
        %v2865 = vmul.f32 %v2737, %v2112
        %v2866 = vmul.f32 %v2738, %v2114
        %v2867 = vmul.f32 %v2739, %v2116
        %v2868 = vmul.f32 %v2740, %v2118
        %v2869 = vmul.f32 %v2741, %v2120
        %v2870 = vmul.f32 %v2742, %v2122
        %v2871 = vmul.f32 %v2743, %v2124
        %v2872 = vmul.f32 %v2744, %v2126
        %v2873 = vmul.f32 %v2745, %v2128
        %v2874 = vmul.f32 %v2746, %v2130
        %v2875 = vmul.f32 %v2747, %v2132
        %v2876 = vmul.f32 %v2748, %v2134
        %v2877 = vmul.f32 %v2749, %v2136
        %v2878 = vmul.f32 %v2750, %v2138
        %v2879 = vmul.f32 %v2751, %v2140
        %v2880 = vmul.f32 %v2752, %v2142
        %v2881 = vmul.f32 %v2753, %v2144
        %v2882 = vmul.f32 %v2754, %v2146
        %v2883 = vmul.f32 %v2755, %v2148
        %v2884 = vmul.f32 %v2756, %v2150
        %v2885 = vmul.f32 %v2757, %v2152
        %v2886 = vmul.f32 %v2758, %v2154
        %v2887 = vmul.f32 %v2759, %v2156
        %v2888 = vmul.f32 %v2760, %v2158
        %v2889 = vmul.f32 %v2761, %v2160
        %v2890 = vmul.f32 %v2762, %v2162
        %v2891 = vmul.f32 %v2763, %v2164
        %v2892 = vmul.f32 %v2764, %v2166
        %v2893 = vmul.f32 %v2765, %v2168
        %v2894 = vmul.f32 %v2766, %v2170
        %v2895 = vmul.f32 %v2767, %v2172
        %v2896 = vmul.f32 %v2768, %v2174
        %v2897 = vmul.f32 %v2769, %v2176
        %v2898 = vmul.f32 %v2770, %v2178
        %v2899 = vmul.f32 %v2771, %v2180
        %v2900 = vmul.f32 %v2772, %v2182
        %v2901 = vmul.f32 %v2773, %v2184
        %v2902 = vmul.f32 %v2774, %v2186
        %v2903 = vmul.f32 %v2775, %v2188
        %v2904 = vmul.f32 %v2776, %v2190
        %v2905 = vmul.f32 %v2777, %v2192
        %v2906 = vmul.f32 %v2778, %v2194
        %v2907 = vmul.f32 %v2779, %v2196
        %v2908 = vmul.f32 %v2780, %v2198
        %v2909 = vmul.f32 %v2781, %v2200
        %v2910 = vmul.f32 %v2782, %v2202
        %v2911 = vmul.f32 %v2783, %v2204
        %v2912 = vmul.f32 %v2784, %v2206
        %v2913 = vmul.f32 %v2785, %v2208
        %v2914 = vmul.f32 %v2786, %v2210
        %v2915 = vmul.f32 %v2787, %v2212
        %v2916 = vmul.f32 %v2788, %v2214
        %v2917 = vmul.f32 %v2789, %v2216
        %v2918 = vmul.f32 %v2790, %v2218
        %v2919 = vmul.f32 %v2791, %v2220
        %v2920 = vmul.f32 %v2792, %v2222
        %v2921 = vmul.f32 %v2793, %v2224
        %v2922 = vmul.f32 %v2794, %v2226
        %v2923 = vmul.f32 %v2795, %v2228
        %v2924 = vmul.f32 %v2796, %v2230
        %v2925 = vmul.f32 %v2797, %v2232
        %v2926 = vmul.f32 %v2798, %v2234
        %v2927 = vmul.f32 %v2799, %v2236
        %v2928 = vmul.f32 %v2800, %v2238
        %v2929 = vmul.f32 %v2801, %v2240
        %v2930 = vmul.f32 %v2802, %v2242
        %v2931 = vmul.f32 %v2803, %v2244
        %v2932 = vmul.f32 %v2804, %v2246
        %v2933 = vmul.f32 %v2805, %v2248
        %v2934 = vmul.f32 %v2806, %v2250
        %v2935 = vmul.f32 %v2807, %v2252
        %v2936 = vmul.f32 %v2808, %v2254
        %v2937 = vmul.f32 %v2809, %v2256
        %v2938 = vmul.f32 %v2810, %v2258
        %v2939 = vmul.f32 %v2811, %v2260
        %v2940 = vmul.f32 %v2812, %v2262
        %v2941 = vmul.f32 %v2813, %v2264
        %v2942 = vmul.f32 %v2814, %v2266
        %v2943 = vmul.f32 %v2815, %v2268
        %v2944 = vmul.f32 %v2816, %v2270
        %v2945 = vmul.f32 %v2817, %v2272
        %v2946 = vmul.f32 %v2818, %v2274
        %v2947 = vmul.f32 %v2819, %v2276
        %v2948 = vmul.f32 %v2820, %v2278
        %v2949 = vmul.f32 %v2821, %v2280
        %v2950 = vmul.f32 %v2822, %v2282
        %v2951 = vmul.f32 %v2823, %v2284
        %v2952 = vmul.f32 %v2824, %v2286
        %v2953 = vmul.f32 %v2825, %v2288
        %v2954 = vmul.f32 %v2826, %v2290
        %v2955 = vmul.f32 %v2827, %v2292
        %v2956 = vmul.f32 %v2828, %v2294
        %v2957 = vmul.f32 %v2829, %v2296
        %v2958 = vmul.f32 %v2830, %v2298
        %v2959 = vmul.f32 %v2831, %v2300
        %v2960 = vmul.f32 %v2832, %v2302
        %v2961 = vmul.f32 %v2833, %v2304
        %v2962 = vmul.f32 %v2834, %v2306
        %v2963 = vmul.f32 %v2835, %v2308
        %v2964 = vmul.f32 %v2836, %v2310
        %v2965 = vmul.f32 %v2837, %v2312
        %v2966 = vmul.f32 %v2838, %v2314
        %v2967 = vmul.f32 %v2839, %v2316
        %v2968 = vmul.f32 %v2840, %v2318
        %v2969 = vmul.f32 %v2841, %v2320
        %v2970 = vmul.f32 %v2842, %v2322
        %v2971 = vmul.f32 %v2843, %v2324
        %v2972 = vmul.f32 %v2844, %v2326
        %v2973 = vmul.f32 %v2845, %v2328
        %v2974 = vmul.f32 %v2846, %v2330
        %v2975 = vmul.f32 %v2847, %v2332
        %v2976 = vmul.f32 %v2848, %v2334
        %v2977 = vmul.f32 %v2849, %v2336
        %v2978 = vmul.f32 %v2850, %v2338
        %v2979 = vadd.f32 %v2851, -0.28449672
        %v2980 = vadd.f32 %v2852, -0.28449672
        %v2981 = vadd.f32 %v2853, -0.28449672
        %v2982 = vadd.f32 %v2854, -0.28449672
        %v2983 = vadd.f32 %v2855, -0.28449672
        %v2984 = vadd.f32 %v2856, -0.28449672
        %v2985 = vadd.f32 %v2857, -0.28449672
        %v2986 = vadd.f32 %v2858, -0.28449672
        %v2987 = vadd.f32 %v2859, -0.28449672
        %v2988 = vadd.f32 %v2860, -0.28449672
        %v2989 = vadd.f32 %v2861, -0.28449672
        %v2990 = vadd.f32 %v2862, -0.28449672
        %v2991 = vadd.f32 %v2863, -0.28449672
        %v2992 = vadd.f32 %v2864, -0.28449672
        %v2993 = vadd.f32 %v2865, -0.28449672
        %v2994 = vadd.f32 %v2866, -0.28449672
        %v2995 = vadd.f32 %v2867, -0.28449672
        %v2996 = vadd.f32 %v2868, -0.28449672
        %v2997 = vadd.f32 %v2869, -0.28449672
        %v2998 = vadd.f32 %v2870, -0.28449672
        %v2999 = vadd.f32 %v2871, -0.28449672
        %v3000 = vadd.f32 %v2872, -0.28449672
        %v3001 = vadd.f32 %v2873, -0.28449672
        %v3002 = vadd.f32 %v2874, -0.28449672
        %v3003 = vadd.f32 %v2875, -0.28449672
        %v3004 = vadd.f32 %v2876, -0.28449672
        %v3005 = vadd.f32 %v2877, -0.28449672
        %v3006 = vadd.f32 %v2878, -0.28449672
        %v3007 = vadd.f32 %v2879, -0.28449672
        %v3008 = vadd.f32 %v2880, -0.28449672
        %v3009 = vadd.f32 %v2881, -0.28449672
        %v3010 = vadd.f32 %v2882, -0.28449672
        %v3011 = vadd.f32 %v2883, -0.28449672
        %v3012 = vadd.f32 %v2884, -0.28449672
        %v3013 = vadd.f32 %v2885, -0.28449672
        %v3014 = vadd.f32 %v2886, -0.28449672
        %v3015 = vadd.f32 %v2887, -0.28449672
        %v3016 = vadd.f32 %v2888, -0.28449672
        %v3017 = vadd.f32 %v2889, -0.28449672
        %v3018 = vadd.f32 %v2890, -0.28449672
        %v3019 = vadd.f32 %v2891, -0.28449672
        %v3020 = vadd.f32 %v2892, -0.28449672
        %v3021 = vadd.f32 %v2893, -0.28449672
        %v3022 = vadd.f32 %v2894, -0.28449672
        %v3023 = vadd.f32 %v2895, -0.28449672
        %v3024 = vadd.f32 %v2896, -0.28449672
        %v3025 = vadd.f32 %v2897, -0.28449672
        %v3026 = vadd.f32 %v2898, -0.28449672
        %v3027 = vadd.f32 %v2899, -0.28449672
        %v3028 = vadd.f32 %v2900, -0.28449672
        %v3029 = vadd.f32 %v2901, -0.28449672
        %v3030 = vadd.f32 %v2902, -0.28449672
        %v3031 = vadd.f32 %v2903, -0.28449672
        %v3032 = vadd.f32 %v2904, -0.28449672
        %v3033 = vadd.f32 %v2905, -0.28449672
        %v3034 = vadd.f32 %v2906, -0.28449672
        %v3035 = vadd.f32 %v2907, -0.28449672
        %v3036 = vadd.f32 %v2908, -0.28449672
        %v3037 = vadd.f32 %v2909, -0.28449672
        %v3038 = vadd.f32 %v2910, -0.28449672
        %v3039 = vadd.f32 %v2911, -0.28449672
        %v3040 = vadd.f32 %v2912, -0.28449672
        %v3041 = vadd.f32 %v2913, -0.28449672
        %v3042 = vadd.f32 %v2914, -0.28449672
        %v3043 = vadd.f32 %v2915, -0.28449672
        %v3044 = vadd.f32 %v2916, -0.28449672
        %v3045 = vadd.f32 %v2917, -0.28449672
        %v3046 = vadd.f32 %v2918, -0.28449672
        %v3047 = vadd.f32 %v2919, -0.28449672
        %v3048 = vadd.f32 %v2920, -0.28449672
        %v3049 = vadd.f32 %v2921, -0.28449672
        %v3050 = vadd.f32 %v2922, -0.28449672
        %v3051 = vadd.f32 %v2923, -0.28449672
        %v3052 = vadd.f32 %v2924, -0.28449672
        %v3053 = vadd.f32 %v2925, -0.28449672
        %v3054 = vadd.f32 %v2926, -0.28449672
        %v3055 = vadd.f32 %v2927, -0.28449672
        %v3056 = vadd.f32 %v2928, -0.28449672
        %v3057 = vadd.f32 %v2929, -0.28449672
        %v3058 = vadd.f32 %v2930, -0.28449672
        %v3059 = vadd.f32 %v2931, -0.28449672
        %v3060 = vadd.f32 %v2932, -0.28449672
        %v3061 = vadd.f32 %v2933, -0.28449672
        %v3062 = vadd.f32 %v2934, -0.28449672
        %v3063 = vadd.f32 %v2935, -0.28449672
        %v3064 = vadd.f32 %v2936, -0.28449672
        %v3065 = vadd.f32 %v2937, -0.28449672
        %v3066 = vadd.f32 %v2938, -0.28449672
        %v3067 = vadd.f32 %v2939, -0.28449672
        %v3068 = vadd.f32 %v2940, -0.28449672
        %v3069 = vadd.f32 %v2941, -0.28449672
        %v3070 = vadd.f32 %v2942, -0.28449672
        %v3071 = vadd.f32 %v2943, -0.28449672
        %v3072 = vadd.f32 %v2944, -0.28449672
        %v3073 = vadd.f32 %v2945, -0.28449672
        %v3074 = vadd.f32 %v2946, -0.28449672
        %v3075 = vadd.f32 %v2947, -0.28449672
        %v3076 = vadd.f32 %v2948, -0.28449672
        %v3077 = vadd.f32 %v2949, -0.28449672
        %v3078 = vadd.f32 %v2950, -0.28449672
        %v3079 = vadd.f32 %v2951, -0.28449672
        %v3080 = vadd.f32 %v2952, -0.28449672
        %v3081 = vadd.f32 %v2953, -0.28449672
        %v3082 = vadd.f32 %v2954, -0.28449672
        %v3083 = vadd.f32 %v2955, -0.28449672
        %v3084 = vadd.f32 %v2956, -0.28449672
        %v3085 = vadd.f32 %v2957, -0.28449672
        %v3086 = vadd.f32 %v2958, -0.28449672
        %v3087 = vadd.f32 %v2959, -0.28449672
        %v3088 = vadd.f32 %v2960, -0.28449672
        %v3089 = vadd.f32 %v2961, -0.28449672
        %v3090 = vadd.f32 %v2962, -0.28449672
        %v3091 = vadd.f32 %v2963, -0.28449672
        %v3092 = vadd.f32 %v2964, -0.28449672
        %v3093 = vadd.f32 %v2965, -0.28449672
        %v3094 = vadd.f32 %v2966, -0.28449672
        %v3095 = vadd.f32 %v2967, -0.28449672
        %v3096 = vadd.f32 %v2968, -0.28449672
        %v3097 = vadd.f32 %v2969, -0.28449672
        %v3098 = vadd.f32 %v2970, -0.28449672
        %v3099 = vadd.f32 %v2971, -0.28449672
        %v3100 = vadd.f32 %v2972, -0.28449672
        %v3101 = vadd.f32 %v2973, -0.28449672
        %v3102 = vadd.f32 %v2974, -0.28449672
        %v3103 = vadd.f32 %v2975, -0.28449672
        %v3104 = vadd.f32 %v2976, -0.28449672
        %v3105 = vadd.f32 %v2977, -0.28449672
        %v3106 = vadd.f32 %v2978, -0.28449672
        %v3107 = vmul.f32 %v2979, %v2084
        %v3108 = vmul.f32 %v2980, %v2086
        %v3109 = vmul.f32 %v2981, %v2088
        %v3110 = vmul.f32 %v2982, %v2090
        %v3111 = vmul.f32 %v2983, %v2092
        %v3112 = vmul.f32 %v2984, %v2094
        %v3113 = vmul.f32 %v2985, %v2096
        %v3114 = vmul.f32 %v2986, %v2098
        %v3115 = vmul.f32 %v2987, %v2100
        %v3116 = vmul.f32 %v2988, %v2102
        %v3117 = vmul.f32 %v2989, %v2104
        %v3118 = vmul.f32 %v2990, %v2106
        %v3119 = vmul.f32 %v2991, %v2108
        %v3120 = vmul.f32 %v2992, %v2110
        %v3121 = vmul.f32 %v2993, %v2112
        %v3122 = vmul.f32 %v2994, %v2114
        %v3123 = vmul.f32 %v2995, %v2116
        %v3124 = vmul.f32 %v2996, %v2118
        %v3125 = vmul.f32 %v2997, %v2120
        %v3126 = vmul.f32 %v2998, %v2122
        %v3127 = vmul.f32 %v2999, %v2124
        %v3128 = vmul.f32 %v3000, %v2126
        %v3129 = vmul.f32 %v3001, %v2128
        %v3130 = vmul.f32 %v3002, %v2130
        %v3131 = vmul.f32 %v3003, %v2132
        %v3132 = vmul.f32 %v3004, %v2134
        %v3133 = vmul.f32 %v3005, %v2136
        %v3134 = vmul.f32 %v3006, %v2138
        %v3135 = vmul.f32 %v3007, %v2140
        %v3136 = vmul.f32 %v3008, %v2142
        %v3137 = vmul.f32 %v3009, %v2144
        %v3138 = vmul.f32 %v3010, %v2146
        %v3139 = vmul.f32 %v3011, %v2148
        %v3140 = vmul.f32 %v3012, %v2150
        %v3141 = vmul.f32 %v3013, %v2152
        %v3142 = vmul.f32 %v3014, %v2154
        %v3143 = vmul.f32 %v3015, %v2156
        %v3144 = vmul.f32 %v3016, %v2158
        %v3145 = vmul.f32 %v3017, %v2160
        %v3146 = vmul.f32 %v3018, %v2162
        %v3147 = vmul.f32 %v3019, %v2164
        %v3148 = vmul.f32 %v3020, %v2166
        %v3149 = vmul.f32 %v3021, %v2168
        %v3150 = vmul.f32 %v3022, %v2170
        %v3151 = vmul.f32 %v3023, %v2172
        %v3152 = vmul.f32 %v3024, %v2174
        %v3153 = vmul.f32 %v3025, %v2176
        %v3154 = vmul.f32 %v3026, %v2178
        %v3155 = vmul.f32 %v3027, %v2180
        %v3156 = vmul.f32 %v3028, %v2182
        %v3157 = vmul.f32 %v3029, %v2184
        %v3158 = vmul.f32 %v3030, %v2186
        %v3159 = vmul.f32 %v3031, %v2188
        %v3160 = vmul.f32 %v3032, %v2190
        %v3161 = vmul.f32 %v3033, %v2192
        %v3162 = vmul.f32 %v3034, %v2194
        %v3163 = vmul.f32 %v3035, %v2196
        %v3164 = vmul.f32 %v3036, %v2198
        %v3165 = vmul.f32 %v3037, %v2200
        %v3166 = vmul.f32 %v3038, %v2202
        %v3167 = vmul.f32 %v3039, %v2204
        %v3168 = vmul.f32 %v3040, %v2206
        %v3169 = vmul.f32 %v3041, %v2208
        %v3170 = vmul.f32 %v3042, %v2210
        %v3171 = vmul.f32 %v3043, %v2212
        %v3172 = vmul.f32 %v3044, %v2214
        %v3173 = vmul.f32 %v3045, %v2216
        %v3174 = vmul.f32 %v3046, %v2218
        %v3175 = vmul.f32 %v3047, %v2220
        %v3176 = vmul.f32 %v3048, %v2222
        %v3177 = vmul.f32 %v3049, %v2224
        %v3178 = vmul.f32 %v3050, %v2226
        %v3179 = vmul.f32 %v3051, %v2228
        %v3180 = vmul.f32 %v3052, %v2230
        %v3181 = vmul.f32 %v3053, %v2232
        %v3182 = vmul.f32 %v3054, %v2234
        %v3183 = vmul.f32 %v3055, %v2236
        %v3184 = vmul.f32 %v3056, %v2238
        %v3185 = vmul.f32 %v3057, %v2240
        %v3186 = vmul.f32 %v3058, %v2242
        %v3187 = vmul.f32 %v3059, %v2244
        %v3188 = vmul.f32 %v3060, %v2246
        %v3189 = vmul.f32 %v3061, %v2248
        %v3190 = vmul.f32 %v3062, %v2250
        %v3191 = vmul.f32 %v3063, %v2252
        %v3192 = vmul.f32 %v3064, %v2254
        %v3193 = vmul.f32 %v3065, %v2256
        %v3194 = vmul.f32 %v3066, %v2258
        %v3195 = vmul.f32 %v3067, %v2260
        %v3196 = vmul.f32 %v3068, %v2262
        %v3197 = vmul.f32 %v3069, %v2264
        %v3198 = vmul.f32 %v3070, %v2266
        %v3199 = vmul.f32 %v3071, %v2268
        %v3200 = vmul.f32 %v3072, %v2270
        %v3201 = vmul.f32 %v3073, %v2272
        %v3202 = vmul.f32 %v3074, %v2274
        %v3203 = vmul.f32 %v3075, %v2276
        %v3204 = vmul.f32 %v3076, %v2278
        %v3205 = vmul.f32 %v3077, %v2280
        %v3206 = vmul.f32 %v3078, %v2282
        %v3207 = vmul.f32 %v3079, %v2284
        %v3208 = vmul.f32 %v3080, %v2286
        %v3209 = vmul.f32 %v3081, %v2288
        %v3210 = vmul.f32 %v3082, %v2290
        %v3211 = vmul.f32 %v3083, %v2292
        %v3212 = vmul.f32 %v3084, %v2294
        %v3213 = vmul.f32 %v3085, %v2296
        %v3214 = vmul.f32 %v3086, %v2298
        %v3215 = vmul.f32 %v3087, %v2300
        %v3216 = vmul.f32 %v3088, %v2302
        %v3217 = vmul.f32 %v3089, %v2304
        %v3218 = vmul.f32 %v3090, %v2306
        %v3219 = vmul.f32 %v3091, %v2308
        %v3220 = vmul.f32 %v3092, %v2310
        %v3221 = vmul.f32 %v3093, %v2312
        %v3222 = vmul.f32 %v3094, %v2314
        %v3223 = vmul.f32 %v3095, %v2316
        %v3224 = vmul.f32 %v3096, %v2318
        %v3225 = vmul.f32 %v3097, %v2320
        %v3226 = vmul.f32 %v3098, %v2322
        %v3227 = vmul.f32 %v3099, %v2324
        %v3228 = vmul.f32 %v3100, %v2326
        %v3229 = vmul.f32 %v3101, %v2328
        %v3230 = vmul.f32 %v3102, %v2330
        %v3231 = vmul.f32 %v3103, %v2332
        %v3232 = vmul.f32 %v3104, %v2334
        %v3233 = vmul.f32 %v3105, %v2336
        %v3234 = vmul.f32 %v3106, %v2338
        %v3235 = vadd.f32 %v3107, 0.2548296
        %v3236 = vadd.f32 %v3108, 0.2548296
        %v3237 = vadd.f32 %v3109, 0.2548296
        %v3238 = vadd.f32 %v3110, 0.2548296
        %v3239 = vadd.f32 %v3111, 0.2548296
        %v3240 = vadd.f32 %v3112, 0.2548296
        %v3241 = vadd.f32 %v3113, 0.2548296
        %v3242 = vadd.f32 %v3114, 0.2548296
        %v3243 = vadd.f32 %v3115, 0.2548296
        %v3244 = vadd.f32 %v3116, 0.2548296
        %v3245 = vadd.f32 %v3117, 0.2548296
        %v3246 = vadd.f32 %v3118, 0.2548296
        %v3247 = vadd.f32 %v3119, 0.2548296
        %v3248 = vadd.f32 %v3120, 0.2548296
        %v3249 = vadd.f32 %v3121, 0.2548296
        %v3250 = vadd.f32 %v3122, 0.2548296
        %v3251 = vadd.f32 %v3123, 0.2548296
        %v3252 = vadd.f32 %v3124, 0.2548296
        %v3253 = vadd.f32 %v3125, 0.2548296
        %v3254 = vadd.f32 %v3126, 0.2548296
        %v3255 = vadd.f32 %v3127, 0.2548296
        %v3256 = vadd.f32 %v3128, 0.2548296
        %v3257 = vadd.f32 %v3129, 0.2548296
        %v3258 = vadd.f32 %v3130, 0.2548296
        %v3259 = vadd.f32 %v3131, 0.2548296
        %v3260 = vadd.f32 %v3132, 0.2548296
        %v3261 = vadd.f32 %v3133, 0.2548296
        %v3262 = vadd.f32 %v3134, 0.2548296
        %v3263 = vadd.f32 %v3135, 0.2548296
        %v3264 = vadd.f32 %v3136, 0.2548296
        %v3265 = vadd.f32 %v3137, 0.2548296
        %v3266 = vadd.f32 %v3138, 0.2548296
        %v3267 = vadd.f32 %v3139, 0.2548296
        %v3268 = vadd.f32 %v3140, 0.2548296
        %v3269 = vadd.f32 %v3141, 0.2548296
        %v3270 = vadd.f32 %v3142, 0.2548296
        %v3271 = vadd.f32 %v3143, 0.2548296
        %v3272 = vadd.f32 %v3144, 0.2548296
        %v3273 = vadd.f32 %v3145, 0.2548296
        %v3274 = vadd.f32 %v3146, 0.2548296
        %v3275 = vadd.f32 %v3147, 0.2548296
        %v3276 = vadd.f32 %v3148, 0.2548296
        %v3277 = vadd.f32 %v3149, 0.2548296
        %v3278 = vadd.f32 %v3150, 0.2548296
        %v3279 = vadd.f32 %v3151, 0.2548296
        %v3280 = vadd.f32 %v3152, 0.2548296
        %v3281 = vadd.f32 %v3153, 0.2548296
        %v3282 = vadd.f32 %v3154, 0.2548296
        %v3283 = vadd.f32 %v3155, 0.2548296
        %v3284 = vadd.f32 %v3156, 0.2548296
        %v3285 = vadd.f32 %v3157, 0.2548296
        %v3286 = vadd.f32 %v3158, 0.2548296
        %v3287 = vadd.f32 %v3159, 0.2548296
        %v3288 = vadd.f32 %v3160, 0.2548296
        %v3289 = vadd.f32 %v3161, 0.2548296
        %v3290 = vadd.f32 %v3162, 0.2548296
        %v3291 = vadd.f32 %v3163, 0.2548296
        %v3292 = vadd.f32 %v3164, 0.2548296
        %v3293 = vadd.f32 %v3165, 0.2548296
        %v3294 = vadd.f32 %v3166, 0.2548296
        %v3295 = vadd.f32 %v3167, 0.2548296
        %v3296 = vadd.f32 %v3168, 0.2548296
        %v3297 = vadd.f32 %v3169, 0.2548296
        %v3298 = vadd.f32 %v3170, 0.2548296
        %v3299 = vadd.f32 %v3171, 0.2548296
        %v3300 = vadd.f32 %v3172, 0.2548296
        %v3301 = vadd.f32 %v3173, 0.2548296
        %v3302 = vadd.f32 %v3174, 0.2548296
        %v3303 = vadd.f32 %v3175, 0.2548296
        %v3304 = vadd.f32 %v3176, 0.2548296
        %v3305 = vadd.f32 %v3177, 0.2548296
        %v3306 = vadd.f32 %v3178, 0.2548296
        %v3307 = vadd.f32 %v3179, 0.2548296
        %v3308 = vadd.f32 %v3180, 0.2548296
        %v3309 = vadd.f32 %v3181, 0.2548296
        %v3310 = vadd.f32 %v3182, 0.2548296
        %v3311 = vadd.f32 %v3183, 0.2548296
        %v3312 = vadd.f32 %v3184, 0.2548296
        %v3313 = vadd.f32 %v3185, 0.2548296
        %v3314 = vadd.f32 %v3186, 0.2548296
        %v3315 = vadd.f32 %v3187, 0.2548296
        %v3316 = vadd.f32 %v3188, 0.2548296
        %v3317 = vadd.f32 %v3189, 0.2548296
        %v3318 = vadd.f32 %v3190, 0.2548296
        %v3319 = vadd.f32 %v3191, 0.2548296
        %v3320 = vadd.f32 %v3192, 0.2548296
        %v3321 = vadd.f32 %v3193, 0.2548296
        %v3322 = vadd.f32 %v3194, 0.2548296
        %v3323 = vadd.f32 %v3195, 0.2548296
        %v3324 = vadd.f32 %v3196, 0.2548296
        %v3325 = vadd.f32 %v3197, 0.2548296
        %v3326 = vadd.f32 %v3198, 0.2548296
        %v3327 = vadd.f32 %v3199, 0.2548296
        %v3328 = vadd.f32 %v3200, 0.2548296
        %v3329 = vadd.f32 %v3201, 0.2548296
        %v3330 = vadd.f32 %v3202, 0.2548296
        %v3331 = vadd.f32 %v3203, 0.2548296
        %v3332 = vadd.f32 %v3204, 0.2548296
        %v3333 = vadd.f32 %v3205, 0.2548296
        %v3334 = vadd.f32 %v3206, 0.2548296
        %v3335 = vadd.f32 %v3207, 0.2548296
        %v3336 = vadd.f32 %v3208, 0.2548296
        %v3337 = vadd.f32 %v3209, 0.2548296
        %v3338 = vadd.f32 %v3210, 0.2548296
        %v3339 = vadd.f32 %v3211, 0.2548296
        %v3340 = vadd.f32 %v3212, 0.2548296
        %v3341 = vadd.f32 %v3213, 0.2548296
        %v3342 = vadd.f32 %v3214, 0.2548296
        %v3343 = vadd.f32 %v3215, 0.2548296
        %v3344 = vadd.f32 %v3216, 0.2548296
        %v3345 = vadd.f32 %v3217, 0.2548296
        %v3346 = vadd.f32 %v3218, 0.2548296
        %v3347 = vadd.f32 %v3219, 0.2548296
        %v3348 = vadd.f32 %v3220, 0.2548296
        %v3349 = vadd.f32 %v3221, 0.2548296
        %v3350 = vadd.f32 %v3222, 0.2548296
        %v3351 = vadd.f32 %v3223, 0.2548296
        %v3352 = vadd.f32 %v3224, 0.2548296
        %v3353 = vadd.f32 %v3225, 0.2548296
        %v3354 = vadd.f32 %v3226, 0.2548296
        %v3355 = vadd.f32 %v3227, 0.2548296
        %v3356 = vadd.f32 %v3228, 0.2548296
        %v3357 = vadd.f32 %v3229, 0.2548296
        %v3358 = vadd.f32 %v3230, 0.2548296
        %v3359 = vadd.f32 %v3231, 0.2548296
        %v3360 = vadd.f32 %v3232, 0.2548296
        %v3361 = vadd.f32 %v3233, 0.2548296
        %v3362 = vadd.f32 %v3234, 0.2548296
        %v3363 = vmul.f32 %v3235, %v2084
        %v3364 = vmul.f32 %v3236, %v2086
        %v3365 = vmul.f32 %v3237, %v2088
        %v3366 = vmul.f32 %v3238, %v2090
        %v3367 = vmul.f32 %v3239, %v2092
        %v3368 = vmul.f32 %v3240, %v2094
        %v3369 = vmul.f32 %v3241, %v2096
        %v3370 = vmul.f32 %v3242, %v2098
        %v3371 = vmul.f32 %v3243, %v2100
        %v3372 = vmul.f32 %v3244, %v2102
        %v3373 = vmul.f32 %v3245, %v2104
        %v3374 = vmul.f32 %v3246, %v2106
        %v3375 = vmul.f32 %v3247, %v2108
        %v3376 = vmul.f32 %v3248, %v2110
        %v3377 = vmul.f32 %v3249, %v2112
        %v3378 = vmul.f32 %v3250, %v2114
        %v3379 = vmul.f32 %v3251, %v2116
        %v3380 = vmul.f32 %v3252, %v2118
        %v3381 = vmul.f32 %v3253, %v2120
        %v3382 = vmul.f32 %v3254, %v2122
        %v3383 = vmul.f32 %v3255, %v2124
        %v3384 = vmul.f32 %v3256, %v2126
        %v3385 = vmul.f32 %v3257, %v2128
        %v3386 = vmul.f32 %v3258, %v2130
        %v3387 = vmul.f32 %v3259, %v2132
        %v3388 = vmul.f32 %v3260, %v2134
        %v3389 = vmul.f32 %v3261, %v2136
        %v3390 = vmul.f32 %v3262, %v2138
        %v3391 = vmul.f32 %v3263, %v2140
        %v3392 = vmul.f32 %v3264, %v2142
        %v3393 = vmul.f32 %v3265, %v2144
        %v3394 = vmul.f32 %v3266, %v2146
        %v3395 = vmul.f32 %v3267, %v2148
        %v3396 = vmul.f32 %v3268, %v2150
        %v3397 = vmul.f32 %v3269, %v2152
        %v3398 = vmul.f32 %v3270, %v2154
        %v3399 = vmul.f32 %v3271, %v2156
        %v3400 = vmul.f32 %v3272, %v2158
        %v3401 = vmul.f32 %v3273, %v2160
        %v3402 = vmul.f32 %v3274, %v2162
        %v3403 = vmul.f32 %v3275, %v2164
        %v3404 = vmul.f32 %v3276, %v2166
        %v3405 = vmul.f32 %v3277, %v2168
        %v3406 = vmul.f32 %v3278, %v2170
        %v3407 = vmul.f32 %v3279, %v2172
        %v3408 = vmul.f32 %v3280, %v2174
        %v3409 = vmul.f32 %v3281, %v2176
        %v3410 = vmul.f32 %v3282, %v2178
        %v3411 = vmul.f32 %v3283, %v2180
        %v3412 = vmul.f32 %v3284, %v2182
        %v3413 = vmul.f32 %v3285, %v2184
        %v3414 = vmul.f32 %v3286, %v2186
        %v3415 = vmul.f32 %v3287, %v2188
        %v3416 = vmul.f32 %v3288, %v2190
        %v3417 = vmul.f32 %v3289, %v2192
        %v3418 = vmul.f32 %v3290, %v2194
        %v3419 = vmul.f32 %v3291, %v2196
        %v3420 = vmul.f32 %v3292, %v2198
        %v3421 = vmul.f32 %v3293, %v2200
        %v3422 = vmul.f32 %v3294, %v2202
        %v3423 = vmul.f32 %v3295, %v2204
        %v3424 = vmul.f32 %v3296, %v2206
        %v3425 = vmul.f32 %v3297, %v2208
        %v3426 = vmul.f32 %v3298, %v2210
        %v3427 = vmul.f32 %v3299, %v2212
        %v3428 = vmul.f32 %v3300, %v2214
        %v3429 = vmul.f32 %v3301, %v2216
        %v3430 = vmul.f32 %v3302, %v2218
        %v3431 = vmul.f32 %v3303, %v2220
        %v3432 = vmul.f32 %v3304, %v2222
        %v3433 = vmul.f32 %v3305, %v2224
        %v3434 = vmul.f32 %v3306, %v2226
        %v3435 = vmul.f32 %v3307, %v2228
        %v3436 = vmul.f32 %v3308, %v2230
        %v3437 = vmul.f32 %v3309, %v2232
        %v3438 = vmul.f32 %v3310, %v2234
        %v3439 = vmul.f32 %v3311, %v2236
        %v3440 = vmul.f32 %v3312, %v2238
        %v3441 = vmul.f32 %v3313, %v2240
        %v3442 = vmul.f32 %v3314, %v2242
        %v3443 = vmul.f32 %v3315, %v2244
        %v3444 = vmul.f32 %v3316, %v2246
        %v3445 = vmul.f32 %v3317, %v2248
        %v3446 = vmul.f32 %v3318, %v2250
        %v3447 = vmul.f32 %v3319, %v2252
        %v3448 = vmul.f32 %v3320, %v2254
        %v3449 = vmul.f32 %v3321, %v2256
        %v3450 = vmul.f32 %v3322, %v2258
        %v3451 = vmul.f32 %v3323, %v2260
        %v3452 = vmul.f32 %v3324, %v2262
        %v3453 = vmul.f32 %v3325, %v2264
        %v3454 = vmul.f32 %v3326, %v2266
        %v3455 = vmul.f32 %v3327, %v2268
        %v3456 = vmul.f32 %v3328, %v2270
        %v3457 = vmul.f32 %v3329, %v2272
        %v3458 = vmul.f32 %v3330, %v2274
        %v3459 = vmul.f32 %v3331, %v2276
        %v3460 = vmul.f32 %v3332, %v2278
        %v3461 = vmul.f32 %v3333, %v2280
        %v3462 = vmul.f32 %v3334, %v2282
        %v3463 = vmul.f32 %v3335, %v2284
        %v3464 = vmul.f32 %v3336, %v2286
        %v3465 = vmul.f32 %v3337, %v2288
        %v3466 = vmul.f32 %v3338, %v2290
        %v3467 = vmul.f32 %v3339, %v2292
        %v3468 = vmul.f32 %v3340, %v2294
        %v3469 = vmul.f32 %v3341, %v2296
        %v3470 = vmul.f32 %v3342, %v2298
        %v3471 = vmul.f32 %v3343, %v2300
        %v3472 = vmul.f32 %v3344, %v2302
        %v3473 = vmul.f32 %v3345, %v2304
        %v3474 = vmul.f32 %v3346, %v2306
        %v3475 = vmul.f32 %v3347, %v2308
        %v3476 = vmul.f32 %v3348, %v2310
        %v3477 = vmul.f32 %v3349, %v2312
        %v3478 = vmul.f32 %v3350, %v2314
        %v3479 = vmul.f32 %v3351, %v2316
        %v3480 = vmul.f32 %v3352, %v2318
        %v3481 = vmul.f32 %v3353, %v2320
        %v3482 = vmul.f32 %v3354, %v2322
        %v3483 = vmul.f32 %v3355, %v2324
        %v3484 = vmul.f32 %v3356, %v2326
        %v3485 = vmul.f32 %v3357, %v2328
        %v3486 = vmul.f32 %v3358, %v2330
        %v3487 = vmul.f32 %v3359, %v2332
        %v3488 = vmul.f32 %v3360, %v2334
        %v3489 = vmul.f32 %v3361, %v2336
        %v3490 = vmul.f32 %v3362, %v2338
        %v3491 = vsub.f32 0.0, %v1699
        %v3492 = vsub.f32 0.0, %v1700
        %v3493 = vsub.f32 0.0, %v1701
        %v3494 = vsub.f32 0.0, %v1702
        %v3495 = vsub.f32 0.0, %v1703
        %v3496 = vsub.f32 0.0, %v1704
        %v3497 = vsub.f32 0.0, %v1705
        %v3498 = vsub.f32 0.0, %v1706
        %v3499 = vsub.f32 0.0, %v1707
        %v3500 = vsub.f32 0.0, %v1708
        %v3501 = vsub.f32 0.0, %v1709
        %v3502 = vsub.f32 0.0, %v1710
        %v3503 = vsub.f32 0.0, %v1711
        %v3504 = vsub.f32 0.0, %v1712
        %v3505 = vsub.f32 0.0, %v1713
        %v3506 = vsub.f32 0.0, %v1714
        %v3507 = vsub.f32 0.0, %v1715
        %v3508 = vsub.f32 0.0, %v1716
        %v3509 = vsub.f32 0.0, %v1717
        %v3510 = vsub.f32 0.0, %v1718
        %v3511 = vsub.f32 0.0, %v1719
        %v3512 = vsub.f32 0.0, %v1720
        %v3513 = vsub.f32 0.0, %v1721
        %v3514 = vsub.f32 0.0, %v1722
        %v3515 = vsub.f32 0.0, %v1723
        %v3516 = vsub.f32 0.0, %v1724
        %v3517 = vsub.f32 0.0, %v1725
        %v3518 = vsub.f32 0.0, %v1726
        %v3519 = vsub.f32 0.0, %v1727
        %v3520 = vsub.f32 0.0, %v1728
        %v3521 = vsub.f32 0.0, %v1729
        %v3522 = vsub.f32 0.0, %v1730
        %v3523 = vsub.f32 0.0, %v1731
        %v3524 = vsub.f32 0.0, %v1732
        %v3525 = vsub.f32 0.0, %v1733
        %v3526 = vsub.f32 0.0, %v1734
        %v3527 = vsub.f32 0.0, %v1735
        %v3528 = vsub.f32 0.0, %v1736
        %v3529 = vsub.f32 0.0, %v1737
        %v3530 = vsub.f32 0.0, %v1738
        %v3531 = vsub.f32 0.0, %v1739
        %v3532 = vsub.f32 0.0, %v1740
        %v3533 = vsub.f32 0.0, %v1741
        %v3534 = vsub.f32 0.0, %v1742
        %v3535 = vsub.f32 0.0, %v1743
        %v3536 = vsub.f32 0.0, %v1744
        %v3537 = vsub.f32 0.0, %v1745
        %v3538 = vsub.f32 0.0, %v1746
        %v3539 = vsub.f32 0.0, %v1747
        %v3540 = vsub.f32 0.0, %v1748
        %v3541 = vsub.f32 0.0, %v1749
        %v3542 = vsub.f32 0.0, %v1750
        %v3543 = vsub.f32 0.0, %v1751
        %v3544 = vsub.f32 0.0, %v1752
        %v3545 = vsub.f32 0.0, %v1753
        %v3546 = vsub.f32 0.0, %v1754
        %v3547 = vsub.f32 0.0, %v1755
        %v3548 = vsub.f32 0.0, %v1756
        %v3549 = vsub.f32 0.0, %v1757
        %v3550 = vsub.f32 0.0, %v1758
        %v3551 = vsub.f32 0.0, %v1759
        %v3552 = vsub.f32 0.0, %v1760
        %v3553 = vsub.f32 0.0, %v1761
        %v3554 = vsub.f32 0.0, %v1762
        %v3555 = vsub.f32 0.0, %v1763
        %v3556 = vsub.f32 0.0, %v1764
        %v3557 = vsub.f32 0.0, %v1765
        %v3558 = vsub.f32 0.0, %v1766
        %v3559 = vsub.f32 0.0, %v1767
        %v3560 = vsub.f32 0.0, %v1768
        %v3561 = vsub.f32 0.0, %v1769
        %v3562 = vsub.f32 0.0, %v1770
        %v3563 = vsub.f32 0.0, %v1771
        %v3564 = vsub.f32 0.0, %v1772
        %v3565 = vsub.f32 0.0, %v1773
        %v3566 = vsub.f32 0.0, %v1774
        %v3567 = vsub.f32 0.0, %v1775
        %v3568 = vsub.f32 0.0, %v1776
        %v3569 = vsub.f32 0.0, %v1777
        %v3570 = vsub.f32 0.0, %v1778
        %v3571 = vsub.f32 0.0, %v1779
        %v3572 = vsub.f32 0.0, %v1780
        %v3573 = vsub.f32 0.0, %v1781
        %v3574 = vsub.f32 0.0, %v1782
        %v3575 = vsub.f32 0.0, %v1783
        %v3576 = vsub.f32 0.0, %v1784
        %v3577 = vsub.f32 0.0, %v1785
        %v3578 = vsub.f32 0.0, %v1786
        %v3579 = vsub.f32 0.0, %v1787
        %v3580 = vsub.f32 0.0, %v1788
        %v3581 = vsub.f32 0.0, %v1789
        %v3582 = vsub.f32 0.0, %v1790
        %v3583 = vsub.f32 0.0, %v1791
        %v3584 = vsub.f32 0.0, %v1792
        %v3585 = vsub.f32 0.0, %v1793
        %v3586 = vsub.f32 0.0, %v1794
        %v3587 = vsub.f32 0.0, %v1795
        %v3588 = vsub.f32 0.0, %v1796
        %v3589 = vsub.f32 0.0, %v1797
        %v3590 = vsub.f32 0.0, %v1798
        %v3591 = vsub.f32 0.0, %v1799
        %v3592 = vsub.f32 0.0, %v1800
        %v3593 = vsub.f32 0.0, %v1801
        %v3594 = vsub.f32 0.0, %v1802
        %v3595 = vsub.f32 0.0, %v1803
        %v3596 = vsub.f32 0.0, %v1804
        %v3597 = vsub.f32 0.0, %v1805
        %v3598 = vsub.f32 0.0, %v1806
        %v3599 = vsub.f32 0.0, %v1807
        %v3600 = vsub.f32 0.0, %v1808
        %v3601 = vsub.f32 0.0, %v1809
        %v3602 = vsub.f32 0.0, %v1810
        %v3603 = vsub.f32 0.0, %v1811
        %v3604 = vsub.f32 0.0, %v1812
        %v3605 = vsub.f32 0.0, %v1813
        %v3606 = vsub.f32 0.0, %v1814
        %v3607 = vsub.f32 0.0, %v1815
        %v3608 = vsub.f32 0.0, %v1816
        %v3609 = vsub.f32 0.0, %v1817
        %v3610 = vsub.f32 0.0, %v1818
        %v3611 = vsub.f32 0.0, %v1819
        %v3612 = vsub.f32 0.0, %v1820
        %v3613 = vsub.f32 0.0, %v1821
        %v3614 = vsub.f32 0.0, %v1822
        %v3615 = vsub.f32 0.0, %v1823
        %v3616 = vsub.f32 0.0, %v1824
        %v3617 = vsub.f32 0.0, %v1825
        %v3618 = vsub.f32 0.0, %v1826
        %v3619 = vmul.f32 %v3491, %v1699
        %v3620 = vmul.f32 %v3492, %v1700
        %v3621 = vmul.f32 %v3493, %v1701
        %v3622 = vmul.f32 %v3494, %v1702
        %v3623 = vmul.f32 %v3495, %v1703
        %v3624 = vmul.f32 %v3496, %v1704
        %v3625 = vmul.f32 %v3497, %v1705
        %v3626 = vmul.f32 %v3498, %v1706
        %v3627 = vmul.f32 %v3499, %v1707
        %v3628 = vmul.f32 %v3500, %v1708
        %v3629 = vmul.f32 %v3501, %v1709
        %v3630 = vmul.f32 %v3502, %v1710
        %v3631 = vmul.f32 %v3503, %v1711
        %v3632 = vmul.f32 %v3504, %v1712
        %v3633 = vmul.f32 %v3505, %v1713
        %v3634 = vmul.f32 %v3506, %v1714
        %v3635 = vmul.f32 %v3507, %v1715
        %v3636 = vmul.f32 %v3508, %v1716
        %v3637 = vmul.f32 %v3509, %v1717
        %v3638 = vmul.f32 %v3510, %v1718
        %v3639 = vmul.f32 %v3511, %v1719
        %v3640 = vmul.f32 %v3512, %v1720
        %v3641 = vmul.f32 %v3513, %v1721
        %v3642 = vmul.f32 %v3514, %v1722
        %v3643 = vmul.f32 %v3515, %v1723
        %v3644 = vmul.f32 %v3516, %v1724
        %v3645 = vmul.f32 %v3517, %v1725
        %v3646 = vmul.f32 %v3518, %v1726
        %v3647 = vmul.f32 %v3519, %v1727
        %v3648 = vmul.f32 %v3520, %v1728
        %v3649 = vmul.f32 %v3521, %v1729
        %v3650 = vmul.f32 %v3522, %v1730
        %v3651 = vmul.f32 %v3523, %v1731
        %v3652 = vmul.f32 %v3524, %v1732
        %v3653 = vmul.f32 %v3525, %v1733
        %v3654 = vmul.f32 %v3526, %v1734
        %v3655 = vmul.f32 %v3527, %v1735
        %v3656 = vmul.f32 %v3528, %v1736
        %v3657 = vmul.f32 %v3529, %v1737
        %v3658 = vmul.f32 %v3530, %v1738
        %v3659 = vmul.f32 %v3531, %v1739
        %v3660 = vmul.f32 %v3532, %v1740
        %v3661 = vmul.f32 %v3533, %v1741
        %v3662 = vmul.f32 %v3534, %v1742
        %v3663 = vmul.f32 %v3535, %v1743
        %v3664 = vmul.f32 %v3536, %v1744
        %v3665 = vmul.f32 %v3537, %v1745
        %v3666 = vmul.f32 %v3538, %v1746
        %v3667 = vmul.f32 %v3539, %v1747
        %v3668 = vmul.f32 %v3540, %v1748
        %v3669 = vmul.f32 %v3541, %v1749
        %v3670 = vmul.f32 %v3542, %v1750
        %v3671 = vmul.f32 %v3543, %v1751
        %v3672 = vmul.f32 %v3544, %v1752
        %v3673 = vmul.f32 %v3545, %v1753
        %v3674 = vmul.f32 %v3546, %v1754
        %v3675 = vmul.f32 %v3547, %v1755
        %v3676 = vmul.f32 %v3548, %v1756
        %v3677 = vmul.f32 %v3549, %v1757
        %v3678 = vmul.f32 %v3550, %v1758
        %v3679 = vmul.f32 %v3551, %v1759
        %v3680 = vmul.f32 %v3552, %v1760
        %v3681 = vmul.f32 %v3553, %v1761
        %v3682 = vmul.f32 %v3554, %v1762
        %v3683 = vmul.f32 %v3555, %v1763
        %v3684 = vmul.f32 %v3556, %v1764
        %v3685 = vmul.f32 %v3557, %v1765
        %v3686 = vmul.f32 %v3558, %v1766
        %v3687 = vmul.f32 %v3559, %v1767
        %v3688 = vmul.f32 %v3560, %v1768
        %v3689 = vmul.f32 %v3561, %v1769
        %v3690 = vmul.f32 %v3562, %v1770
        %v3691 = vmul.f32 %v3563, %v1771
        %v3692 = vmul.f32 %v3564, %v1772
        %v3693 = vmul.f32 %v3565, %v1773
        %v3694 = vmul.f32 %v3566, %v1774
        %v3695 = vmul.f32 %v3567, %v1775
        %v3696 = vmul.f32 %v3568, %v1776
        %v3697 = vmul.f32 %v3569, %v1777
        %v3698 = vmul.f32 %v3570, %v1778
        %v3699 = vmul.f32 %v3571, %v1779
        %v3700 = vmul.f32 %v3572, %v1780
        %v3701 = vmul.f32 %v3573, %v1781
        %v3702 = vmul.f32 %v3574, %v1782
        %v3703 = vmul.f32 %v3575, %v1783
        %v3704 = vmul.f32 %v3576, %v1784
        %v3705 = vmul.f32 %v3577, %v1785
        %v3706 = vmul.f32 %v3578, %v1786
        %v3707 = vmul.f32 %v3579, %v1787
        %v3708 = vmul.f32 %v3580, %v1788
        %v3709 = vmul.f32 %v3581, %v1789
        %v3710 = vmul.f32 %v3582, %v1790
        %v3711 = vmul.f32 %v3583, %v1791
        %v3712 = vmul.f32 %v3584, %v1792
        %v3713 = vmul.f32 %v3585, %v1793
        %v3714 = vmul.f32 %v3586, %v1794
        %v3715 = vmul.f32 %v3587, %v1795
        %v3716 = vmul.f32 %v3588, %v1796
        %v3717 = vmul.f32 %v3589, %v1797
        %v3718 = vmul.f32 %v3590, %v1798
        %v3719 = vmul.f32 %v3591, %v1799
        %v3720 = vmul.f32 %v3592, %v1800
        %v3721 = vmul.f32 %v3593, %v1801
        %v3722 = vmul.f32 %v3594, %v1802
        %v3723 = vmul.f32 %v3595, %v1803
        %v3724 = vmul.f32 %v3596, %v1804
        %v3725 = vmul.f32 %v3597, %v1805
        %v3726 = vmul.f32 %v3598, %v1806
        %v3727 = vmul.f32 %v3599, %v1807
        %v3728 = vmul.f32 %v3600, %v1808
        %v3729 = vmul.f32 %v3601, %v1809
        %v3730 = vmul.f32 %v3602, %v1810
        %v3731 = vmul.f32 %v3603, %v1811
        %v3732 = vmul.f32 %v3604, %v1812
        %v3733 = vmul.f32 %v3605, %v1813
        %v3734 = vmul.f32 %v3606, %v1814
        %v3735 = vmul.f32 %v3607, %v1815
        %v3736 = vmul.f32 %v3608, %v1816
        %v3737 = vmul.f32 %v3609, %v1817
        %v3738 = vmul.f32 %v3610, %v1818
        %v3739 = vmul.f32 %v3611, %v1819
        %v3740 = vmul.f32 %v3612, %v1820
        %v3741 = vmul.f32 %v3613, %v1821
        %v3742 = vmul.f32 %v3614, %v1822
        %v3743 = vmul.f32 %v3615, %v1823
        %v3744 = vmul.f32 %v3616, %v1824
        %v3745 = vmul.f32 %v3617, %v1825
        %v3746 = vmul.f32 %v3618, %v1826
        %v3747 = vmul.f32 %v3619, 1.442695
        %v3748 = vpow.pop %v3747
        %v3749 = vmul.f32 %v3620, 1.442695
        %v3750 = vpow.pop %v3749
        %v3751 = vmul.f32 %v3621, 1.442695
        %v3752 = vpow.pop %v3751
        %v3753 = vmul.f32 %v3622, 1.442695
        %v3754 = vpow.pop %v3753
        %v3755 = vmul.f32 %v3623, 1.442695
        %v3756 = vpow.pop %v3755
        %v3757 = vmul.f32 %v3624, 1.442695
        %v3758 = vpow.pop %v3757
        %v3759 = vmul.f32 %v3625, 1.442695
        %v3760 = vpow.pop %v3759
        %v3761 = vmul.f32 %v3626, 1.442695
        %v3762 = vpow.pop %v3761
        %v3763 = vmul.f32 %v3627, 1.442695
        %v3764 = vpow.pop %v3763
        %v3765 = vmul.f32 %v3628, 1.442695
        %v3766 = vpow.pop %v3765
        %v3767 = vmul.f32 %v3629, 1.442695
        %v3768 = vpow.pop %v3767
        %v3769 = vmul.f32 %v3630, 1.442695
        %v3770 = vpow.pop %v3769
        %v3771 = vmul.f32 %v3631, 1.442695
        %v3772 = vpow.pop %v3771
        %v3773 = vmul.f32 %v3632, 1.442695
        %v3774 = vpow.pop %v3773
        %v3775 = vmul.f32 %v3633, 1.442695
        %v3776 = vpow.pop %v3775
        %v3777 = vmul.f32 %v3634, 1.442695
        %v3778 = vpow.pop %v3777
        %v3779 = vmul.f32 %v3635, 1.442695
        %v3780 = vpow.pop %v3779
        %v3781 = vmul.f32 %v3636, 1.442695
        %v3782 = vpow.pop %v3781
        %v3783 = vmul.f32 %v3637, 1.442695
        %v3784 = vpow.pop %v3783
        %v3785 = vmul.f32 %v3638, 1.442695
        %v3786 = vpow.pop %v3785
        %v3787 = vmul.f32 %v3639, 1.442695
        %v3788 = vpow.pop %v3787
        %v3789 = vmul.f32 %v3640, 1.442695
        %v3790 = vpow.pop %v3789
        %v3791 = vmul.f32 %v3641, 1.442695
        %v3792 = vpow.pop %v3791
        %v3793 = vmul.f32 %v3642, 1.442695
        %v3794 = vpow.pop %v3793
        %v3795 = vmul.f32 %v3643, 1.442695
        %v3796 = vpow.pop %v3795
        %v3797 = vmul.f32 %v3644, 1.442695
        %v3798 = vpow.pop %v3797
        %v3799 = vmul.f32 %v3645, 1.442695
        %v3800 = vpow.pop %v3799
        %v3801 = vmul.f32 %v3646, 1.442695
        %v3802 = vpow.pop %v3801
        %v3803 = vmul.f32 %v3647, 1.442695
        %v3804 = vpow.pop %v3803
        %v3805 = vmul.f32 %v3648, 1.442695
        %v3806 = vpow.pop %v3805
        %v3807 = vmul.f32 %v3649, 1.442695
        %v3808 = vpow.pop %v3807
        %v3809 = vmul.f32 %v3650, 1.442695
        %v3810 = vpow.pop %v3809
        %v3811 = vmul.f32 %v3651, 1.442695
        %v3812 = vpow.pop %v3811
        %v3813 = vmul.f32 %v3652, 1.442695
        %v3814 = vpow.pop %v3813
        %v3815 = vmul.f32 %v3653, 1.442695
        %v3816 = vpow.pop %v3815
        %v3817 = vmul.f32 %v3654, 1.442695
        %v3818 = vpow.pop %v3817
        %v3819 = vmul.f32 %v3655, 1.442695
        %v3820 = vpow.pop %v3819
        %v3821 = vmul.f32 %v3656, 1.442695
        %v3822 = vpow.pop %v3821
        %v3823 = vmul.f32 %v3657, 1.442695
        %v3824 = vpow.pop %v3823
        %v3825 = vmul.f32 %v3658, 1.442695
        %v3826 = vpow.pop %v3825
        %v3827 = vmul.f32 %v3659, 1.442695
        %v3828 = vpow.pop %v3827
        %v3829 = vmul.f32 %v3660, 1.442695
        %v3830 = vpow.pop %v3829
        %v3831 = vmul.f32 %v3661, 1.442695
        %v3832 = vpow.pop %v3831
        %v3833 = vmul.f32 %v3662, 1.442695
        %v3834 = vpow.pop %v3833
        %v3835 = vmul.f32 %v3663, 1.442695
        %v3836 = vpow.pop %v3835
        %v3837 = vmul.f32 %v3664, 1.442695
        %v3838 = vpow.pop %v3837
        %v3839 = vmul.f32 %v3665, 1.442695
        %v3840 = vpow.pop %v3839
        %v3841 = vmul.f32 %v3666, 1.442695
        %v3842 = vpow.pop %v3841
        %v3843 = vmul.f32 %v3667, 1.442695
        %v3844 = vpow.pop %v3843
        %v3845 = vmul.f32 %v3668, 1.442695
        %v3846 = vpow.pop %v3845
        %v3847 = vmul.f32 %v3669, 1.442695
        %v3848 = vpow.pop %v3847
        %v3849 = vmul.f32 %v3670, 1.442695
        %v3850 = vpow.pop %v3849
        %v3851 = vmul.f32 %v3671, 1.442695
        %v3852 = vpow.pop %v3851
        %v3853 = vmul.f32 %v3672, 1.442695
        %v3854 = vpow.pop %v3853
        %v3855 = vmul.f32 %v3673, 1.442695
        %v3856 = vpow.pop %v3855
        %v3857 = vmul.f32 %v3674, 1.442695
        %v3858 = vpow.pop %v3857
        %v3859 = vmul.f32 %v3675, 1.442695
        %v3860 = vpow.pop %v3859
        %v3861 = vmul.f32 %v3676, 1.442695
        %v3862 = vpow.pop %v3861
        %v3863 = vmul.f32 %v3677, 1.442695
        %v3864 = vpow.pop %v3863
        %v3865 = vmul.f32 %v3678, 1.442695
        %v3866 = vpow.pop %v3865
        %v3867 = vmul.f32 %v3679, 1.442695
        %v3868 = vpow.pop %v3867
        %v3869 = vmul.f32 %v3680, 1.442695
        %v3870 = vpow.pop %v3869
        %v3871 = vmul.f32 %v3681, 1.442695
        %v3872 = vpow.pop %v3871
        %v3873 = vmul.f32 %v3682, 1.442695
        %v3874 = vpow.pop %v3873
        %v3875 = vmul.f32 %v3683, 1.442695
        %v3876 = vpow.pop %v3875
        %v3877 = vmul.f32 %v3684, 1.442695
        %v3878 = vpow.pop %v3877
        %v3879 = vmul.f32 %v3685, 1.442695
        %v3880 = vpow.pop %v3879
        %v3881 = vmul.f32 %v3686, 1.442695
        %v3882 = vpow.pop %v3881
        %v3883 = vmul.f32 %v3687, 1.442695
        %v3884 = vpow.pop %v3883
        %v3885 = vmul.f32 %v3688, 1.442695
        %v3886 = vpow.pop %v3885
        %v3887 = vmul.f32 %v3689, 1.442695
        %v3888 = vpow.pop %v3887
        %v3889 = vmul.f32 %v3690, 1.442695
        %v3890 = vpow.pop %v3889
        %v3891 = vmul.f32 %v3691, 1.442695
        %v3892 = vpow.pop %v3891
        %v3893 = vmul.f32 %v3692, 1.442695
        %v3894 = vpow.pop %v3893
        %v3895 = vmul.f32 %v3693, 1.442695
        %v3896 = vpow.pop %v3895
        %v3897 = vmul.f32 %v3694, 1.442695
        %v3898 = vpow.pop %v3897
        %v3899 = vmul.f32 %v3695, 1.442695
        %v3900 = vpow.pop %v3899
        %v3901 = vmul.f32 %v3696, 1.442695
        %v3902 = vpow.pop %v3901
        %v3903 = vmul.f32 %v3697, 1.442695
        %v3904 = vpow.pop %v3903
        %v3905 = vmul.f32 %v3698, 1.442695
        %v3906 = vpow.pop %v3905
        %v3907 = vmul.f32 %v3699, 1.442695
        %v3908 = vpow.pop %v3907
        %v3909 = vmul.f32 %v3700, 1.442695
        %v3910 = vpow.pop %v3909
        %v3911 = vmul.f32 %v3701, 1.442695
        %v3912 = vpow.pop %v3911
        %v3913 = vmul.f32 %v3702, 1.442695
        %v3914 = vpow.pop %v3913
        %v3915 = vmul.f32 %v3703, 1.442695
        %v3916 = vpow.pop %v3915
        %v3917 = vmul.f32 %v3704, 1.442695
        %v3918 = vpow.pop %v3917
        %v3919 = vmul.f32 %v3705, 1.442695
        %v3920 = vpow.pop %v3919
        %v3921 = vmul.f32 %v3706, 1.442695
        %v3922 = vpow.pop %v3921
        %v3923 = vmul.f32 %v3707, 1.442695
        %v3924 = vpow.pop %v3923
        %v3925 = vmul.f32 %v3708, 1.442695
        %v3926 = vpow.pop %v3925
        %v3927 = vmul.f32 %v3709, 1.442695
        %v3928 = vpow.pop %v3927
        %v3929 = vmul.f32 %v3710, 1.442695
        %v3930 = vpow.pop %v3929
        %v3931 = vmul.f32 %v3711, 1.442695
        %v3932 = vpow.pop %v3931
        %v3933 = vmul.f32 %v3712, 1.442695
        %v3934 = vpow.pop %v3933
        %v3935 = vmul.f32 %v3713, 1.442695
        %v3936 = vpow.pop %v3935
        %v3937 = vmul.f32 %v3714, 1.442695
        %v3938 = vpow.pop %v3937
        %v3939 = vmul.f32 %v3715, 1.442695
        %v3940 = vpow.pop %v3939
        %v3941 = vmul.f32 %v3716, 1.442695
        %v3942 = vpow.pop %v3941
        %v3943 = vmul.f32 %v3717, 1.442695
        %v3944 = vpow.pop %v3943
        %v3945 = vmul.f32 %v3718, 1.442695
        %v3946 = vpow.pop %v3945
        %v3947 = vmul.f32 %v3719, 1.442695
        %v3948 = vpow.pop %v3947
        %v3949 = vmul.f32 %v3720, 1.442695
        %v3950 = vpow.pop %v3949
        %v3951 = vmul.f32 %v3721, 1.442695
        %v3952 = vpow.pop %v3951
        %v3953 = vmul.f32 %v3722, 1.442695
        %v3954 = vpow.pop %v3953
        %v3955 = vmul.f32 %v3723, 1.442695
        %v3956 = vpow.pop %v3955
        %v3957 = vmul.f32 %v3724, 1.442695
        %v3958 = vpow.pop %v3957
        %v3959 = vmul.f32 %v3725, 1.442695
        %v3960 = vpow.pop %v3959
        %v3961 = vmul.f32 %v3726, 1.442695
        %v3962 = vpow.pop %v3961
        %v3963 = vmul.f32 %v3727, 1.442695
        %v3964 = vpow.pop %v3963
        %v3965 = vmul.f32 %v3728, 1.442695
        %v3966 = vpow.pop %v3965
        %v3967 = vmul.f32 %v3729, 1.442695
        %v3968 = vpow.pop %v3967
        %v3969 = vmul.f32 %v3730, 1.442695
        %v3970 = vpow.pop %v3969
        %v3971 = vmul.f32 %v3731, 1.442695
        %v3972 = vpow.pop %v3971
        %v3973 = vmul.f32 %v3732, 1.442695
        %v3974 = vpow.pop %v3973
        %v3975 = vmul.f32 %v3733, 1.442695
        %v3976 = vpow.pop %v3975
        %v3977 = vmul.f32 %v3734, 1.442695
        %v3978 = vpow.pop %v3977
        %v3979 = vmul.f32 %v3735, 1.442695
        %v3980 = vpow.pop %v3979
        %v3981 = vmul.f32 %v3736, 1.442695
        %v3982 = vpow.pop %v3981
        %v3983 = vmul.f32 %v3737, 1.442695
        %v3984 = vpow.pop %v3983
        %v3985 = vmul.f32 %v3738, 1.442695
        %v3986 = vpow.pop %v3985
        %v3987 = vmul.f32 %v3739, 1.442695
        %v3988 = vpow.pop %v3987
        %v3989 = vmul.f32 %v3740, 1.442695
        %v3990 = vpow.pop %v3989
        %v3991 = vmul.f32 %v3741, 1.442695
        %v3992 = vpow.pop %v3991
        %v3993 = vmul.f32 %v3742, 1.442695
        %v3994 = vpow.pop %v3993
        %v3995 = vmul.f32 %v3743, 1.442695
        %v3996 = vpow.pop %v3995
        %v3997 = vmul.f32 %v3744, 1.442695
        %v3998 = vpow.pop %v3997
        %v3999 = vmul.f32 %v3745, 1.442695
        %v4000 = vpow.pop %v3999
        %v4001 = vmul.f32 %v3746, 1.442695
        %v4002 = vpow.pop %v4001
        %v4003 = vmul.f32 %v3363, %v3748
        %v4004 = vmul.f32 %v3364, %v3750
        %v4005 = vmul.f32 %v3365, %v3752
        %v4006 = vmul.f32 %v3366, %v3754
        %v4007 = vmul.f32 %v3367, %v3756
        %v4008 = vmul.f32 %v3368, %v3758
        %v4009 = vmul.f32 %v3369, %v3760
        %v4010 = vmul.f32 %v3370, %v3762
        %v4011 = vmul.f32 %v3371, %v3764
        %v4012 = vmul.f32 %v3372, %v3766
        %v4013 = vmul.f32 %v3373, %v3768
        %v4014 = vmul.f32 %v3374, %v3770
        %v4015 = vmul.f32 %v3375, %v3772
        %v4016 = vmul.f32 %v3376, %v3774
        %v4017 = vmul.f32 %v3377, %v3776
        %v4018 = vmul.f32 %v3378, %v3778
        %v4019 = vmul.f32 %v3379, %v3780
        %v4020 = vmul.f32 %v3380, %v3782
        %v4021 = vmul.f32 %v3381, %v3784
        %v4022 = vmul.f32 %v3382, %v3786
        %v4023 = vmul.f32 %v3383, %v3788
        %v4024 = vmul.f32 %v3384, %v3790
        %v4025 = vmul.f32 %v3385, %v3792
        %v4026 = vmul.f32 %v3386, %v3794
        %v4027 = vmul.f32 %v3387, %v3796
        %v4028 = vmul.f32 %v3388, %v3798
        %v4029 = vmul.f32 %v3389, %v3800
        %v4030 = vmul.f32 %v3390, %v3802
        %v4031 = vmul.f32 %v3391, %v3804
        %v4032 = vmul.f32 %v3392, %v3806
        %v4033 = vmul.f32 %v3393, %v3808
        %v4034 = vmul.f32 %v3394, %v3810
        %v4035 = vmul.f32 %v3395, %v3812
        %v4036 = vmul.f32 %v3396, %v3814
        %v4037 = vmul.f32 %v3397, %v3816
        %v4038 = vmul.f32 %v3398, %v3818
        %v4039 = vmul.f32 %v3399, %v3820
        %v4040 = vmul.f32 %v3400, %v3822
        %v4041 = vmul.f32 %v3401, %v3824
        %v4042 = vmul.f32 %v3402, %v3826
        %v4043 = vmul.f32 %v3403, %v3828
        %v4044 = vmul.f32 %v3404, %v3830
        %v4045 = vmul.f32 %v3405, %v3832
        %v4046 = vmul.f32 %v3406, %v3834
        %v4047 = vmul.f32 %v3407, %v3836
        %v4048 = vmul.f32 %v3408, %v3838
        %v4049 = vmul.f32 %v3409, %v3840
        %v4050 = vmul.f32 %v3410, %v3842
        %v4051 = vmul.f32 %v3411, %v3844
        %v4052 = vmul.f32 %v3412, %v3846
        %v4053 = vmul.f32 %v3413, %v3848
        %v4054 = vmul.f32 %v3414, %v3850
        %v4055 = vmul.f32 %v3415, %v3852
        %v4056 = vmul.f32 %v3416, %v3854
        %v4057 = vmul.f32 %v3417, %v3856
        %v4058 = vmul.f32 %v3418, %v3858
        %v4059 = vmul.f32 %v3419, %v3860
        %v4060 = vmul.f32 %v3420, %v3862
        %v4061 = vmul.f32 %v3421, %v3864
        %v4062 = vmul.f32 %v3422, %v3866
        %v4063 = vmul.f32 %v3423, %v3868
        %v4064 = vmul.f32 %v3424, %v3870
        %v4065 = vmul.f32 %v3425, %v3872
        %v4066 = vmul.f32 %v3426, %v3874
        %v4067 = vmul.f32 %v3427, %v3876
        %v4068 = vmul.f32 %v3428, %v3878
        %v4069 = vmul.f32 %v3429, %v3880
        %v4070 = vmul.f32 %v3430, %v3882
        %v4071 = vmul.f32 %v3431, %v3884
        %v4072 = vmul.f32 %v3432, %v3886
        %v4073 = vmul.f32 %v3433, %v3888
        %v4074 = vmul.f32 %v3434, %v3890
        %v4075 = vmul.f32 %v3435, %v3892
        %v4076 = vmul.f32 %v3436, %v3894
        %v4077 = vmul.f32 %v3437, %v3896
        %v4078 = vmul.f32 %v3438, %v3898
        %v4079 = vmul.f32 %v3439, %v3900
        %v4080 = vmul.f32 %v3440, %v3902
        %v4081 = vmul.f32 %v3441, %v3904
        %v4082 = vmul.f32 %v3442, %v3906
        %v4083 = vmul.f32 %v3443, %v3908
        %v4084 = vmul.f32 %v3444, %v3910
        %v4085 = vmul.f32 %v3445, %v3912
        %v4086 = vmul.f32 %v3446, %v3914
        %v4087 = vmul.f32 %v3447, %v3916
        %v4088 = vmul.f32 %v3448, %v3918
        %v4089 = vmul.f32 %v3449, %v3920
        %v4090 = vmul.f32 %v3450, %v3922
        %v4091 = vmul.f32 %v3451, %v3924
        %v4092 = vmul.f32 %v3452, %v3926
        %v4093 = vmul.f32 %v3453, %v3928
        %v4094 = vmul.f32 %v3454, %v3930
        %v4095 = vmul.f32 %v3455, %v3932
        %v4096 = vmul.f32 %v3456, %v3934
        %v4097 = vmul.f32 %v3457, %v3936
        %v4098 = vmul.f32 %v3458, %v3938
        %v4099 = vmul.f32 %v3459, %v3940
        %v4100 = vmul.f32 %v3460, %v3942
        %v4101 = vmul.f32 %v3461, %v3944
        %v4102 = vmul.f32 %v3462, %v3946
        %v4103 = vmul.f32 %v3463, %v3948
        %v4104 = vmul.f32 %v3464, %v3950
        %v4105 = vmul.f32 %v3465, %v3952
        %v4106 = vmul.f32 %v3466, %v3954
        %v4107 = vmul.f32 %v3467, %v3956
        %v4108 = vmul.f32 %v3468, %v3958
        %v4109 = vmul.f32 %v3469, %v3960
        %v4110 = vmul.f32 %v3470, %v3962
        %v4111 = vmul.f32 %v3471, %v3964
        %v4112 = vmul.f32 %v3472, %v3966
        %v4113 = vmul.f32 %v3473, %v3968
        %v4114 = vmul.f32 %v3474, %v3970
        %v4115 = vmul.f32 %v3475, %v3972
        %v4116 = vmul.f32 %v3476, %v3974
        %v4117 = vmul.f32 %v3477, %v3976
        %v4118 = vmul.f32 %v3478, %v3978
        %v4119 = vmul.f32 %v3479, %v3980
        %v4120 = vmul.f32 %v3480, %v3982
        %v4121 = vmul.f32 %v3481, %v3984
        %v4122 = vmul.f32 %v3482, %v3986
        %v4123 = vmul.f32 %v3483, %v3988
        %v4124 = vmul.f32 %v3484, %v3990
        %v4125 = vmul.f32 %v3485, %v3992
        %v4126 = vmul.f32 %v3486, %v3994
        %v4127 = vmul.f32 %v3487, %v3996
        %v4128 = vmul.f32 %v3488, %v3998
        %v4129 = vmul.f32 %v3489, %v4000
        %v4130 = vmul.f32 %v3490, %v4002
        %v4131 = vsub.f32 1.0, %v4003
        %v4132 = vsub.f32 1.0, %v4004
        %v4133 = vsub.f32 1.0, %v4005
        %v4134 = vsub.f32 1.0, %v4006
        %v4135 = vsub.f32 1.0, %v4007
        %v4136 = vsub.f32 1.0, %v4008
        %v4137 = vsub.f32 1.0, %v4009
        %v4138 = vsub.f32 1.0, %v4010
        %v4139 = vsub.f32 1.0, %v4011
        %v4140 = vsub.f32 1.0, %v4012
        %v4141 = vsub.f32 1.0, %v4013
        %v4142 = vsub.f32 1.0, %v4014
        %v4143 = vsub.f32 1.0, %v4015
        %v4144 = vsub.f32 1.0, %v4016
        %v4145 = vsub.f32 1.0, %v4017
        %v4146 = vsub.f32 1.0, %v4018
        %v4147 = vsub.f32 1.0, %v4019
        %v4148 = vsub.f32 1.0, %v4020
        %v4149 = vsub.f32 1.0, %v4021
        %v4150 = vsub.f32 1.0, %v4022
        %v4151 = vsub.f32 1.0, %v4023
        %v4152 = vsub.f32 1.0, %v4024
        %v4153 = vsub.f32 1.0, %v4025
        %v4154 = vsub.f32 1.0, %v4026
        %v4155 = vsub.f32 1.0, %v4027
        %v4156 = vsub.f32 1.0, %v4028
        %v4157 = vsub.f32 1.0, %v4029
        %v4158 = vsub.f32 1.0, %v4030
        %v4159 = vsub.f32 1.0, %v4031
        %v4160 = vsub.f32 1.0, %v4032
        %v4161 = vsub.f32 1.0, %v4033
        %v4162 = vsub.f32 1.0, %v4034
        %v4163 = vsub.f32 1.0, %v4035
        %v4164 = vsub.f32 1.0, %v4036
        %v4165 = vsub.f32 1.0, %v4037
        %v4166 = vsub.f32 1.0, %v4038
        %v4167 = vsub.f32 1.0, %v4039
        %v4168 = vsub.f32 1.0, %v4040
        %v4169 = vsub.f32 1.0, %v4041
        %v4170 = vsub.f32 1.0, %v4042
        %v4171 = vsub.f32 1.0, %v4043
        %v4172 = vsub.f32 1.0, %v4044
        %v4173 = vsub.f32 1.0, %v4045
        %v4174 = vsub.f32 1.0, %v4046
        %v4175 = vsub.f32 1.0, %v4047
        %v4176 = vsub.f32 1.0, %v4048
        %v4177 = vsub.f32 1.0, %v4049
        %v4178 = vsub.f32 1.0, %v4050
        %v4179 = vsub.f32 1.0, %v4051
        %v4180 = vsub.f32 1.0, %v4052
        %v4181 = vsub.f32 1.0, %v4053
        %v4182 = vsub.f32 1.0, %v4054
        %v4183 = vsub.f32 1.0, %v4055
        %v4184 = vsub.f32 1.0, %v4056
        %v4185 = vsub.f32 1.0, %v4057
        %v4186 = vsub.f32 1.0, %v4058
        %v4187 = vsub.f32 1.0, %v4059
        %v4188 = vsub.f32 1.0, %v4060
        %v4189 = vsub.f32 1.0, %v4061
        %v4190 = vsub.f32 1.0, %v4062
        %v4191 = vsub.f32 1.0, %v4063
        %v4192 = vsub.f32 1.0, %v4064
        %v4193 = vsub.f32 1.0, %v4065
        %v4194 = vsub.f32 1.0, %v4066
        %v4195 = vsub.f32 1.0, %v4067
        %v4196 = vsub.f32 1.0, %v4068
        %v4197 = vsub.f32 1.0, %v4069
        %v4198 = vsub.f32 1.0, %v4070
        %v4199 = vsub.f32 1.0, %v4071
        %v4200 = vsub.f32 1.0, %v4072
        %v4201 = vsub.f32 1.0, %v4073
        %v4202 = vsub.f32 1.0, %v4074
        %v4203 = vsub.f32 1.0, %v4075
        %v4204 = vsub.f32 1.0, %v4076
        %v4205 = vsub.f32 1.0, %v4077
        %v4206 = vsub.f32 1.0, %v4078
        %v4207 = vsub.f32 1.0, %v4079
        %v4208 = vsub.f32 1.0, %v4080
        %v4209 = vsub.f32 1.0, %v4081
        %v4210 = vsub.f32 1.0, %v4082
        %v4211 = vsub.f32 1.0, %v4083
        %v4212 = vsub.f32 1.0, %v4084
        %v4213 = vsub.f32 1.0, %v4085
        %v4214 = vsub.f32 1.0, %v4086
        %v4215 = vsub.f32 1.0, %v4087
        %v4216 = vsub.f32 1.0, %v4088
        %v4217 = vsub.f32 1.0, %v4089
        %v4218 = vsub.f32 1.0, %v4090
        %v4219 = vsub.f32 1.0, %v4091
        %v4220 = vsub.f32 1.0, %v4092
        %v4221 = vsub.f32 1.0, %v4093
        %v4222 = vsub.f32 1.0, %v4094
        %v4223 = vsub.f32 1.0, %v4095
        %v4224 = vsub.f32 1.0, %v4096
        %v4225 = vsub.f32 1.0, %v4097
        %v4226 = vsub.f32 1.0, %v4098
        %v4227 = vsub.f32 1.0, %v4099
        %v4228 = vsub.f32 1.0, %v4100
        %v4229 = vsub.f32 1.0, %v4101
        %v4230 = vsub.f32 1.0, %v4102
        %v4231 = vsub.f32 1.0, %v4103
        %v4232 = vsub.f32 1.0, %v4104
        %v4233 = vsub.f32 1.0, %v4105
        %v4234 = vsub.f32 1.0, %v4106
        %v4235 = vsub.f32 1.0, %v4107
        %v4236 = vsub.f32 1.0, %v4108
        %v4237 = vsub.f32 1.0, %v4109
        %v4238 = vsub.f32 1.0, %v4110
        %v4239 = vsub.f32 1.0, %v4111
        %v4240 = vsub.f32 1.0, %v4112
        %v4241 = vsub.f32 1.0, %v4113
        %v4242 = vsub.f32 1.0, %v4114
        %v4243 = vsub.f32 1.0, %v4115
        %v4244 = vsub.f32 1.0, %v4116
        %v4245 = vsub.f32 1.0, %v4117
        %v4246 = vsub.f32 1.0, %v4118
        %v4247 = vsub.f32 1.0, %v4119
        %v4248 = vsub.f32 1.0, %v4120
        %v4249 = vsub.f32 1.0, %v4121
        %v4250 = vsub.f32 1.0, %v4122
        %v4251 = vsub.f32 1.0, %v4123
        %v4252 = vsub.f32 1.0, %v4124
        %v4253 = vsub.f32 1.0, %v4125
        %v4254 = vsub.f32 1.0, %v4126
        %v4255 = vsub.f32 1.0, %v4127
        %v4256 = vsub.f32 1.0, %v4128
        %v4257 = vsub.f32 1.0, %v4129
        %v4258 = vsub.f32 1.0, %v4130
        %vm4259 = vcmp.ge.f32.partialorder %v1571, 0.0
        %vm4260 = vcmp.ge.f32.partialorder %v1572, 0.0
        %vm4261 = vcmp.ge.f32.partialorder %v1573, 0.0
        %vm4262 = vcmp.ge.f32.partialorder %v1574, 0.0
        %vm4263 = vcmp.ge.f32.partialorder %v1575, 0.0
        %vm4264 = vcmp.ge.f32.partialorder %v1576, 0.0
        %vm4265 = vcmp.ge.f32.partialorder %v1577, 0.0
        %vm4266 = vcmp.ge.f32.partialorder %v1578, 0.0
        %vm4267 = vcmp.ge.f32.partialorder %v1579, 0.0
        %vm4268 = vcmp.ge.f32.partialorder %v1580, 0.0
        %vm4269 = vcmp.ge.f32.partialorder %v1581, 0.0
        %vm4270 = vcmp.ge.f32.partialorder %v1582, 0.0
        %vm4271 = vcmp.ge.f32.partialorder %v1583, 0.0
        %vm4272 = vcmp.ge.f32.partialorder %v1584, 0.0
        %vm4273 = vcmp.ge.f32.partialorder %v1585, 0.0
        %vm4274 = vcmp.ge.f32.partialorder %v1586, 0.0
        %vm4275 = vcmp.ge.f32.partialorder %v1587, 0.0
        %vm4276 = vcmp.ge.f32.partialorder %v1588, 0.0
        %vm4277 = vcmp.ge.f32.partialorder %v1589, 0.0
        %vm4278 = vcmp.ge.f32.partialorder %v1590, 0.0
        %vm4279 = vcmp.ge.f32.partialorder %v1591, 0.0
        %vm4280 = vcmp.ge.f32.partialorder %v1592, 0.0
        %vm4281 = vcmp.ge.f32.partialorder %v1593, 0.0
        %vm4282 = vcmp.ge.f32.partialorder %v1594, 0.0
        %vm4283 = vcmp.ge.f32.partialorder %v1595, 0.0
        %vm4284 = vcmp.ge.f32.partialorder %v1596, 0.0
        %vm4285 = vcmp.ge.f32.partialorder %v1597, 0.0
        %vm4286 = vcmp.ge.f32.partialorder %v1598, 0.0
        %vm4287 = vcmp.ge.f32.partialorder %v1599, 0.0
        %vm4288 = vcmp.ge.f32.partialorder %v1600, 0.0
        %vm4289 = vcmp.ge.f32.partialorder %v1601, 0.0
        %vm4290 = vcmp.ge.f32.partialorder %v1602, 0.0
        %vm4291 = vcmp.ge.f32.partialorder %v1603, 0.0
        %vm4292 = vcmp.ge.f32.partialorder %v1604, 0.0
        %vm4293 = vcmp.ge.f32.partialorder %v1605, 0.0
        %vm4294 = vcmp.ge.f32.partialorder %v1606, 0.0
        %vm4295 = vcmp.ge.f32.partialorder %v1607, 0.0
        %vm4296 = vcmp.ge.f32.partialorder %v1608, 0.0
        %vm4297 = vcmp.ge.f32.partialorder %v1609, 0.0
        %vm4298 = vcmp.ge.f32.partialorder %v1610, 0.0
        %vm4299 = vcmp.ge.f32.partialorder %v1611, 0.0
        %vm4300 = vcmp.ge.f32.partialorder %v1612, 0.0
        %vm4301 = vcmp.ge.f32.partialorder %v1613, 0.0
        %vm4302 = vcmp.ge.f32.partialorder %v1614, 0.0
        %vm4303 = vcmp.ge.f32.partialorder %v1615, 0.0
        %vm4304 = vcmp.ge.f32.partialorder %v1616, 0.0
        %vm4305 = vcmp.ge.f32.partialorder %v1617, 0.0
        %vm4306 = vcmp.ge.f32.partialorder %v1618, 0.0
        %vm4307 = vcmp.ge.f32.partialorder %v1619, 0.0
        %vm4308 = vcmp.ge.f32.partialorder %v1620, 0.0
        %vm4309 = vcmp.ge.f32.partialorder %v1621, 0.0
        %vm4310 = vcmp.ge.f32.partialorder %v1622, 0.0
        %vm4311 = vcmp.ge.f32.partialorder %v1623, 0.0
        %vm4312 = vcmp.ge.f32.partialorder %v1624, 0.0
        %vm4313 = vcmp.ge.f32.partialorder %v1625, 0.0
        %vm4314 = vcmp.ge.f32.partialorder %v1626, 0.0
        %vm4315 = vcmp.ge.f32.partialorder %v1627, 0.0
        %vm4316 = vcmp.ge.f32.partialorder %v1628, 0.0
        %vm4317 = vcmp.ge.f32.partialorder %v1629, 0.0
        %vm4318 = vcmp.ge.f32.partialorder %v1630, 0.0
        %vm4319 = vcmp.ge.f32.partialorder %v1631, 0.0
        %vm4320 = vcmp.ge.f32.partialorder %v1632, 0.0
        %vm4321 = vcmp.ge.f32.partialorder %v1633, 0.0
        %vm4322 = vcmp.ge.f32.partialorder %v1634, 0.0
        %vm4323 = vcmp.ge.f32.partialorder %v1635, 0.0
        %vm4324 = vcmp.ge.f32.partialorder %v1636, 0.0
        %vm4325 = vcmp.ge.f32.partialorder %v1637, 0.0
        %vm4326 = vcmp.ge.f32.partialorder %v1638, 0.0
        %vm4327 = vcmp.ge.f32.partialorder %v1639, 0.0
        %vm4328 = vcmp.ge.f32.partialorder %v1640, 0.0
        %vm4329 = vcmp.ge.f32.partialorder %v1641, 0.0
        %vm4330 = vcmp.ge.f32.partialorder %v1642, 0.0
        %vm4331 = vcmp.ge.f32.partialorder %v1643, 0.0
        %vm4332 = vcmp.ge.f32.partialorder %v1644, 0.0
        %vm4333 = vcmp.ge.f32.partialorder %v1645, 0.0
        %vm4334 = vcmp.ge.f32.partialorder %v1646, 0.0
        %vm4335 = vcmp.ge.f32.partialorder %v1647, 0.0
        %vm4336 = vcmp.ge.f32.partialorder %v1648, 0.0
        %vm4337 = vcmp.ge.f32.partialorder %v1649, 0.0
        %vm4338 = vcmp.ge.f32.partialorder %v1650, 0.0
        %vm4339 = vcmp.ge.f32.partialorder %v1651, 0.0
        %vm4340 = vcmp.ge.f32.partialorder %v1652, 0.0
        %vm4341 = vcmp.ge.f32.partialorder %v1653, 0.0
        %vm4342 = vcmp.ge.f32.partialorder %v1654, 0.0
        %vm4343 = vcmp.ge.f32.partialorder %v1655, 0.0
        %vm4344 = vcmp.ge.f32.partialorder %v1656, 0.0
        %vm4345 = vcmp.ge.f32.partialorder %v1657, 0.0
        %vm4346 = vcmp.ge.f32.partialorder %v1658, 0.0
        %vm4347 = vcmp.ge.f32.partialorder %v1659, 0.0
        %vm4348 = vcmp.ge.f32.partialorder %v1660, 0.0
        %vm4349 = vcmp.ge.f32.partialorder %v1661, 0.0
        %vm4350 = vcmp.ge.f32.partialorder %v1662, 0.0
        %vm4351 = vcmp.ge.f32.partialorder %v1663, 0.0
        %vm4352 = vcmp.ge.f32.partialorder %v1664, 0.0
        %vm4353 = vcmp.ge.f32.partialorder %v1665, 0.0
        %vm4354 = vcmp.ge.f32.partialorder %v1666, 0.0
        %vm4355 = vcmp.ge.f32.partialorder %v1667, 0.0
        %vm4356 = vcmp.ge.f32.partialorder %v1668, 0.0
        %vm4357 = vcmp.ge.f32.partialorder %v1669, 0.0
        %vm4358 = vcmp.ge.f32.partialorder %v1670, 0.0
        %vm4359 = vcmp.ge.f32.partialorder %v1671, 0.0
        %vm4360 = vcmp.ge.f32.partialorder %v1672, 0.0
        %vm4361 = vcmp.ge.f32.partialorder %v1673, 0.0
        %vm4362 = vcmp.ge.f32.partialorder %v1674, 0.0
        %vm4363 = vcmp.ge.f32.partialorder %v1675, 0.0
        %vm4364 = vcmp.ge.f32.partialorder %v1676, 0.0
        %vm4365 = vcmp.ge.f32.partialorder %v1677, 0.0
        %vm4366 = vcmp.ge.f32.partialorder %v1678, 0.0
        %vm4367 = vcmp.ge.f32.partialorder %v1679, 0.0
        %vm4368 = vcmp.ge.f32.partialorder %v1680, 0.0
        %vm4369 = vcmp.ge.f32.partialorder %v1681, 0.0
        %vm4370 = vcmp.ge.f32.partialorder %v1682, 0.0
        %vm4371 = vcmp.ge.f32.partialorder %v1683, 0.0
        %vm4372 = vcmp.ge.f32.partialorder %v1684, 0.0
        %vm4373 = vcmp.ge.f32.partialorder %v1685, 0.0
        %vm4374 = vcmp.ge.f32.partialorder %v1686, 0.0
        %vm4375 = vcmp.ge.f32.partialorder %v1687, 0.0
        %vm4376 = vcmp.ge.f32.partialorder %v1688, 0.0
        %vm4377 = vcmp.ge.f32.partialorder %v1689, 0.0
        %vm4378 = vcmp.ge.f32.partialorder %v1690, 0.0
        %vm4379 = vcmp.ge.f32.partialorder %v1691, 0.0
        %vm4380 = vcmp.ge.f32.partialorder %v1692, 0.0
        %vm4381 = vcmp.ge.f32.partialorder %v1693, 0.0
        %vm4382 = vcmp.ge.f32.partialorder %v1694, 0.0
        %vm4383 = vcmp.ge.f32.partialorder %v1695, 0.0
        %vm4384 = vcmp.ge.f32.partialorder %v1696, 0.0
        %vm4385 = vcmp.ge.f32.partialorder %v1697, 0.0
        %vm4386 = vcmp.ge.f32.partialorder %v1698, 0.0
        %v4387 = vsub.f32 0.0, %v4131
        %v4388 = vsub.f32 0.0, %v4132
        %v4389 = vsub.f32 0.0, %v4133
        %v4390 = vsub.f32 0.0, %v4134
        %v4391 = vsub.f32 0.0, %v4135
        %v4392 = vsub.f32 0.0, %v4136
        %v4393 = vsub.f32 0.0, %v4137
        %v4394 = vsub.f32 0.0, %v4138
        %v4395 = vsub.f32 0.0, %v4139
        %v4396 = vsub.f32 0.0, %v4140
        %v4397 = vsub.f32 0.0, %v4141
        %v4398 = vsub.f32 0.0, %v4142
        %v4399 = vsub.f32 0.0, %v4143
        %v4400 = vsub.f32 0.0, %v4144
        %v4401 = vsub.f32 0.0, %v4145
        %v4402 = vsub.f32 0.0, %v4146
        %v4403 = vsub.f32 0.0, %v4147
        %v4404 = vsub.f32 0.0, %v4148
        %v4405 = vsub.f32 0.0, %v4149
        %v4406 = vsub.f32 0.0, %v4150
        %v4407 = vsub.f32 0.0, %v4151
        %v4408 = vsub.f32 0.0, %v4152
        %v4409 = vsub.f32 0.0, %v4153
        %v4410 = vsub.f32 0.0, %v4154
        %v4411 = vsub.f32 0.0, %v4155
        %v4412 = vsub.f32 0.0, %v4156
        %v4413 = vsub.f32 0.0, %v4157
        %v4414 = vsub.f32 0.0, %v4158
        %v4415 = vsub.f32 0.0, %v4159
        %v4416 = vsub.f32 0.0, %v4160
        %v4417 = vsub.f32 0.0, %v4161
        %v4418 = vsub.f32 0.0, %v4162
        %v4419 = vsub.f32 0.0, %v4163
        %v4420 = vsub.f32 0.0, %v4164
        %v4421 = vsub.f32 0.0, %v4165
        %v4422 = vsub.f32 0.0, %v4166
        %v4423 = vsub.f32 0.0, %v4167
        %v4424 = vsub.f32 0.0, %v4168
        %v4425 = vsub.f32 0.0, %v4169
        %v4426 = vsub.f32 0.0, %v4170
        %v4427 = vsub.f32 0.0, %v4171
        %v4428 = vsub.f32 0.0, %v4172
        %v4429 = vsub.f32 0.0, %v4173
        %v4430 = vsub.f32 0.0, %v4174
        %v4431 = vsub.f32 0.0, %v4175
        %v4432 = vsub.f32 0.0, %v4176
        %v4433 = vsub.f32 0.0, %v4177
        %v4434 = vsub.f32 0.0, %v4178
        %v4435 = vsub.f32 0.0, %v4179
        %v4436 = vsub.f32 0.0, %v4180
        %v4437 = vsub.f32 0.0, %v4181
        %v4438 = vsub.f32 0.0, %v4182
        %v4439 = vsub.f32 0.0, %v4183
        %v4440 = vsub.f32 0.0, %v4184
        %v4441 = vsub.f32 0.0, %v4185
        %v4442 = vsub.f32 0.0, %v4186
        %v4443 = vsub.f32 0.0, %v4187
        %v4444 = vsub.f32 0.0, %v4188
        %v4445 = vsub.f32 0.0, %v4189
        %v4446 = vsub.f32 0.0, %v4190
        %v4447 = vsub.f32 0.0, %v4191
        %v4448 = vsub.f32 0.0, %v4192
        %v4449 = vsub.f32 0.0, %v4193
        %v4450 = vsub.f32 0.0, %v4194
        %v4451 = vsub.f32 0.0, %v4195
        %v4452 = vsub.f32 0.0, %v4196
        %v4453 = vsub.f32 0.0, %v4197
        %v4454 = vsub.f32 0.0, %v4198
        %v4455 = vsub.f32 0.0, %v4199
        %v4456 = vsub.f32 0.0, %v4200
        %v4457 = vsub.f32 0.0, %v4201
        %v4458 = vsub.f32 0.0, %v4202
        %v4459 = vsub.f32 0.0, %v4203
        %v4460 = vsub.f32 0.0, %v4204
        %v4461 = vsub.f32 0.0, %v4205
        %v4462 = vsub.f32 0.0, %v4206
        %v4463 = vsub.f32 0.0, %v4207
        %v4464 = vsub.f32 0.0, %v4208
        %v4465 = vsub.f32 0.0, %v4209
        %v4466 = vsub.f32 0.0, %v4210
        %v4467 = vsub.f32 0.0, %v4211
        %v4468 = vsub.f32 0.0, %v4212
        %v4469 = vsub.f32 0.0, %v4213
        %v4470 = vsub.f32 0.0, %v4214
        %v4471 = vsub.f32 0.0, %v4215
        %v4472 = vsub.f32 0.0, %v4216
        %v4473 = vsub.f32 0.0, %v4217
        %v4474 = vsub.f32 0.0, %v4218
        %v4475 = vsub.f32 0.0, %v4219
        %v4476 = vsub.f32 0.0, %v4220
        %v4477 = vsub.f32 0.0, %v4221
        %v4478 = vsub.f32 0.0, %v4222
        %v4479 = vsub.f32 0.0, %v4223
        %v4480 = vsub.f32 0.0, %v4224
        %v4481 = vsub.f32 0.0, %v4225
        %v4482 = vsub.f32 0.0, %v4226
        %v4483 = vsub.f32 0.0, %v4227
        %v4484 = vsub.f32 0.0, %v4228
        %v4485 = vsub.f32 0.0, %v4229
        %v4486 = vsub.f32 0.0, %v4230
        %v4487 = vsub.f32 0.0, %v4231
        %v4488 = vsub.f32 0.0, %v4232
        %v4489 = vsub.f32 0.0, %v4233
        %v4490 = vsub.f32 0.0, %v4234
        %v4491 = vsub.f32 0.0, %v4235
        %v4492 = vsub.f32 0.0, %v4236
        %v4493 = vsub.f32 0.0, %v4237
        %v4494 = vsub.f32 0.0, %v4238
        %v4495 = vsub.f32 0.0, %v4239
        %v4496 = vsub.f32 0.0, %v4240
        %v4497 = vsub.f32 0.0, %v4241
        %v4498 = vsub.f32 0.0, %v4242
        %v4499 = vsub.f32 0.0, %v4243
        %v4500 = vsub.f32 0.0, %v4244
        %v4501 = vsub.f32 0.0, %v4245
        %v4502 = vsub.f32 0.0, %v4246
        %v4503 = vsub.f32 0.0, %v4247
        %v4504 = vsub.f32 0.0, %v4248
        %v4505 = vsub.f32 0.0, %v4249
        %v4506 = vsub.f32 0.0, %v4250
        %v4507 = vsub.f32 0.0, %v4251
        %v4508 = vsub.f32 0.0, %v4252
        %v4509 = vsub.f32 0.0, %v4253
        %v4510 = vsub.f32 0.0, %v4254
        %v4511 = vsub.f32 0.0, %v4255
        %v4512 = vsub.f32 0.0, %v4256
        %v4513 = vsub.f32 0.0, %v4257
        %v4514 = vsub.f32 0.0, %v4258
        %v4515 = vsel %vm4259, %v4131, %v4387
        %v4516 = vsel %vm4260, %v4132, %v4388
        %v4517 = vsel %vm4261, %v4133, %v4389
        %v4518 = vsel %vm4262, %v4134, %v4390
        %v4519 = vsel %vm4263, %v4135, %v4391
        %v4520 = vsel %vm4264, %v4136, %v4392
        %v4521 = vsel %vm4265, %v4137, %v4393
        %v4522 = vsel %vm4266, %v4138, %v4394
        %v4523 = vsel %vm4267, %v4139, %v4395
        %v4524 = vsel %vm4268, %v4140, %v4396
        %v4525 = vsel %vm4269, %v4141, %v4397
        %v4526 = vsel %vm4270, %v4142, %v4398
        %v4527 = vsel %vm4271, %v4143, %v4399
        %v4528 = vsel %vm4272, %v4144, %v4400
        %v4529 = vsel %vm4273, %v4145, %v4401
        %v4530 = vsel %vm4274, %v4146, %v4402
        %v4531 = vsel %vm4275, %v4147, %v4403
        %v4532 = vsel %vm4276, %v4148, %v4404
        %v4533 = vsel %vm4277, %v4149, %v4405
        %v4534 = vsel %vm4278, %v4150, %v4406
        %v4535 = vsel %vm4279, %v4151, %v4407
        %v4536 = vsel %vm4280, %v4152, %v4408
        %v4537 = vsel %vm4281, %v4153, %v4409
        %v4538 = vsel %vm4282, %v4154, %v4410
        %v4539 = vsel %vm4283, %v4155, %v4411
        %v4540 = vsel %vm4284, %v4156, %v4412
        %v4541 = vsel %vm4285, %v4157, %v4413
        %v4542 = vsel %vm4286, %v4158, %v4414
        %v4543 = vsel %vm4287, %v4159, %v4415
        %v4544 = vsel %vm4288, %v4160, %v4416
        %v4545 = vsel %vm4289, %v4161, %v4417
        %v4546 = vsel %vm4290, %v4162, %v4418
        %v4547 = vsel %vm4291, %v4163, %v4419
        %v4548 = vsel %vm4292, %v4164, %v4420
        %v4549 = vsel %vm4293, %v4165, %v4421
        %v4550 = vsel %vm4294, %v4166, %v4422
        %v4551 = vsel %vm4295, %v4167, %v4423
        %v4552 = vsel %vm4296, %v4168, %v4424
        %v4553 = vsel %vm4297, %v4169, %v4425
        %v4554 = vsel %vm4298, %v4170, %v4426
        %v4555 = vsel %vm4299, %v4171, %v4427
        %v4556 = vsel %vm4300, %v4172, %v4428
        %v4557 = vsel %vm4301, %v4173, %v4429
        %v4558 = vsel %vm4302, %v4174, %v4430
        %v4559 = vsel %vm4303, %v4175, %v4431
        %v4560 = vsel %vm4304, %v4176, %v4432
        %v4561 = vsel %vm4305, %v4177, %v4433
        %v4562 = vsel %vm4306, %v4178, %v4434
        %v4563 = vsel %vm4307, %v4179, %v4435
        %v4564 = vsel %vm4308, %v4180, %v4436
        %v4565 = vsel %vm4309, %v4181, %v4437
        %v4566 = vsel %vm4310, %v4182, %v4438
        %v4567 = vsel %vm4311, %v4183, %v4439
        %v4568 = vsel %vm4312, %v4184, %v4440
        %v4569 = vsel %vm4313, %v4185, %v4441
        %v4570 = vsel %vm4314, %v4186, %v4442
        %v4571 = vsel %vm4315, %v4187, %v4443
        %v4572 = vsel %vm4316, %v4188, %v4444
        %v4573 = vsel %vm4317, %v4189, %v4445
        %v4574 = vsel %vm4318, %v4190, %v4446
        %v4575 = vsel %vm4319, %v4191, %v4447
        %v4576 = vsel %vm4320, %v4192, %v4448
        %v4577 = vsel %vm4321, %v4193, %v4449
        %v4578 = vsel %vm4322, %v4194, %v4450
        %v4579 = vsel %vm4323, %v4195, %v4451
        %v4580 = vsel %vm4324, %v4196, %v4452
        %v4581 = vsel %vm4325, %v4197, %v4453
        %v4582 = vsel %vm4326, %v4198, %v4454
        %v4583 = vsel %vm4327, %v4199, %v4455
        %v4584 = vsel %vm4328, %v4200, %v4456
        %v4585 = vsel %vm4329, %v4201, %v4457
        %v4586 = vsel %vm4330, %v4202, %v4458
        %v4587 = vsel %vm4331, %v4203, %v4459
        %v4588 = vsel %vm4332, %v4204, %v4460
        %v4589 = vsel %vm4333, %v4205, %v4461
        %v4590 = vsel %vm4334, %v4206, %v4462
        %v4591 = vsel %vm4335, %v4207, %v4463
        %v4592 = vsel %vm4336, %v4208, %v4464
        %v4593 = vsel %vm4337, %v4209, %v4465
        %v4594 = vsel %vm4338, %v4210, %v4466
        %v4595 = vsel %vm4339, %v4211, %v4467
        %v4596 = vsel %vm4340, %v4212, %v4468
        %v4597 = vsel %vm4341, %v4213, %v4469
        %v4598 = vsel %vm4342, %v4214, %v4470
        %v4599 = vsel %vm4343, %v4215, %v4471
        %v4600 = vsel %vm4344, %v4216, %v4472
        %v4601 = vsel %vm4345, %v4217, %v4473
        %v4602 = vsel %vm4346, %v4218, %v4474
        %v4603 = vsel %vm4347, %v4219, %v4475
        %v4604 = vsel %vm4348, %v4220, %v4476
        %v4605 = vsel %vm4349, %v4221, %v4477
        %v4606 = vsel %vm4350, %v4222, %v4478
        %v4607 = vsel %vm4351, %v4223, %v4479
        %v4608 = vsel %vm4352, %v4224, %v4480
        %v4609 = vsel %vm4353, %v4225, %v4481
        %v4610 = vsel %vm4354, %v4226, %v4482
        %v4611 = vsel %vm4355, %v4227, %v4483
        %v4612 = vsel %vm4356, %v4228, %v4484
        %v4613 = vsel %vm4357, %v4229, %v4485
        %v4614 = vsel %vm4358, %v4230, %v4486
        %v4615 = vsel %vm4359, %v4231, %v4487
        %v4616 = vsel %vm4360, %v4232, %v4488
        %v4617 = vsel %vm4361, %v4233, %v4489
        %v4618 = vsel %vm4362, %v4234, %v4490
        %v4619 = vsel %vm4363, %v4235, %v4491
        %v4620 = vsel %vm4364, %v4236, %v4492
        %v4621 = vsel %vm4365, %v4237, %v4493
        %v4622 = vsel %vm4366, %v4238, %v4494
        %v4623 = vsel %vm4367, %v4239, %v4495
        %v4624 = vsel %vm4368, %v4240, %v4496
        %v4625 = vsel %vm4369, %v4241, %v4497
        %v4626 = vsel %vm4370, %v4242, %v4498
        %v4627 = vsel %vm4371, %v4243, %v4499
        %v4628 = vsel %vm4372, %v4244, %v4500
        %v4629 = vsel %vm4373, %v4245, %v4501
        %v4630 = vsel %vm4374, %v4246, %v4502
        %v4631 = vsel %vm4375, %v4247, %v4503
        %v4632 = vsel %vm4376, %v4248, %v4504
        %v4633 = vsel %vm4377, %v4249, %v4505
        %v4634 = vsel %vm4378, %v4250, %v4506
        %v4635 = vsel %vm4379, %v4251, %v4507
        %v4636 = vsel %vm4380, %v4252, %v4508
        %v4637 = vsel %vm4381, %v4253, %v4509
        %v4638 = vsel %vm4382, %v4254, %v4510
        %v4639 = vsel %vm4383, %v4255, %v4511
        %v4640 = vsel %vm4384, %v4256, %v4512
        %v4641 = vsel %vm4385, %v4257, %v4513
        %v4642 = vsel %vm4386, %v4258, %v4514
        %v4643 = vadd.f32 %v4515, 1.0
        %v4644 = vadd.f32 %v4516, 1.0
        %v4645 = vadd.f32 %v4517, 1.0
        %v4646 = vadd.f32 %v4518, 1.0
        %v4647 = vadd.f32 %v4519, 1.0
        %v4648 = vadd.f32 %v4520, 1.0
        %v4649 = vadd.f32 %v4521, 1.0
        %v4650 = vadd.f32 %v4522, 1.0
        %v4651 = vadd.f32 %v4523, 1.0
        %v4652 = vadd.f32 %v4524, 1.0
        %v4653 = vadd.f32 %v4525, 1.0
        %v4654 = vadd.f32 %v4526, 1.0
        %v4655 = vadd.f32 %v4527, 1.0
        %v4656 = vadd.f32 %v4528, 1.0
        %v4657 = vadd.f32 %v4529, 1.0
        %v4658 = vadd.f32 %v4530, 1.0
        %v4659 = vadd.f32 %v4531, 1.0
        %v4660 = vadd.f32 %v4532, 1.0
        %v4661 = vadd.f32 %v4533, 1.0
        %v4662 = vadd.f32 %v4534, 1.0
        %v4663 = vadd.f32 %v4535, 1.0
        %v4664 = vadd.f32 %v4536, 1.0
        %v4665 = vadd.f32 %v4537, 1.0
        %v4666 = vadd.f32 %v4538, 1.0
        %v4667 = vadd.f32 %v4539, 1.0
        %v4668 = vadd.f32 %v4540, 1.0
        %v4669 = vadd.f32 %v4541, 1.0
        %v4670 = vadd.f32 %v4542, 1.0
        %v4671 = vadd.f32 %v4543, 1.0
        %v4672 = vadd.f32 %v4544, 1.0
        %v4673 = vadd.f32 %v4545, 1.0
        %v4674 = vadd.f32 %v4546, 1.0
        %v4675 = vadd.f32 %v4547, 1.0
        %v4676 = vadd.f32 %v4548, 1.0
        %v4677 = vadd.f32 %v4549, 1.0
        %v4678 = vadd.f32 %v4550, 1.0
        %v4679 = vadd.f32 %v4551, 1.0
        %v4680 = vadd.f32 %v4552, 1.0
        %v4681 = vadd.f32 %v4553, 1.0
        %v4682 = vadd.f32 %v4554, 1.0
        %v4683 = vadd.f32 %v4555, 1.0
        %v4684 = vadd.f32 %v4556, 1.0
        %v4685 = vadd.f32 %v4557, 1.0
        %v4686 = vadd.f32 %v4558, 1.0
        %v4687 = vadd.f32 %v4559, 1.0
        %v4688 = vadd.f32 %v4560, 1.0
        %v4689 = vadd.f32 %v4561, 1.0
        %v4690 = vadd.f32 %v4562, 1.0
        %v4691 = vadd.f32 %v4563, 1.0
        %v4692 = vadd.f32 %v4564, 1.0
        %v4693 = vadd.f32 %v4565, 1.0
        %v4694 = vadd.f32 %v4566, 1.0
        %v4695 = vadd.f32 %v4567, 1.0
        %v4696 = vadd.f32 %v4568, 1.0
        %v4697 = vadd.f32 %v4569, 1.0
        %v4698 = vadd.f32 %v4570, 1.0
        %v4699 = vadd.f32 %v4571, 1.0
        %v4700 = vadd.f32 %v4572, 1.0
        %v4701 = vadd.f32 %v4573, 1.0
        %v4702 = vadd.f32 %v4574, 1.0
        %v4703 = vadd.f32 %v4575, 1.0
        %v4704 = vadd.f32 %v4576, 1.0
        %v4705 = vadd.f32 %v4577, 1.0
        %v4706 = vadd.f32 %v4578, 1.0
        %v4707 = vadd.f32 %v4579, 1.0
        %v4708 = vadd.f32 %v4580, 1.0
        %v4709 = vadd.f32 %v4581, 1.0
        %v4710 = vadd.f32 %v4582, 1.0
        %v4711 = vadd.f32 %v4583, 1.0
        %v4712 = vadd.f32 %v4584, 1.0
        %v4713 = vadd.f32 %v4585, 1.0
        %v4714 = vadd.f32 %v4586, 1.0
        %v4715 = vadd.f32 %v4587, 1.0
        %v4716 = vadd.f32 %v4588, 1.0
        %v4717 = vadd.f32 %v4589, 1.0
        %v4718 = vadd.f32 %v4590, 1.0
        %v4719 = vadd.f32 %v4591, 1.0
        %v4720 = vadd.f32 %v4592, 1.0
        %v4721 = vadd.f32 %v4593, 1.0
        %v4722 = vadd.f32 %v4594, 1.0
        %v4723 = vadd.f32 %v4595, 1.0
        %v4724 = vadd.f32 %v4596, 1.0
        %v4725 = vadd.f32 %v4597, 1.0
        %v4726 = vadd.f32 %v4598, 1.0
        %v4727 = vadd.f32 %v4599, 1.0
        %v4728 = vadd.f32 %v4600, 1.0
        %v4729 = vadd.f32 %v4601, 1.0
        %v4730 = vadd.f32 %v4602, 1.0
        %v4731 = vadd.f32 %v4603, 1.0
        %v4732 = vadd.f32 %v4604, 1.0
        %v4733 = vadd.f32 %v4605, 1.0
        %v4734 = vadd.f32 %v4606, 1.0
        %v4735 = vadd.f32 %v4607, 1.0
        %v4736 = vadd.f32 %v4608, 1.0
        %v4737 = vadd.f32 %v4609, 1.0
        %v4738 = vadd.f32 %v4610, 1.0
        %v4739 = vadd.f32 %v4611, 1.0
        %v4740 = vadd.f32 %v4612, 1.0
        %v4741 = vadd.f32 %v4613, 1.0
        %v4742 = vadd.f32 %v4614, 1.0
        %v4743 = vadd.f32 %v4615, 1.0
        %v4744 = vadd.f32 %v4616, 1.0
        %v4745 = vadd.f32 %v4617, 1.0
        %v4746 = vadd.f32 %v4618, 1.0
        %v4747 = vadd.f32 %v4619, 1.0
        %v4748 = vadd.f32 %v4620, 1.0
        %v4749 = vadd.f32 %v4621, 1.0
        %v4750 = vadd.f32 %v4622, 1.0
        %v4751 = vadd.f32 %v4623, 1.0
        %v4752 = vadd.f32 %v4624, 1.0
        %v4753 = vadd.f32 %v4625, 1.0
        %v4754 = vadd.f32 %v4626, 1.0
        %v4755 = vadd.f32 %v4627, 1.0
        %v4756 = vadd.f32 %v4628, 1.0
        %v4757 = vadd.f32 %v4629, 1.0
        %v4758 = vadd.f32 %v4630, 1.0
        %v4759 = vadd.f32 %v4631, 1.0
        %v4760 = vadd.f32 %v4632, 1.0
        %v4761 = vadd.f32 %v4633, 1.0
        %v4762 = vadd.f32 %v4634, 1.0
        %v4763 = vadd.f32 %v4635, 1.0
        %v4764 = vadd.f32 %v4636, 1.0
        %v4765 = vadd.f32 %v4637, 1.0
        %v4766 = vadd.f32 %v4638, 1.0
        %v4767 = vadd.f32 %v4639, 1.0
        %v4768 = vadd.f32 %v4640, 1.0
        %v4769 = vadd.f32 %v4641, 1.0
        %v4770 = vadd.f32 %v4642, 1.0
        %v4771 = vmul.f32 %v1443, %v4643
        %v4772 = vmul.f32 %v1444, %v4644
        %v4773 = vmul.f32 %v1445, %v4645
        %v4774 = vmul.f32 %v1446, %v4646
        %v4775 = vmul.f32 %v1447, %v4647
        %v4776 = vmul.f32 %v1448, %v4648
        %v4777 = vmul.f32 %v1449, %v4649
        %v4778 = vmul.f32 %v1450, %v4650
        %v4779 = vmul.f32 %v1451, %v4651
        %v4780 = vmul.f32 %v1452, %v4652
        %v4781 = vmul.f32 %v1453, %v4653
        %v4782 = vmul.f32 %v1454, %v4654
        %v4783 = vmul.f32 %v1455, %v4655
        %v4784 = vmul.f32 %v1456, %v4656
        %v4785 = vmul.f32 %v1457, %v4657
        %v4786 = vmul.f32 %v1458, %v4658
        %v4787 = vmul.f32 %v1459, %v4659
        %v4788 = vmul.f32 %v1460, %v4660
        %v4789 = vmul.f32 %v1461, %v4661
        %v4790 = vmul.f32 %v1462, %v4662
        %v4791 = vmul.f32 %v1463, %v4663
        %v4792 = vmul.f32 %v1464, %v4664
        %v4793 = vmul.f32 %v1465, %v4665
        %v4794 = vmul.f32 %v1466, %v4666
        %v4795 = vmul.f32 %v1467, %v4667
        %v4796 = vmul.f32 %v1468, %v4668
        %v4797 = vmul.f32 %v1469, %v4669
        %v4798 = vmul.f32 %v1470, %v4670
        %v4799 = vmul.f32 %v1471, %v4671
        %v4800 = vmul.f32 %v1472, %v4672
        %v4801 = vmul.f32 %v1473, %v4673
        %v4802 = vmul.f32 %v1474, %v4674
        %v4803 = vmul.f32 %v1475, %v4675
        %v4804 = vmul.f32 %v1476, %v4676
        %v4805 = vmul.f32 %v1477, %v4677
        %v4806 = vmul.f32 %v1478, %v4678
        %v4807 = vmul.f32 %v1479, %v4679
        %v4808 = vmul.f32 %v1480, %v4680
        %v4809 = vmul.f32 %v1481, %v4681
        %v4810 = vmul.f32 %v1482, %v4682
        %v4811 = vmul.f32 %v1483, %v4683
        %v4812 = vmul.f32 %v1484, %v4684
        %v4813 = vmul.f32 %v1485, %v4685
        %v4814 = vmul.f32 %v1486, %v4686
        %v4815 = vmul.f32 %v1487, %v4687
        %v4816 = vmul.f32 %v1488, %v4688
        %v4817 = vmul.f32 %v1489, %v4689
        %v4818 = vmul.f32 %v1490, %v4690
        %v4819 = vmul.f32 %v1491, %v4691
        %v4820 = vmul.f32 %v1492, %v4692
        %v4821 = vmul.f32 %v1493, %v4693
        %v4822 = vmul.f32 %v1494, %v4694
        %v4823 = vmul.f32 %v1495, %v4695
        %v4824 = vmul.f32 %v1496, %v4696
        %v4825 = vmul.f32 %v1497, %v4697
        %v4826 = vmul.f32 %v1498, %v4698
        %v4827 = vmul.f32 %v1499, %v4699
        %v4828 = vmul.f32 %v1500, %v4700
        %v4829 = vmul.f32 %v1501, %v4701
        %v4830 = vmul.f32 %v1502, %v4702
        %v4831 = vmul.f32 %v1503, %v4703
        %v4832 = vmul.f32 %v1504, %v4704
        %v4833 = vmul.f32 %v1505, %v4705
        %v4834 = vmul.f32 %v1506, %v4706
        %v4835 = vmul.f32 %v1507, %v4707
        %v4836 = vmul.f32 %v1508, %v4708
        %v4837 = vmul.f32 %v1509, %v4709
        %v4838 = vmul.f32 %v1510, %v4710
        %v4839 = vmul.f32 %v1511, %v4711
        %v4840 = vmul.f32 %v1512, %v4712
        %v4841 = vmul.f32 %v1513, %v4713
        %v4842 = vmul.f32 %v1514, %v4714
        %v4843 = vmul.f32 %v1515, %v4715
        %v4844 = vmul.f32 %v1516, %v4716
        %v4845 = vmul.f32 %v1517, %v4717
        %v4846 = vmul.f32 %v1518, %v4718
        %v4847 = vmul.f32 %v1519, %v4719
        %v4848 = vmul.f32 %v1520, %v4720
        %v4849 = vmul.f32 %v1521, %v4721
        %v4850 = vmul.f32 %v1522, %v4722
        %v4851 = vmul.f32 %v1523, %v4723
        %v4852 = vmul.f32 %v1524, %v4724
        %v4853 = vmul.f32 %v1525, %v4725
        %v4854 = vmul.f32 %v1526, %v4726
        %v4855 = vmul.f32 %v1527, %v4727
        %v4856 = vmul.f32 %v1528, %v4728
        %v4857 = vmul.f32 %v1529, %v4729
        %v4858 = vmul.f32 %v1530, %v4730
        %v4859 = vmul.f32 %v1531, %v4731
        %v4860 = vmul.f32 %v1532, %v4732
        %v4861 = vmul.f32 %v1533, %v4733
        %v4862 = vmul.f32 %v1534, %v4734
        %v4863 = vmul.f32 %v1535, %v4735
        %v4864 = vmul.f32 %v1536, %v4736
        %v4865 = vmul.f32 %v1537, %v4737
        %v4866 = vmul.f32 %v1538, %v4738
        %v4867 = vmul.f32 %v1539, %v4739
        %v4868 = vmul.f32 %v1540, %v4740
        %v4869 = vmul.f32 %v1541, %v4741
        %v4870 = vmul.f32 %v1542, %v4742
        %v4871 = vmul.f32 %v1543, %v4743
        %v4872 = vmul.f32 %v1544, %v4744
        %v4873 = vmul.f32 %v1545, %v4745
        %v4874 = vmul.f32 %v1546, %v4746
        %v4875 = vmul.f32 %v1547, %v4747
        %v4876 = vmul.f32 %v1548, %v4748
        %v4877 = vmul.f32 %v1549, %v4749
        %v4878 = vmul.f32 %v1550, %v4750
        %v4879 = vmul.f32 %v1551, %v4751
        %v4880 = vmul.f32 %v1552, %v4752
        %v4881 = vmul.f32 %v1553, %v4753
        %v4882 = vmul.f32 %v1554, %v4754
        %v4883 = vmul.f32 %v1555, %v4755
        %v4884 = vmul.f32 %v1556, %v4756
        %v4885 = vmul.f32 %v1557, %v4757
        %v4886 = vmul.f32 %v1558, %v4758
        %v4887 = vmul.f32 %v1559, %v4759
        %v4888 = vmul.f32 %v1560, %v4760
        %v4889 = vmul.f32 %v1561, %v4761
        %v4890 = vmul.f32 %v1562, %v4762
        %v4891 = vmul.f32 %v1563, %v4763
        %v4892 = vmul.f32 %v1564, %v4764
        %v4893 = vmul.f32 %v1565, %v4765
        %v4894 = vmul.f32 %v1566, %v4766
        %v4895 = vmul.f32 %v1567, %v4767
        %v4896 = vmul.f32 %v1568, %v4768
        %v4897 = vmul.f32 %v1569, %v4769
        %v4898 = vmul.f32 %v1570, %v4770
        %v4899 = vmul.f32 %v772, %v4771
        %v4900 = vmul.f32 %v774, %v4772
        %v4901 = vmul.f32 %v776, %v4773
        %v4902 = vmul.f32 %v778, %v4774
        %v4903 = vmul.f32 %v782, %v4775
        %v4904 = vmul.f32 %v784, %v4776
        %v4905 = vmul.f32 %v786, %v4777
        %v4906 = vmul.f32 %v788, %v4778
        %v4907 = vmul.f32 %v792, %v4779
        %v4908 = vmul.f32 %v794, %v4780
        %v4909 = vmul.f32 %v796, %v4781
        %v4910 = vmul.f32 %v798, %v4782
        %v4911 = vmul.f32 %v802, %v4783
        %v4912 = vmul.f32 %v804, %v4784
        %v4913 = vmul.f32 %v806, %v4785
        %v4914 = vmul.f32 %v808, %v4786
        %v4915 = vmul.f32 %v812, %v4787
        %v4916 = vmul.f32 %v814, %v4788
        %v4917 = vmul.f32 %v816, %v4789
        %v4918 = vmul.f32 %v818, %v4790
        %v4919 = vmul.f32 %v822, %v4791
        %v4920 = vmul.f32 %v824, %v4792
        %v4921 = vmul.f32 %v826, %v4793
        %v4922 = vmul.f32 %v828, %v4794
        %v4923 = vmul.f32 %v832, %v4795
        %v4924 = vmul.f32 %v834, %v4796
        %v4925 = vmul.f32 %v836, %v4797
        %v4926 = vmul.f32 %v838, %v4798
        %v4927 = vmul.f32 %v842, %v4799
        %v4928 = vmul.f32 %v844, %v4800
        %v4929 = vmul.f32 %v846, %v4801
        %v4930 = vmul.f32 %v848, %v4802
        %v4931 = vmul.f32 %v852, %v4803
        %v4932 = vmul.f32 %v854, %v4804
        %v4933 = vmul.f32 %v856, %v4805
        %v4934 = vmul.f32 %v858, %v4806
        %v4935 = vmul.f32 %v862, %v4807
        %v4936 = vmul.f32 %v864, %v4808
        %v4937 = vmul.f32 %v866, %v4809
        %v4938 = vmul.f32 %v868, %v4810
        %v4939 = vmul.f32 %v872, %v4811
        %v4940 = vmul.f32 %v874, %v4812
        %v4941 = vmul.f32 %v876, %v4813
        %v4942 = vmul.f32 %v878, %v4814
        %v4943 = vmul.f32 %v882, %v4815
        %v4944 = vmul.f32 %v884, %v4816
        %v4945 = vmul.f32 %v886, %v4817
        %v4946 = vmul.f32 %v888, %v4818
        %v4947 = vmul.f32 %v892, %v4819
        %v4948 = vmul.f32 %v894, %v4820
        %v4949 = vmul.f32 %v896, %v4821
        %v4950 = vmul.f32 %v898, %v4822
        %v4951 = vmul.f32 %v902, %v4823
        %v4952 = vmul.f32 %v904, %v4824
        %v4953 = vmul.f32 %v906, %v4825
        %v4954 = vmul.f32 %v908, %v4826
        %v4955 = vmul.f32 %v912, %v4827
        %v4956 = vmul.f32 %v914, %v4828
        %v4957 = vmul.f32 %v916, %v4829
        %v4958 = vmul.f32 %v918, %v4830
        %v4959 = vmul.f32 %v922, %v4831
        %v4960 = vmul.f32 %v924, %v4832
        %v4961 = vmul.f32 %v926, %v4833
        %v4962 = vmul.f32 %v928, %v4834
        %v4963 = vmul.f32 %v932, %v4835
        %v4964 = vmul.f32 %v934, %v4836
        %v4965 = vmul.f32 %v936, %v4837
        %v4966 = vmul.f32 %v938, %v4838
        %v4967 = vmul.f32 %v942, %v4839
        %v4968 = vmul.f32 %v944, %v4840
        %v4969 = vmul.f32 %v946, %v4841
        %v4970 = vmul.f32 %v948, %v4842
        %v4971 = vmul.f32 %v952, %v4843
        %v4972 = vmul.f32 %v954, %v4844
        %v4973 = vmul.f32 %v956, %v4845
        %v4974 = vmul.f32 %v958, %v4846
        %v4975 = vmul.f32 %v962, %v4847
        %v4976 = vmul.f32 %v964, %v4848
        %v4977 = vmul.f32 %v966, %v4849
        %v4978 = vmul.f32 %v968, %v4850
        %v4979 = vmul.f32 %v972, %v4851
        %v4980 = vmul.f32 %v974, %v4852
        %v4981 = vmul.f32 %v976, %v4853
        %v4982 = vmul.f32 %v978, %v4854
        %v4983 = vmul.f32 %v982, %v4855
        %v4984 = vmul.f32 %v984, %v4856
        %v4985 = vmul.f32 %v986, %v4857
        %v4986 = vmul.f32 %v988, %v4858
        %v4987 = vmul.f32 %v992, %v4859
        %v4988 = vmul.f32 %v994, %v4860
        %v4989 = vmul.f32 %v996, %v4861
        %v4990 = vmul.f32 %v998, %v4862
        %v4991 = vmul.f32 %v1002, %v4863
        %v4992 = vmul.f32 %v1004, %v4864
        %v4993 = vmul.f32 %v1006, %v4865
        %v4994 = vmul.f32 %v1008, %v4866
        %v4995 = vmul.f32 %v1012, %v4867
        %v4996 = vmul.f32 %v1014, %v4868
        %v4997 = vmul.f32 %v1016, %v4869
        %v4998 = vmul.f32 %v1018, %v4870
        %v4999 = vmul.f32 %v1022, %v4871
        %v5000 = vmul.f32 %v1024, %v4872
        %v5001 = vmul.f32 %v1026, %v4873
        %v5002 = vmul.f32 %v1028, %v4874
        %v5003 = vmul.f32 %v1032, %v4875
        %v5004 = vmul.f32 %v1034, %v4876
        %v5005 = vmul.f32 %v1036, %v4877
        %v5006 = vmul.f32 %v1038, %v4878
        %v5007 = vmul.f32 %v1042, %v4879
        %v5008 = vmul.f32 %v1044, %v4880
        %v5009 = vmul.f32 %v1046, %v4881
        %v5010 = vmul.f32 %v1048, %v4882
        %v5011 = vmul.f32 %v1052, %v4883
        %v5012 = vmul.f32 %v1054, %v4884
        %v5013 = vmul.f32 %v1056, %v4885
        %v5014 = vmul.f32 %v1058, %v4886
        %v5015 = vmul.f32 %v1062, %v4887
        %v5016 = vmul.f32 %v1064, %v4888
        %v5017 = vmul.f32 %v1066, %v4889
        %v5018 = vmul.f32 %v1068, %v4890
        %v5019 = vmul.f32 %v1072, %v4891
        %v5020 = vmul.f32 %v1074, %v4892
        %v5021 = vmul.f32 %v1076, %v4893
        %v5022 = vmul.f32 %v1078, %v4894
        %v5023 = vmul.f32 %v1082, %v4895
        %v5024 = vmul.f32 %v1084, %v4896
        %v5025 = vmul.f32 %v1086, %v4897
        %v5026 = vmul.f32 %v1088, %v4898
        %v5027 = vpack.c.bf16 %v4901, %v4899
        %v5028 = vpack.c.bf16 %v4902, %v4900
        %v5029 = vpack.c.bf16 %v4905, %v4903
        %v5030 = vpack.c.bf16 %v4906, %v4904
        %v5031 = vpack.c.bf16 %v4909, %v4907
        %v5032 = vpack.c.bf16 %v4910, %v4908
        %v5033 = vpack.c.bf16 %v4913, %v4911
        %v5034 = vpack.c.bf16 %v4914, %v4912
        %v5035 = vpack.c.bf16 %v4917, %v4915
        %v5036 = vpack.c.bf16 %v4918, %v4916
        %v5037 = vpack.c.bf16 %v4921, %v4919
        %v5038 = vpack.c.bf16 %v4922, %v4920
        %v5039 = vpack.c.bf16 %v4925, %v4923
        %v5040 = vpack.c.bf16 %v4926, %v4924
        %v5041 = vpack.c.bf16 %v4929, %v4927
        %v5042 = vpack.c.bf16 %v4930, %v4928
        %v5043 = vpack.c.bf16 %v4933, %v4931
        %v5044 = vpack.c.bf16 %v4934, %v4932
        %v5045 = vpack.c.bf16 %v4937, %v4935
        %v5046 = vpack.c.bf16 %v4938, %v4936
        %v5047 = vpack.c.bf16 %v4941, %v4939
        %v5048 = vpack.c.bf16 %v4942, %v4940
        %v5049 = vpack.c.bf16 %v4945, %v4943
        %v5050 = vpack.c.bf16 %v4946, %v4944
        %v5051 = vpack.c.bf16 %v4949, %v4947
        %v5052 = vpack.c.bf16 %v4950, %v4948
        %v5053 = vpack.c.bf16 %v4953, %v4951
        %v5054 = vpack.c.bf16 %v4954, %v4952
        %v5055 = vpack.c.bf16 %v4957, %v4955
        %v5056 = vpack.c.bf16 %v4958, %v4956
        %v5057 = vpack.c.bf16 %v4961, %v4959
        %v5058 = vpack.c.bf16 %v4962, %v4960
        %v5059 = vpack.c.bf16 %v4965, %v4963
        %v5060 = vpack.c.bf16 %v4966, %v4964
        %v5061 = vpack.c.bf16 %v4969, %v4967
        %v5062 = vpack.c.bf16 %v4970, %v4968
        %v5063 = vpack.c.bf16 %v4973, %v4971
        %v5064 = vpack.c.bf16 %v4974, %v4972
        %v5065 = vpack.c.bf16 %v4977, %v4975
        %v5066 = vpack.c.bf16 %v4978, %v4976
        %v5067 = vpack.c.bf16 %v4981, %v4979
        %v5068 = vpack.c.bf16 %v4982, %v4980
        %v5069 = vpack.c.bf16 %v4985, %v4983
        %v5070 = vpack.c.bf16 %v4986, %v4984
        %v5071 = vpack.c.bf16 %v4989, %v4987
        %v5072 = vpack.c.bf16 %v4990, %v4988
        %v5073 = vpack.c.bf16 %v4993, %v4991
        %v5074 = vpack.c.bf16 %v4994, %v4992
        %v5075 = vpack.c.bf16 %v4997, %v4995
        %v5076 = vpack.c.bf16 %v4998, %v4996
        %v5077 = vpack.c.bf16 %v5001, %v4999
        %v5078 = vpack.c.bf16 %v5002, %v5000
        %v5079 = vpack.c.bf16 %v5005, %v5003
        %v5080 = vpack.c.bf16 %v5006, %v5004
        %v5081 = vpack.c.bf16 %v5009, %v5007
        %v5082 = vpack.c.bf16 %v5010, %v5008
        %v5083 = vpack.c.bf16 %v5013, %v5011
        %v5084 = vpack.c.bf16 %v5014, %v5012
        %v5085 = vpack.c.bf16 %v5017, %v5015
        %v5086 = vpack.c.bf16 %v5018, %v5016
        %v5087 = vpack.c.bf16 %v5021, %v5019
        %v5088 = vpack.c.bf16 %v5022, %v5020
        %v5089 = vpack.c.bf16 %v5025, %v5023
        %v5090 = vpack.c.bf16 %v5026, %v5024
        %v5091 = vld [vmem:[#allocation2] sm:$0xff]
        %v5092 = vld [vmem:[#allocation2 + $0x8] sm:$0xff]
        %v5093 = vld [vmem:[#allocation2 + $0x10] sm:$0xff]
        %v5094 = vld [vmem:[#allocation2 + $0x18] sm:$0xff]
        %v5095 = vld [vmem:[#allocation2 + $0x20] sm:$0xff]
        %v5096 = vld [vmem:[#allocation2 + $0x28] sm:$0xff]
        %v5097 = vld [vmem:[#allocation2 + $0x30] sm:$0xff]
        %v5098 = vld [vmem:[#allocation2 + $0x38] sm:$0xff]
        %v5099 = vld [vmem:[#allocation2 + $0x40] sm:$0xff]
        %v5100 = vld [vmem:[#allocation2 + $0x48] sm:$0xff]
        %v5101 = vld [vmem:[#allocation2 + $0x50] sm:$0xff]
        %v5102 = vld [vmem:[#allocation2 + $0x58] sm:$0xff]
        %v5103 = vld [vmem:[#allocation2 + $0x60] sm:$0xff]
        %v5104 = vld [vmem:[#allocation2 + $0x68] sm:$0xff]
        %v5105 = vld [vmem:[#allocation2 + $0x70] sm:$0xff]
        %v5106 = vld [vmem:[#allocation2 + $0x78] sm:$0xff]
        %v5107 = vld [vmem:[#allocation2 + $0x80] sm:$0xff]
        %v5108 = vld [vmem:[#allocation2 + $0x88] sm:$0xff]
        %v5109 = vld [vmem:[#allocation2 + $0x90] sm:$0xff]
        %v5110 = vld [vmem:[#allocation2 + $0x98] sm:$0xff]
        %v5111 = vld [vmem:[#allocation2 + $0xa0] sm:$0xff]
        %v5112 = vld [vmem:[#allocation2 + $0xa8] sm:$0xff]
        %v5113 = vld [vmem:[#allocation2 + $0xb0] sm:$0xff]
        %v5114 = vld [vmem:[#allocation2 + $0xb8] sm:$0xff]
        %v5115 = vld [vmem:[#allocation2 + $0xc0] sm:$0xff]
        %v5116 = vld [vmem:[#allocation2 + $0xc8] sm:$0xff]
        %v5117 = vld [vmem:[#allocation2 + $0xd0] sm:$0xff]
        %v5118 = vld [vmem:[#allocation2 + $0xd8] sm:$0xff]
        %v5119 = vld [vmem:[#allocation2 + $0xe0] sm:$0xff]
        %v5120 = vld [vmem:[#allocation2 + $0xe8] sm:$0xff]
        %v5121 = vld [vmem:[#allocation2 + $0xf0] sm:$0xff]
        %v5122 = vld [vmem:[#allocation2 + $0xf8] sm:$0xff]
        %v5123 = vld [vmem:[#allocation2 + $0x100] sm:$0xff]
        %v5124 = vld [vmem:[#allocation2 + $0x108] sm:$0xff]
        %v5125 = vld [vmem:[#allocation2 + $0x110] sm:$0xff]
        %v5126 = vld [vmem:[#allocation2 + $0x118] sm:$0xff]
        %v5127 = vld [vmem:[#allocation2 + $0x120] sm:$0xff]
        %v5128 = vld [vmem:[#allocation2 + $0x128] sm:$0xff]
        %v5129 = vld [vmem:[#allocation2 + $0x130] sm:$0xff]
        %v5130 = vld [vmem:[#allocation2 + $0x138] sm:$0xff]
        %v5131 = vld [vmem:[#allocation2 + $0x140] sm:$0xff]
        %v5132 = vld [vmem:[#allocation2 + $0x148] sm:$0xff]
        %v5133 = vld [vmem:[#allocation2 + $0x150] sm:$0xff]
        %v5134 = vld [vmem:[#allocation2 + $0x158] sm:$0xff]
        %v5135 = vld [vmem:[#allocation2 + $0x160] sm:$0xff]
        %v5136 = vld [vmem:[#allocation2 + $0x168] sm:$0xff]
        %v5137 = vld [vmem:[#allocation2 + $0x170] sm:$0xff]
        %v5138 = vld [vmem:[#allocation2 + $0x178] sm:$0xff]
        %v5139 = vld [vmem:[#allocation2 + $0x180] sm:$0xff]
        %v5140 = vld [vmem:[#allocation2 + $0x188] sm:$0xff]
        %v5141 = vld [vmem:[#allocation2 + $0x190] sm:$0xff]
        %v5142 = vld [vmem:[#allocation2 + $0x198] sm:$0xff]
        %v5143 = vld [vmem:[#allocation2 + $0x1a0] sm:$0xff]
        %v5144 = vld [vmem:[#allocation2 + $0x1a8] sm:$0xff]
        %v5145 = vld [vmem:[#allocation2 + $0x1b0] sm:$0xff]
        %v5146 = vld [vmem:[#allocation2 + $0x1b8] sm:$0xff]
        %v5147 = vld [vmem:[#allocation2 + $0x1c0] sm:$0xff]
        %v5148 = vld [vmem:[#allocation2 + $0x1c8] sm:$0xff]
        %v5149 = vld [vmem:[#allocation2 + $0x1d0] sm:$0xff]
        %v5150 = vld [vmem:[#allocation2 + $0x1d8] sm:$0xff]
        %v5151 = vld [vmem:[#allocation2 + $0x1e0] sm:$0xff]
        %v5152 = vld [vmem:[#allocation2 + $0x1e8] sm:$0xff]
        %v5153 = vld [vmem:[#allocation2 + $0x1f0] sm:$0xff]
        %v5154 = vld [vmem:[#allocation2 + $0x1f8] sm:$0xff]
        %v5155 = vld [vmem:[%s314] sm:$0xf]
        %v5156 = vld [vmem:[%s314 + $0x4] sm:$0xf]
        %v5157 = vld [vmem:[%s314 + $0x8] sm:$0xf]
        %v5158 = vld [vmem:[%s314 + $0xc] sm:$0xf]
        %v5159 = vld [vmem:[%s314 + $0x10] sm:$0xf]
        %v5160 = vld [vmem:[%s314 + $0x14] sm:$0xf]
        %v5161 = vld [vmem:[%s314 + $0x18] sm:$0xf]
        %v5162 = vld [vmem:[%s314 + $0x1c] sm:$0xf]
        %v5163 = vld [vmem:[%s314 + $0x20] sm:$0xf]
        %v5164 = vld [vmem:[%s314 + $0x24] sm:$0xf]
        %v5165 = vld [vmem:[%s314 + $0x28] sm:$0xf]
        %v5166 = vld [vmem:[%s314 + $0x2c] sm:$0xf]
        %v5167 = vld [vmem:[%s314 + $0x30] sm:$0xf]
        %v5168 = vld [vmem:[%s314 + $0x34] sm:$0xf]
        %v5169 = vld [vmem:[%s314 + $0x38] sm:$0xf]
        %v5170 = vld [vmem:[%s314 + $0x3c] sm:$0xf]
        %v5171 = vld [vmem:[%s314 + $0x40] sm:$0xf]
        %v5172 = vld [vmem:[%s314 + $0x44] sm:$0xf]
        %v5173 = vld [vmem:[%s314 + $0x48] sm:$0xf]
        %v5174 = vld [vmem:[%s314 + $0x4c] sm:$0xf]
        %v5175 = vld [vmem:[%s314 + $0x50] sm:$0xf]
        %v5176 = vld [vmem:[%s314 + $0x54] sm:$0xf]
        %v5177 = vld [vmem:[%s314 + $0x58] sm:$0xf]
        %v5178 = vld [vmem:[%s314 + $0x5c] sm:$0xf]
        %v5179 = vld [vmem:[%s314 + $0x60] sm:$0xf]
        %v5180 = vld [vmem:[%s314 + $0x64] sm:$0xf]
        %v5181 = vld [vmem:[%s314 + $0x68] sm:$0xf]
        %v5182 = vld [vmem:[%s314 + $0x6c] sm:$0xf]
        %v5183 = vld [vmem:[%s314 + $0x70] sm:$0xf]
        %v5184 = vld [vmem:[%s314 + $0x74] sm:$0xf]
        %v5185 = vld [vmem:[%s314 + $0x78] sm:$0xf]
        %v5186 = vld [vmem:[%s314 + $0x7c] sm:$0xf]
        %v5219 = vunpack.c.l.b16 %v5155
        %v5220 = vunpack.c.l.b16 %v5156
        %v5221 = vunpack.c.l.b16 %v5157
        %v5222 = vunpack.c.l.b16 %v5158
        %v5223 = vunpack.c.l.b16 %v5159
        %v5224 = vunpack.c.l.b16 %v5160
        %v5225 = vunpack.c.l.b16 %v5161
        %v5226 = vunpack.c.l.b16 %v5162
        %v5227 = vunpack.c.l.b16 %v5163
        %v5228 = vunpack.c.l.b16 %v5164
        %v5229 = vunpack.c.l.b16 %v5165
        %v5230 = vunpack.c.l.b16 %v5166
        %v5231 = vunpack.c.l.b16 %v5167
        %v5232 = vunpack.c.l.b16 %v5168
        %v5233 = vunpack.c.l.b16 %v5169
        %v5234 = vunpack.c.l.b16 %v5170
        %v5235 = vunpack.c.l.b16 %v5171
        %v5236 = vunpack.c.l.b16 %v5172
        %v5237 = vunpack.c.l.b16 %v5173
        %v5238 = vunpack.c.l.b16 %v5174
        %v5239 = vunpack.c.l.b16 %v5175
        %v5240 = vunpack.c.l.b16 %v5176
        %v5241 = vunpack.c.l.b16 %v5177
        %v5242 = vunpack.c.l.b16 %v5178
        %v5243 = vunpack.c.l.b16 %v5179
        %v5244 = vunpack.c.l.b16 %v5180
        %v5245 = vunpack.c.l.b16 %v5181
        %v5246 = vunpack.c.l.b16 %v5182
        %v5247 = vunpack.c.l.b16 %v5183
        %v5248 = vunpack.c.l.b16 %v5184
        %v5249 = vunpack.c.l.b16 %v5185
        %v5250 = vunpack.c.l.b16 %v5186
        %v5251 = vpack.c.b16 %v5220, %v5219
        %v5252 = vpack.c.b16 %v5222, %v5221
        %v5253 = vpack.c.b16 %v5224, %v5223
        %v5254 = vpack.c.b16 %v5226, %v5225
        %v5255 = vpack.c.b16 %v5228, %v5227
        %v5256 = vpack.c.b16 %v5230, %v5229
        %v5257 = vpack.c.b16 %v5232, %v5231
        %v5258 = vpack.c.b16 %v5234, %v5233
        %v5259 = vpack.c.b16 %v5236, %v5235
        %v5260 = vpack.c.b16 %v5238, %v5237
        %v5261 = vpack.c.b16 %v5240, %v5239
        %v5262 = vpack.c.b16 %v5242, %v5241
        %v5263 = vpack.c.b16 %v5244, %v5243
        %v5264 = vpack.c.b16 %v5246, %v5245
        %v5265 = vpack.c.b16 %v5248, %v5247
        %v5266 = vpack.c.b16 %v5250, %v5249
        %5283 = vmatprep.subr.bf16.mxu0 0
        %5284 = vmatpush1.bf16.msra.mxu0 %v5258
        %5285 = vmatprep.subr.bf16.mxu0 0
        %5286 = vmatpush1.bf16.msra.mxu0 %v5257
        %5287 = vmatprep.subr.bf16.mxu0 0
        %5288 = vmatpush1.bf16.msra.mxu0 %v5256
        %5289 = vmatprep.subr.bf16.mxu0 0
        %5290 = vmatpush1.bf16.msra.mxu0 %v5255
        %5291 = vmatprep.subr.bf16.mxu0 0
        %5292 = vmatpush1.bf16.msra.mxu0 %v5254
        %5293 = vmatprep.subr.bf16.mxu0 0
        %5294 = vmatpush1.bf16.msra.mxu0 %v5253
        %5295 = vmatprep.subr.bf16.mxu0 0
        %5296 = vmatpush1.bf16.msra.mxu0 %v5252
        %5297 = vmatprep.subr.bf16.mxu0 0
        %5298 = vmatpush1.bf16.msra.mxu0 %v5251
        %5299 = vmatprep.subr.bf16.mxu0 0
        %5300 = vmatpush2.bf16.msra.mxu0 %v5266
        %5301 = vmatprep.subr.bf16.mxu0 0
        %5302 = vmatpush2.bf16.msra.mxu0 %v5265
        %5303 = vmatprep.subr.bf16.mxu0 0
        %5304 = vmatpush2.bf16.msra.mxu0 %v5264
        %5305 = vmatprep.subr.bf16.mxu0 0
        %5306 = vmatpush2.bf16.msra.mxu0 %v5263
        %5307 = vmatprep.subr.bf16.mxu0 0
        %5308 = vmatpush2.bf16.msra.mxu0 %v5262
        %5309 = vmatprep.subr.bf16.mxu0 0
        %5310 = vmatpush2.bf16.msra.mxu0 %v5261
        %5311 = vmatprep.subr.bf16.mxu0 0
        %5312 = vmatpush2.bf16.msra.mxu0 %v5260
        %5313 = vmatprep.subr.bf16.mxu0 0
        %5314 = vmatpush2.bf16.msra.mxu0 %v5259
        %5315 = vmatprep.mubr.bf16.mxu0 %v5028
        %5316 = vmatmul.mubr.bf16.gmra.mxu0 %v5027
        %v5317 = vpop.f32.mrf.mxu0
        %v5318 = vadd.f32 0.0, %v5317
        %v5319 = vpop.f32.mrf.mxu0
        %v5320 = vpop.f32.mrf.mxu0
        %v5321 = vadd.f32 0.0, %v5320
        %v5322 = vpop.f32.mrf.mxu0
        %5323 = vmatprep.mubr.bf16.mxu0 %v5030
        %5324 = vmatmul.mubr.bf16.gmra.mxu0 %v5029
        %v5325 = vpop.f32.mrf.mxu0
        %v5326 = vadd.f32 0.0, %v5325
        %v5327 = vpop.f32.mrf.mxu0
        %v5328 = vpop.f32.mrf.mxu0
        %v5329 = vadd.f32 0.0, %v5328
        %v5330 = vpop.f32.mrf.mxu0
        %5331 = vmatprep.mubr.bf16.mxu0 %v5032
        %5332 = vmatmul.mubr.bf16.gmra.mxu0 %v5031
        %v5333 = vpop.f32.mrf.mxu0
        %v5334 = vadd.f32 0.0, %v5333
        %v5335 = vpop.f32.mrf.mxu0
        %v5336 = vpop.f32.mrf.mxu0
        %v5337 = vadd.f32 0.0, %v5336
        %v5338 = vpop.f32.mrf.mxu0
        %5339 = vmatprep.mubr.bf16.mxu0 %v5034
        %5340 = vmatmul.mubr.bf16.gmra.mxu0 %v5033
        %v5341 = vpop.f32.mrf.mxu0
        %v5342 = vadd.f32 0.0, %v5341
        %v5343 = vpop.f32.mrf.mxu0
        %v5344 = vpop.f32.mrf.mxu0
        %v5345 = vadd.f32 0.0, %v5344
        %v5346 = vpop.f32.mrf.mxu0
        %5347 = vmatprep.mubr.bf16.mxu0 %v5036
        %5348 = vmatmul.mubr.bf16.gmra.mxu0 %v5035
        %v5349 = vpop.f32.mrf.mxu0
        %v5350 = vadd.f32 0.0, %v5349
        %v5351 = vpop.f32.mrf.mxu0
        %v5352 = vpop.f32.mrf.mxu0
        %v5353 = vadd.f32 0.0, %v5352
        %v5354 = vpop.f32.mrf.mxu0
        %5355 = vmatprep.mubr.bf16.mxu0 %v5038
        %5356 = vmatmul.mubr.bf16.gmra.mxu0 %v5037
        %v5357 = vpop.f32.mrf.mxu0
        %v5358 = vadd.f32 0.0, %v5357
        %v5359 = vpop.f32.mrf.mxu0
        %v5360 = vpop.f32.mrf.mxu0
        %v5361 = vadd.f32 0.0, %v5360
        %v5362 = vpop.f32.mrf.mxu0
        %5363 = vmatprep.mubr.bf16.mxu0 %v5040
        %5364 = vmatmul.mubr.bf16.gmra.mxu0 %v5039
        %v5365 = vpop.f32.mrf.mxu0
        %v5366 = vadd.f32 0.0, %v5365
        %v5367 = vpop.f32.mrf.mxu0
        %v5368 = vpop.f32.mrf.mxu0
        %v5369 = vadd.f32 0.0, %v5368
        %v5370 = vpop.f32.mrf.mxu0
        %5371 = vmatprep.mubr.bf16.mxu0 %v5042
        %5372 = vmatmul.mubr.bf16.gmra.mxu0 %v5041
        %v5373 = vpop.f32.mrf.mxu0
        %v5374 = vadd.f32 0.0, %v5373
        %v5375 = vpop.f32.mrf.mxu0
        %v5376 = vpop.f32.mrf.mxu0
        %v5377 = vadd.f32 0.0, %v5376
        %v5378 = vpop.f32.mrf.mxu0
        %5379 = vmatprep.mubr.bf16.mxu0 %v5044
        %5380 = vmatmul.mubr.bf16.gmra.mxu0 %v5043
        %v5381 = vpop.f32.mrf.mxu0
        %v5382 = vadd.f32 0.0, %v5381
        %v5383 = vpop.f32.mrf.mxu0
        %v5384 = vpop.f32.mrf.mxu0
        %v5385 = vadd.f32 0.0, %v5384
        %v5386 = vpop.f32.mrf.mxu0
        %5387 = vmatprep.mubr.bf16.mxu0 %v5046
        %5388 = vmatmul.mubr.bf16.gmra.mxu0 %v5045
        %v5389 = vpop.f32.mrf.mxu0
        %v5390 = vadd.f32 0.0, %v5389
        %v5391 = vpop.f32.mrf.mxu0
        %v5392 = vpop.f32.mrf.mxu0
        %v5393 = vadd.f32 0.0, %v5392
        %v5394 = vpop.f32.mrf.mxu0
        %5395 = vmatprep.mubr.bf16.mxu0 %v5048
        %5396 = vmatmul.mubr.bf16.gmra.mxu0 %v5047
        %v5397 = vpop.f32.mrf.mxu0
        %v5398 = vadd.f32 0.0, %v5397
        %v5399 = vpop.f32.mrf.mxu0
        %v5400 = vpop.f32.mrf.mxu0
        %v5401 = vadd.f32 0.0, %v5400
        %v5402 = vpop.f32.mrf.mxu0
        %5403 = vmatprep.mubr.bf16.mxu0 %v5050
        %5404 = vmatmul.mubr.bf16.gmra.mxu0 %v5049
        %v5405 = vpop.f32.mrf.mxu0
        %v5406 = vadd.f32 0.0, %v5405
        %v5407 = vpop.f32.mrf.mxu0
        %v5408 = vpop.f32.mrf.mxu0
        %v5409 = vadd.f32 0.0, %v5408
        %v5410 = vpop.f32.mrf.mxu0
        %5411 = vmatprep.mubr.bf16.mxu0 %v5052
        %5412 = vmatmul.mubr.bf16.gmra.mxu0 %v5051
        %v5413 = vpop.f32.mrf.mxu0
        %v5414 = vadd.f32 0.0, %v5413
        %v5415 = vpop.f32.mrf.mxu0
        %v5416 = vpop.f32.mrf.mxu0
        %v5417 = vadd.f32 0.0, %v5416
        %v5418 = vpop.f32.mrf.mxu0
        %5419 = vmatprep.mubr.bf16.mxu0 %v5054
        %5420 = vmatmul.mubr.bf16.gmra.mxu0 %v5053
        %v5421 = vpop.f32.mrf.mxu0
        %v5422 = vadd.f32 0.0, %v5421
        %v5423 = vpop.f32.mrf.mxu0
        %v5424 = vpop.f32.mrf.mxu0
        %v5425 = vadd.f32 0.0, %v5424
        %v5426 = vpop.f32.mrf.mxu0
        %5427 = vmatprep.mubr.bf16.mxu0 %v5056
        %5428 = vmatmul.mubr.bf16.gmra.mxu0 %v5055
        %v5429 = vpop.f32.mrf.mxu0
        %v5430 = vadd.f32 0.0, %v5429
        %v5431 = vpop.f32.mrf.mxu0
        %v5432 = vpop.f32.mrf.mxu0
        %v5433 = vadd.f32 0.0, %v5432
        %v5434 = vpop.f32.mrf.mxu0
        %5435 = vmatprep.mubr.bf16.mxu0 %v5058
        %5436 = vmatmul.mubr.bf16.gmra.mxu0 %v5057
        %v5437 = vpop.f32.mrf.mxu0
        %v5438 = vadd.f32 0.0, %v5437
        %v5439 = vpop.f32.mrf.mxu0
        %v5440 = vpop.f32.mrf.mxu0
        %v5441 = vadd.f32 0.0, %v5440
        %v5442 = vpop.f32.mrf.mxu0
        %5443 = vmatprep.mubr.bf16.mxu0 %v5060
        %5444 = vmatmul.mubr.bf16.gmra.mxu0 %v5059
        %v5445 = vpop.f32.mrf.mxu0
        %v5446 = vadd.f32 0.0, %v5445
        %v5447 = vpop.f32.mrf.mxu0
        %v5448 = vpop.f32.mrf.mxu0
        %v5449 = vadd.f32 0.0, %v5448
        %v5450 = vpop.f32.mrf.mxu0
        %5451 = vmatprep.mubr.bf16.mxu0 %v5062
        %5452 = vmatmul.mubr.bf16.gmra.mxu0 %v5061
        %v5453 = vpop.f32.mrf.mxu0
        %v5454 = vadd.f32 0.0, %v5453
        %v5455 = vpop.f32.mrf.mxu0
        %v5456 = vpop.f32.mrf.mxu0
        %v5457 = vadd.f32 0.0, %v5456
        %v5458 = vpop.f32.mrf.mxu0
        %5459 = vmatprep.mubr.bf16.mxu0 %v5064
        %5460 = vmatmul.mubr.bf16.gmra.mxu0 %v5063
        %v5461 = vpop.f32.mrf.mxu0
        %v5462 = vadd.f32 0.0, %v5461
        %v5463 = vpop.f32.mrf.mxu0
        %v5464 = vpop.f32.mrf.mxu0
        %v5465 = vadd.f32 0.0, %v5464
        %v5466 = vpop.f32.mrf.mxu0
        %5467 = vmatprep.mubr.bf16.mxu0 %v5066
        %5468 = vmatmul.mubr.bf16.gmra.mxu0 %v5065
        %v5469 = vpop.f32.mrf.mxu0
        %v5470 = vadd.f32 0.0, %v5469
        %v5471 = vpop.f32.mrf.mxu0
        %v5472 = vpop.f32.mrf.mxu0
        %v5473 = vadd.f32 0.0, %v5472
        %v5474 = vpop.f32.mrf.mxu0
        %5475 = vmatprep.mubr.bf16.mxu0 %v5068
        %5476 = vmatmul.mubr.bf16.gmra.mxu0 %v5067
        %v5477 = vpop.f32.mrf.mxu0
        %v5478 = vadd.f32 0.0, %v5477
        %v5479 = vpop.f32.mrf.mxu0
        %v5480 = vpop.f32.mrf.mxu0
        %v5481 = vadd.f32 0.0, %v5480
        %v5482 = vpop.f32.mrf.mxu0
        %5483 = vmatprep.mubr.bf16.mxu0 %v5070
        %5484 = vmatmul.mubr.bf16.gmra.mxu0 %v5069
        %v5485 = vpop.f32.mrf.mxu0
        %v5486 = vadd.f32 0.0, %v5485
        %v5487 = vpop.f32.mrf.mxu0
        %v5488 = vpop.f32.mrf.mxu0
        %v5489 = vadd.f32 0.0, %v5488
        %v5490 = vpop.f32.mrf.mxu0
        %5491 = vmatprep.mubr.bf16.mxu0 %v5072
        %5492 = vmatmul.mubr.bf16.gmra.mxu0 %v5071
        %v5493 = vpop.f32.mrf.mxu0
        %v5494 = vadd.f32 0.0, %v5493
        %v5495 = vpop.f32.mrf.mxu0
        %v5496 = vpop.f32.mrf.mxu0
        %v5497 = vadd.f32 0.0, %v5496
        %v5498 = vpop.f32.mrf.mxu0
        %5499 = vmatprep.mubr.bf16.mxu0 %v5074
        %5500 = vmatmul.mubr.bf16.gmra.mxu0 %v5073
        %v5501 = vpop.f32.mrf.mxu0
        %v5502 = vadd.f32 0.0, %v5501
        %v5503 = vpop.f32.mrf.mxu0
        %v5504 = vpop.f32.mrf.mxu0
        %v5505 = vadd.f32 0.0, %v5504
        %v5506 = vpop.f32.mrf.mxu0
        %5507 = vmatprep.mubr.bf16.mxu0 %v5076
        %5508 = vmatmul.mubr.bf16.gmra.mxu0 %v5075
        %v5509 = vpop.f32.mrf.mxu0
        %v5510 = vadd.f32 0.0, %v5509
        %v5511 = vpop.f32.mrf.mxu0
        %v5512 = vpop.f32.mrf.mxu0
        %v5513 = vadd.f32 0.0, %v5512
        %v5514 = vpop.f32.mrf.mxu0
        %5515 = vmatprep.mubr.bf16.mxu0 %v5078
        %5516 = vmatmul.mubr.bf16.gmra.mxu0 %v5077
        %v5517 = vpop.f32.mrf.mxu0
        %v5518 = vadd.f32 0.0, %v5517
        %v5519 = vpop.f32.mrf.mxu0
        %v5520 = vpop.f32.mrf.mxu0
        %v5521 = vadd.f32 0.0, %v5520
        %v5522 = vpop.f32.mrf.mxu0
        %5523 = vmatprep.mubr.bf16.mxu0 %v5080
        %5524 = vmatmul.mubr.bf16.gmra.mxu0 %v5079
        %v5525 = vpop.f32.mrf.mxu0
        %v5526 = vadd.f32 0.0, %v5525
        %v5527 = vpop.f32.mrf.mxu0
        %v5528 = vpop.f32.mrf.mxu0
        %v5529 = vadd.f32 0.0, %v5528
        %v5530 = vpop.f32.mrf.mxu0
        %5531 = vmatprep.mubr.bf16.mxu0 %v5082
        %5532 = vmatmul.mubr.bf16.gmra.mxu0 %v5081
        %v5533 = vpop.f32.mrf.mxu0
        %v5534 = vadd.f32 0.0, %v5533
        %v5535 = vpop.f32.mrf.mxu0
        %v5536 = vpop.f32.mrf.mxu0
        %v5537 = vadd.f32 0.0, %v5536
        %v5538 = vpop.f32.mrf.mxu0
        %5539 = vmatprep.mubr.bf16.mxu0 %v5084
        %5540 = vmatmul.mubr.bf16.gmra.mxu0 %v5083
        %v5541 = vpop.f32.mrf.mxu0
        %v5542 = vadd.f32 0.0, %v5541
        %v5543 = vpop.f32.mrf.mxu0
        %v5544 = vpop.f32.mrf.mxu0
        %v5545 = vadd.f32 0.0, %v5544
        %v5546 = vpop.f32.mrf.mxu0
        %5547 = vmatprep.mubr.bf16.mxu0 %v5086
        %5548 = vmatmul.mubr.bf16.gmra.mxu0 %v5085
        %v5549 = vpop.f32.mrf.mxu0
        %v5550 = vadd.f32 0.0, %v5549
        %v5551 = vpop.f32.mrf.mxu0
        %v5552 = vpop.f32.mrf.mxu0
        %v5553 = vadd.f32 0.0, %v5552
        %v5554 = vpop.f32.mrf.mxu0
        %5555 = vmatprep.mubr.bf16.mxu0 %v5088
        %5556 = vmatmul.mubr.bf16.gmra.mxu0 %v5087
        %v5557 = vpop.f32.mrf.mxu0
        %v5558 = vadd.f32 0.0, %v5557
        %v5559 = vpop.f32.mrf.mxu0
        %v5560 = vpop.f32.mrf.mxu0
        %v5561 = vadd.f32 0.0, %v5560
        %v5562 = vpop.f32.mrf.mxu0
        %5563 = vmatprep.mubr.bf16.mxu0 %v5090
        %5564 = vmatmul.mubr.bf16.gmra.mxu0 %v5089
        %v5565 = vpop.f32.mrf.mxu0
        %v5566 = vadd.f32 0.0, %v5565
        %v5567 = vpop.f32.mrf.mxu0
        %v5568 = vpop.f32.mrf.mxu0
        %v5569 = vadd.f32 0.0, %v5568
        %v5570 = vpop.f32.mrf.mxu0
        %5571 = vdwg.mxu0
        %v5572 = vadd.f32 %v5091, %v5318
        %v5573 = vadd.f32 %v5092, %v5321
        %v5574 = vadd.f32 %v5093, %v5326
        %v5575 = vadd.f32 %v5094, %v5329
        %v5576 = vadd.f32 %v5095, %v5334
        %v5577 = vadd.f32 %v5096, %v5337
        %v5578 = vadd.f32 %v5097, %v5342
        %v5579 = vadd.f32 %v5098, %v5345
        %v5580 = vadd.f32 %v5099, %v5350
        %v5581 = vadd.f32 %v5100, %v5353
        %v5582 = vadd.f32 %v5101, %v5358
        %v5583 = vadd.f32 %v5102, %v5361
        %v5584 = vadd.f32 %v5103, %v5366
        %v5585 = vadd.f32 %v5104, %v5369
        %v5586 = vadd.f32 %v5105, %v5374
        %v5587 = vadd.f32 %v5106, %v5377
        %v5588 = vadd.f32 %v5107, %v5382
        %v5589 = vadd.f32 %v5108, %v5385
        %v5590 = vadd.f32 %v5109, %v5390
        %v5591 = vadd.f32 %v5110, %v5393
        %v5592 = vadd.f32 %v5111, %v5398
        %v5593 = vadd.f32 %v5112, %v5401
        %v5594 = vadd.f32 %v5113, %v5406
        %v5595 = vadd.f32 %v5114, %v5409
        %v5596 = vadd.f32 %v5115, %v5414
        %v5597 = vadd.f32 %v5116, %v5417
        %v5598 = vadd.f32 %v5117, %v5422
        %v5599 = vadd.f32 %v5118, %v5425
        %v5600 = vadd.f32 %v5119, %v5430
        %v5601 = vadd.f32 %v5120, %v5433
        %v5602 = vadd.f32 %v5121, %v5438
        %v5603 = vadd.f32 %v5122, %v5441
        %v5604 = vadd.f32 %v5123, %v5446
        %v5605 = vadd.f32 %v5124, %v5449
        %v5606 = vadd.f32 %v5125, %v5454
        %v5607 = vadd.f32 %v5126, %v5457
        %v5608 = vadd.f32 %v5127, %v5462
        %v5609 = vadd.f32 %v5128, %v5465
        %v5610 = vadd.f32 %v5129, %v5470
        %v5611 = vadd.f32 %v5130, %v5473
        %v5612 = vadd.f32 %v5131, %v5478
        %v5613 = vadd.f32 %v5132, %v5481
        %v5614 = vadd.f32 %v5133, %v5486
        %v5615 = vadd.f32 %v5134, %v5489
        %v5616 = vadd.f32 %v5135, %v5494
        %v5617 = vadd.f32 %v5136, %v5497
        %v5618 = vadd.f32 %v5137, %v5502
        %v5619 = vadd.f32 %v5138, %v5505
        %v5620 = vadd.f32 %v5139, %v5510
        %v5621 = vadd.f32 %v5140, %v5513
        %v5622 = vadd.f32 %v5141, %v5518
        %v5623 = vadd.f32 %v5142, %v5521
        %v5624 = vadd.f32 %v5143, %v5526
        %v5625 = vadd.f32 %v5144, %v5529
        %v5626 = vadd.f32 %v5145, %v5534
        %v5627 = vadd.f32 %v5146, %v5537
        %v5628 = vadd.f32 %v5147, %v5542
        %v5629 = vadd.f32 %v5148, %v5545
        %v5630 = vadd.f32 %v5149, %v5550
        %v5631 = vadd.f32 %v5150, %v5553
        %v5632 = vadd.f32 %v5151, %v5558
        %v5633 = vadd.f32 %v5152, %v5561
        %v5634 = vadd.f32 %v5153, %v5566
        %v5635 = vadd.f32 %v5154, %v5569
        %5636 = vst [vmem:[#allocation2] sm:$0xff] %v5572
        %5637 = vst [vmem:[#allocation2 + $0x8] sm:$0xff] %v5573
        %5638 = vst [vmem:[#allocation2 + $0x10] sm:$0xff] %v5574
        %5639 = vst [vmem:[#allocation2 + $0x18] sm:$0xff] %v5575
        %5640 = vst [vmem:[#allocation2 + $0x20] sm:$0xff] %v5576
        %5641 = vst [vmem:[#allocation2 + $0x28] sm:$0xff] %v5577
        %5642 = vst [vmem:[#allocation2 + $0x30] sm:$0xff] %v5578
        %5643 = vst [vmem:[#allocation2 + $0x38] sm:$0xff] %v5579
        %5644 = vst [vmem:[#allocation2 + $0x40] sm:$0xff] %v5580
        %5645 = vst [vmem:[#allocation2 + $0x48] sm:$0xff] %v5581
        %5646 = vst [vmem:[#allocation2 + $0x50] sm:$0xff] %v5582
        %5647 = vst [vmem:[#allocation2 + $0x58] sm:$0xff] %v5583
        %5648 = vst [vmem:[#allocation2 + $0x60] sm:$0xff] %v5584
        %5649 = vst [vmem:[#allocation2 + $0x68] sm:$0xff] %v5585
        %5650 = vst [vmem:[#allocation2 + $0x70] sm:$0xff] %v5586
        %5651 = vst [vmem:[#allocation2 + $0x78] sm:$0xff] %v5587
        %5652 = vst [vmem:[#allocation2 + $0x80] sm:$0xff] %v5588
        %5653 = vst [vmem:[#allocation2 + $0x88] sm:$0xff] %v5589
        %5654 = vst [vmem:[#allocation2 + $0x90] sm:$0xff] %v5590
        %5655 = vst [vmem:[#allocation2 + $0x98] sm:$0xff] %v5591
        %5656 = vst [vmem:[#allocation2 + $0xa0] sm:$0xff] %v5592
        %5657 = vst [vmem:[#allocation2 + $0xa8] sm:$0xff] %v5593
        %5658 = vst [vmem:[#allocation2 + $0xb0] sm:$0xff] %v5594
        %5659 = vst [vmem:[#allocation2 + $0xb8] sm:$0xff] %v5595
        %5660 = vst [vmem:[#allocation2 + $0xc0] sm:$0xff] %v5596
        %5661 = vst [vmem:[#allocation2 + $0xc8] sm:$0xff] %v5597
        %5662 = vst [vmem:[#allocation2 + $0xd0] sm:$0xff] %v5598
        %5663 = vst [vmem:[#allocation2 + $0xd8] sm:$0xff] %v5599
        %5664 = vst [vmem:[#allocation2 + $0xe0] sm:$0xff] %v5600
        %5665 = vst [vmem:[#allocation2 + $0xe8] sm:$0xff] %v5601
        %5666 = vst [vmem:[#allocation2 + $0xf0] sm:$0xff] %v5602
        %5667 = vst [vmem:[#allocation2 + $0xf8] sm:$0xff] %v5603
        %5668 = vst [vmem:[#allocation2 + $0x100] sm:$0xff] %v5604
        %5669 = vst [vmem:[#allocation2 + $0x108] sm:$0xff] %v5605
        %5670 = vst [vmem:[#allocation2 + $0x110] sm:$0xff] %v5606
        %5671 = vst [vmem:[#allocation2 + $0x118] sm:$0xff] %v5607
        %5672 = vst [vmem:[#allocation2 + $0x120] sm:$0xff] %v5608
        %5673 = vst [vmem:[#allocation2 + $0x128] sm:$0xff] %v5609
        %5674 = vst [vmem:[#allocation2 + $0x130] sm:$0xff] %v5610
        %5675 = vst [vmem:[#allocation2 + $0x138] sm:$0xff] %v5611
        %5676 = vst [vmem:[#allocation2 + $0x140] sm:$0xff] %v5612
        %5677 = vst [vmem:[#allocation2 + $0x148] sm:$0xff] %v5613
        %5678 = vst [vmem:[#allocation2 + $0x150] sm:$0xff] %v5614
        %5679 = vst [vmem:[#allocation2 + $0x158] sm:$0xff] %v5615
        %5680 = vst [vmem:[#allocation2 + $0x160] sm:$0xff] %v5616
        %5681 = vst [vmem:[#allocation2 + $0x168] sm:$0xff] %v5617
        %5682 = vst [vmem:[#allocation2 + $0x170] sm:$0xff] %v5618
        %5683 = vst [vmem:[#allocation2 + $0x178] sm:$0xff] %v5619
        %5684 = vst [vmem:[#allocation2 + $0x180] sm:$0xff] %v5620
        %5685 = vst [vmem:[#allocation2 + $0x188] sm:$0xff] %v5621
        %5686 = vst [vmem:[#allocation2 + $0x190] sm:$0xff] %v5622
        %5687 = vst [vmem:[#allocation2 + $0x198] sm:$0xff] %v5623
        %5688 = vst [vmem:[#allocation2 + $0x1a0] sm:$0xff] %v5624
        %5689 = vst [vmem:[#allocation2 + $0x1a8] sm:$0xff] %v5625
        %5690 = vst [vmem:[#allocation2 + $0x1b0] sm:$0xff] %v5626
        %5691 = vst [vmem:[#allocation2 + $0x1b8] sm:$0xff] %v5627
        %5692 = vst [vmem:[#allocation2 + $0x1c0] sm:$0xff] %v5628
        %5693 = vst [vmem:[#allocation2 + $0x1c8] sm:$0xff] %v5629
        %5694 = vst [vmem:[#allocation2 + $0x1d0] sm:$0xff] %v5630
        %5695 = vst [vmem:[#allocation2 + $0x1d8] sm:$0xff] %v5631
        %5696 = vst [vmem:[#allocation2 + $0x1e0] sm:$0xff] %v5632
        %5697 = vst [vmem:[#allocation2 + $0x1e8] sm:$0xff] %v5633
        %5698 = vst [vmem:[#allocation2 + $0x1f0] sm:$0xff] %v5634
        %5699 = vst [vmem:[#allocation2 + $0x1f8] sm:$0xff] %v5635
        %p5700 = scmp.eq.s32.totalorder %s29, 1
        // Predicated region
        $region61: #{tpu_custom_call.1} parent=39 // pred_check
          %p5701 = pneg %p5700
        $region62: #{tpu_custom_call.1} parent=39 // pred_check_branch
          %5703 = sbr.rel (%p5701) target = $region64
        $region63: #{tpu_custom_call.1} parent=39 // pred_region
          %v5704 = vld [vmem:[#allocation2] sm:$0xff]
          %v5705 = vld [vmem:[#allocation2 + $0x8] sm:$0xff]
          %v5706 = vld [vmem:[#allocation2 + $0x10] sm:$0xff]
          %v5707 = vld [vmem:[#allocation2 + $0x18] sm:$0xff]
          %v5708 = vld [vmem:[#allocation2 + $0x20] sm:$0xff]
          %v5709 = vld [vmem:[#allocation2 + $0x28] sm:$0xff]
          %v5710 = vld [vmem:[#allocation2 + $0x30] sm:$0xff]
          %v5711 = vld [vmem:[#allocation2 + $0x38] sm:$0xff]
          %v5712 = vld [vmem:[#allocation2 + $0x40] sm:$0xff]
          %v5713 = vld [vmem:[#allocation2 + $0x48] sm:$0xff]
          %v5714 = vld [vmem:[#allocation2 + $0x50] sm:$0xff]
          %v5715 = vld [vmem:[#allocation2 + $0x58] sm:$0xff]
          %v5716 = vld [vmem:[#allocation2 + $0x60] sm:$0xff]
          %v5717 = vld [vmem:[#allocation2 + $0x68] sm:$0xff]
          %v5718 = vld [vmem:[#allocation2 + $0x70] sm:$0xff]
          %v5719 = vld [vmem:[#allocation2 + $0x78] sm:$0xff]
          %v5720 = vld [vmem:[#allocation2 + $0x80] sm:$0xff]
          %v5721 = vld [vmem:[#allocation2 + $0x88] sm:$0xff]
          %v5722 = vld [vmem:[#allocation2 + $0x90] sm:$0xff]
          %v5723 = vld [vmem:[#allocation2 + $0x98] sm:$0xff]
          %v5724 = vld [vmem:[#allocation2 + $0xa0] sm:$0xff]
          %v5725 = vld [vmem:[#allocation2 + $0xa8] sm:$0xff]
          %v5726 = vld [vmem:[#allocation2 + $0xb0] sm:$0xff]
          %v5727 = vld [vmem:[#allocation2 + $0xb8] sm:$0xff]
          %v5728 = vld [vmem:[#allocation2 + $0xc0] sm:$0xff]
          %v5729 = vld [vmem:[#allocation2 + $0xc8] sm:$0xff]
          %v5730 = vld [vmem:[#allocation2 + $0xd0] sm:$0xff]
          %v5731 = vld [vmem:[#allocation2 + $0xd8] sm:$0xff]
          %v5732 = vld [vmem:[#allocation2 + $0xe0] sm:$0xff]
          %v5733 = vld [vmem:[#allocation2 + $0xe8] sm:$0xff]
          %v5734 = vld [vmem:[#allocation2 + $0xf0] sm:$0xff]
          %v5735 = vld [vmem:[#allocation2 + $0xf8] sm:$0xff]
          %v5736 = vld [vmem:[#allocation2 + $0x100] sm:$0xff]
          %v5737 = vld [vmem:[#allocation2 + $0x108] sm:$0xff]
          %v5738 = vld [vmem:[#allocation2 + $0x110] sm:$0xff]
          %v5739 = vld [vmem:[#allocation2 + $0x118] sm:$0xff]
          %v5740 = vld [vmem:[#allocation2 + $0x120] sm:$0xff]
          %v5741 = vld [vmem:[#allocation2 + $0x128] sm:$0xff]
          %v5742 = vld [vmem:[#allocation2 + $0x130] sm:$0xff]
          %v5743 = vld [vmem:[#allocation2 + $0x138] sm:$0xff]
          %v5744 = vld [vmem:[#allocation2 + $0x140] sm:$0xff]
          %v5745 = vld [vmem:[#allocation2 + $0x148] sm:$0xff]
          %v5746 = vld [vmem:[#allocation2 + $0x150] sm:$0xff]
          %v5747 = vld [vmem:[#allocation2 + $0x158] sm:$0xff]
          %v5748 = vld [vmem:[#allocation2 + $0x160] sm:$0xff]
          %v5749 = vld [vmem:[#allocation2 + $0x168] sm:$0xff]
          %v5750 = vld [vmem:[#allocation2 + $0x170] sm:$0xff]
          %v5751 = vld [vmem:[#allocation2 + $0x178] sm:$0xff]
          %v5752 = vld [vmem:[#allocation2 + $0x180] sm:$0xff]
          %v5753 = vld [vmem:[#allocation2 + $0x188] sm:$0xff]
          %v5754 = vld [vmem:[#allocation2 + $0x190] sm:$0xff]
          %v5755 = vld [vmem:[#allocation2 + $0x198] sm:$0xff]
          %v5756 = vld [vmem:[#allocation2 + $0x1a0] sm:$0xff]
          %v5757 = vld [vmem:[#allocation2 + $0x1a8] sm:$0xff]
          %v5758 = vld [vmem:[#allocation2 + $0x1b0] sm:$0xff]
          %v5759 = vld [vmem:[#allocation2 + $0x1b8] sm:$0xff]
          %v5760 = vld [vmem:[#allocation2 + $0x1c0] sm:$0xff]
          %v5761 = vld [vmem:[#allocation2 + $0x1c8] sm:$0xff]
          %v5762 = vld [vmem:[#allocation2 + $0x1d0] sm:$0xff]
          %v5763 = vld [vmem:[#allocation2 + $0x1d8] sm:$0xff]
          %v5764 = vld [vmem:[#allocation2 + $0x1e0] sm:$0xff]
          %v5765 = vld [vmem:[#allocation2 + $0x1e8] sm:$0xff]
          %v5766 = vld [vmem:[#allocation2 + $0x1f0] sm:$0xff]
          %v5767 = vld [vmem:[#allocation2 + $0x1f8] sm:$0xff]
          %5768 = vst [vmem:[#allocation11] sm:$0xff] %v5704
          %5769 = vst [vmem:[#allocation11 + $0x8] sm:$0xff] %v5705
          %5770 = vst [vmem:[#allocation11 + $0x10] sm:$0xff] %v5706
          %5771 = vst [vmem:[#allocation11 + $0x18] sm:$0xff] %v5707
          %5772 = vst [vmem:[#allocation11 + $0x20] sm:$0xff] %v5708
          %5773 = vst [vmem:[#allocation11 + $0x28] sm:$0xff] %v5709
          %5774 = vst [vmem:[#allocation11 + $0x30] sm:$0xff] %v5710
          %5775 = vst [vmem:[#allocation11 + $0x38] sm:$0xff] %v5711
          %5776 = vst [vmem:[#allocation11 + $0x40] sm:$0xff] %v5712
          %5777 = vst [vmem:[#allocation11 + $0x48] sm:$0xff] %v5713
          %5778 = vst [vmem:[#allocation11 + $0x50] sm:$0xff] %v5714
          %5779 = vst [vmem:[#allocation11 + $0x58] sm:$0xff] %v5715
          %5780 = vst [vmem:[#allocation11 + $0x60] sm:$0xff] %v5716
          %5781 = vst [vmem:[#allocation11 + $0x68] sm:$0xff] %v5717
          %5782 = vst [vmem:[#allocation11 + $0x70] sm:$0xff] %v5718
          %5783 = vst [vmem:[#allocation11 + $0x78] sm:$0xff] %v5719
          %5784 = vst [vmem:[#allocation11 + $0x80] sm:$0xff] %v5720
          %5785 = vst [vmem:[#allocation11 + $0x88] sm:$0xff] %v5721
          %5786 = vst [vmem:[#allocation11 + $0x90] sm:$0xff] %v5722
          %5787 = vst [vmem:[#allocation11 + $0x98] sm:$0xff] %v5723
          %5788 = vst [vmem:[#allocation11 + $0xa0] sm:$0xff] %v5724
          %5789 = vst [vmem:[#allocation11 + $0xa8] sm:$0xff] %v5725
          %5790 = vst [vmem:[#allocation11 + $0xb0] sm:$0xff] %v5726
          %5791 = vst [vmem:[#allocation11 + $0xb8] sm:$0xff] %v5727
          %5792 = vst [vmem:[#allocation11 + $0xc0] sm:$0xff] %v5728
          %5793 = vst [vmem:[#allocation11 + $0xc8] sm:$0xff] %v5729
          %5794 = vst [vmem:[#allocation11 + $0xd0] sm:$0xff] %v5730
          %5795 = vst [vmem:[#allocation11 + $0xd8] sm:$0xff] %v5731
          %5796 = vst [vmem:[#allocation11 + $0xe0] sm:$0xff] %v5732
          %5797 = vst [vmem:[#allocation11 + $0xe8] sm:$0xff] %v5733
          %5798 = vst [vmem:[#allocation11 + $0xf0] sm:$0xff] %v5734
          %5799 = vst [vmem:[#allocation11 + $0xf8] sm:$0xff] %v5735
          %5800 = vst [vmem:[#allocation11 + $0x100] sm:$0xff] %v5736
          %5801 = vst [vmem:[#allocation11 + $0x108] sm:$0xff] %v5737
          %5802 = vst [vmem:[#allocation11 + $0x110] sm:$0xff] %v5738
          %5803 = vst [vmem:[#allocation11 + $0x118] sm:$0xff] %v5739
          %5804 = vst [vmem:[#allocation11 + $0x120] sm:$0xff] %v5740
          %5805 = vst [vmem:[#allocation11 + $0x128] sm:$0xff] %v5741
          %5806 = vst [vmem:[#allocation11 + $0x130] sm:$0xff] %v5742
          %5807 = vst [vmem:[#allocation11 + $0x138] sm:$0xff] %v5743
          %5808 = vst [vmem:[#allocation11 + $0x140] sm:$0xff] %v5744
          %5809 = vst [vmem:[#allocation11 + $0x148] sm:$0xff] %v5745
          %5810 = vst [vmem:[#allocation11 + $0x150] sm:$0xff] %v5746
          %5811 = vst [vmem:[#allocation11 + $0x158] sm:$0xff] %v5747
          %5812 = vst [vmem:[#allocation11 + $0x160] sm:$0xff] %v5748
          %5813 = vst [vmem:[#allocation11 + $0x168] sm:$0xff] %v5749
          %5814 = vst [vmem:[#allocation11 + $0x170] sm:$0xff] %v5750
          %5815 = vst [vmem:[#allocation11 + $0x178] sm:$0xff] %v5751
          %5816 = vst [vmem:[#allocation11 + $0x180] sm:$0xff] %v5752
          %5817 = vst [vmem:[#allocation11 + $0x188] sm:$0xff] %v5753
          %5818 = vst [vmem:[#allocation11 + $0x190] sm:$0xff] %v5754
          %5819 = vst [vmem:[#allocation11 + $0x198] sm:$0xff] %v5755
          %5820 = vst [vmem:[#allocation11 + $0x1a0] sm:$0xff] %v5756
          %5821 = vst [vmem:[#allocation11 + $0x1a8] sm:$0xff] %v5757
          %5822 = vst [vmem:[#allocation11 + $0x1b0] sm:$0xff] %v5758
          %5823 = vst [vmem:[#allocation11 + $0x1b8] sm:$0xff] %v5759
          %5824 = vst [vmem:[#allocation11 + $0x1c0] sm:$0xff] %v5760
          %5825 = vst [vmem:[#allocation11 + $0x1c8] sm:$0xff] %v5761
          %5826 = vst [vmem:[#allocation11 + $0x1d0] sm:$0xff] %v5762
          %5827 = vst [vmem:[#allocation11 + $0x1d8] sm:$0xff] %v5763
          %5828 = vst [vmem:[#allocation11 + $0x1e0] sm:$0xff] %v5764
          %5829 = vst [vmem:[#allocation11 + $0x1e8] sm:$0xff] %v5765
          %5830 = vst [vmem:[#allocation11 + $0x1f0] sm:$0xff] %v5766
          %5831 = vst [vmem:[#allocation11 + $0x1f8] sm:$0xff] %v5767
        $region64: #{tpu_custom_call.1} parent=39 // pred_fallthru
          _
        // Predicated region
        $region65: #{tpu_custom_call.1} parent=39 // pred_check
          %p5832 = pneg %p179
        $region66: #{tpu_custom_call.1} parent=39 // pred_check_branch
          %5834 = sbr.rel (%p5832) target = $region68
        $region67: #{tpu_custom_call.1} parent=39 // pred_region
          %s5835 = smul.u32 64, %s28
          %s5837 = ssub.s32 8192, 8192
          %5838 = vsyncadd [#allocation5], %s5837
          %s5839 = smul.addr %s5835, 128
          %s5840 = scalar_lea.hbm %s5, %s5839
          %s5841 = sshll.u32 [#allocation11], 4
          %s5842 = int_to_ptr.vmem [resolvable:$true] %s5841
          %5847 = dma.vmem_to_hbm [thread:$0]  %s5842, 8192, %s5840, [#allocation5], 128, 128, 8
        $region68: #{tpu_custom_call.1} parent=39 // pred_fallthru
          _
        // Predicated region
        $region69: #{tpu_custom_call.1} parent=39 // pred_check
          %p5848 = pneg %p179
        $region70: #{tpu_custom_call.1} parent=39 // pred_check_branch
          %5850 = sbr.rel (%p5848) target = $region72
        $region71: #{tpu_custom_call.1} parent=39 // pred_region
          %5851 = dma.done [#allocation5], 8192
        $region72: #{tpu_custom_call.1} parent=39 // pred_fallthru
          _
      $region40: #{tpu_custom_call.1} parent=5 // pred_fallthru
        _
      %p5852 = scmp.le.s32.totalorder 2, %s19
      // Predicated region
      $region73: #{tpu_custom_call.1} parent=5 // pred_check
        %p5853 = pneg %p5852
      $region74: #{tpu_custom_call.1} parent=5 // pred_check_branch
        %5855 = sbr.rel (%p5853) target = $region76
      $region75: #{tpu_custom_call.1} parent=5 // pred_region
        %s5856 = ssub.s32 %s19, 2
      $region76: #{tpu_custom_call.1} parent=5 // pred_fallthru
        _
    $region6: #{tpu_custom_call.1} parent=1 // loop_footer
      %s23 = sadd.s32 1, %s19
    $region7: #{tpu_custom_call.1} parent=1 // loop_footer_branch
      %18 = sbr.rel target = $region3
    $region8: #{tpu_custom_call.1} parent=1 // loop_exit
      _
    %5857 = vsyncpa [#allocation4], 1
    %s5858 = scalar_lea.sflag [#allocation4], 1
    %5859 = vsyncpa %s5858, 1
    %5860 = vsyncpa [#allocation7], 1
    %s5861 = scalar_lea.sflag [#allocation7], 1
    %5862 = vsyncpa %s5861, 1
    %5863 = vsyncpa [#allocation10], 1
    %s5864 = scalar_lea.sflag [#allocation10], 1
    %5865 = vsyncpa %s5864, 1
    %5866 = vsyncpa [#allocation5], 1
    %s5867 = scalar_lea.sflag [#allocation5], 1
    %5868 = vsyncpa %s5867, 1

</llo_original>
